<compile_context>
chip_gen: v5e
topology: v5e:2x2
jax: 0.10.0
libtpu: 0.0.40
codegen_flags: <defaults>
</compile_context>

<pallas_src>
import jax
import jax.numpy as jnp
from jax.experimental import pallas as pl
from jax.experimental.pallas import tpu as pltpu

EPS = 1e-5
LANES = 128


def _round_up(v, m):
    return (v + m - 1) // m * m


def _vmem_limit():
    """Generation-aware VMEM budget (bytes): ~60% of per-core VMEM."""
    try:
        cap = int(pltpu.get_tpu_info().vmem_capacity_bytes)
    except Exception:
        cap = 64 * 1024 * 1024          # conservative (v7x-sized) fallback
    return max(24 * 1024 * 1024, min(80 * 1024 * 1024, (cap * 3) // 5))


# --------------------------------------------------------------------------
# Kernel A: conv1 (3x3, tap-merged in-kernel im2col, single MXU matmul)
#           [+ fused 1x1 projection shortcut] + per-image partial BN stats.
# Grid: (N images, Cout tiles) -- both "parallel".
# --------------------------------------------------------------------------
def _make_conv1_kernel(offsets, Ho, Wo, K, has_shortcut, sc_tap):
    HW = Ho * Wo
    T = len(offsets)

    def stats_of(z):
        zf = z.astype(jnp.float32)
        return jnp.concatenate([jnp.sum(zf, axis=0, keepdims=True),
                                jnp.sum(zf * zf, axis=0, keepdims=True)],
                               axis=0)

    def kernel(*refs):
        if has_shortcut:
            x_ref, w_ref, wsc_ref, z_ref, st_ref, zsc_ref, stsc_ref = refs
        else:
            x_ref, w_ref, z_ref, st_ref = refs

        # im2col patch built from unit-stride slices of the VMEM slab, then a
        # single matmul with contraction depth T*K (vs. T matmuls of depth K).
        cols = [x_ref[0, a:a + Ho, b:b + Wo, :] for (a, b) in offsets]
        patch = jnp.concatenate(cols, axis=-1).reshape(HW, T * K)
        acc = jnp.dot(patch, w_ref[...], preferred_element_type=jnp.float32)
        zb = acc.astype(z_ref.dtype)
        z_ref[0] = zb
        st_ref[0] = stats_of(zb)

        if has_shortcut:
            xs = cols[sc_tap].reshape(HW, K)
            accs = jnp.dot(xs, wsc_ref[...],
                           preferred_element_type=jnp.float32)
            sb = accs.astype(zsc_ref.dtype)
            zsc_ref[0] = sb
            stsc_ref[0] = stats_of(sb)

    return kernel


def _conv1_and_shortcut(slab, w1_flat, wsc_mat, offsets, Ho, Wo, sc_tap, tn):
    N, Hs, Ws, K = slab.shape
    Kt, Cp = w1_flat.shape
    HW = Ho * Wo
    Jc = Cp // tn
    has_sc = wsc_mat is not None
    kernel = _make_conv1_kernel(offsets, Ho, Wo, K, has_sc, sc_tap)

    in_specs = [pl.BlockSpec((1, Hs, Ws, K), lambda n, j: (n, 0, 0, 0)),
                pl.BlockSpec((Kt, tn), lambda n, j: (0, j))]
    args = [slab, w1_flat]
    out_shapes = [jax.ShapeDtypeStruct((N, HW, Cp), jnp.bfloat16),
                  jax.ShapeDtypeStruct((N, 2, Cp), jnp.float32)]
    out_specs = [pl.BlockSpec((1, HW, tn), lambda n, j: (n, 0, j)),
                 pl.BlockSpec((1, 2, tn), lambda n, j: (n, 0, j))]
    if has_sc:
        Ks = wsc_mat.shape[0]
        in_specs.append(pl.BlockSpec((Ks, tn), lambda n, j: (0, j)))
        args.append(wsc_mat)
        out_shapes += [jax.ShapeDtypeStruct((N, HW, Cp), jnp.bfloat16),
                       jax.ShapeDtypeStruct((N, 2, Cp), jnp.float32)]
        out_specs += [pl.BlockSpec((1, HW, tn), lambda n, j: (n, 0, j)),
                      pl.BlockSpec((1, 2, tn), lambda n, j: (n, 0, j))]

    return pl.pallas_call(
        kernel,
        out_shape=tuple(out_shapes),
        grid=(N, Jc),
        in_specs=in_specs,
        out_specs=tuple(out_specs),
        compiler_params=pltpu.CompilerParams(
            dimension_semantics=("parallel", "parallel"),
            vmem_limit_bytes=_vmem_limit()),
    )(*args)


# --------------------------------------------------------------------------
# Kernel B: fused BN1-affine + ReLU into a zero-bordered VMEM scratch (once
# per image), then conv2 (3x3, tap-merged single matmul) + partial BN2 stats.
# Grid: (N images "parallel", Cout tiles "arbitrary") -- ybuf is built only
# on the first Cout tile of each image and reused for the rest.
# --------------------------------------------------------------------------
def _make_bn_relu_conv2_kernel(Ho, Wo, Cp):
    HW = Ho * Wo

    def kernel(z1_ref, w_ref, sc_ref, sh_ref, z2_ref, st_ref, ybuf):
        @pl.when(pl.program_id(1) == 0)
        def _():
            # zero fill gives the 1-pixel zero halo; interior overwritten next.
            ybuf[...] = jnp.zeros_like(ybuf)
            v = z1_ref[0].astype(jnp.float32)                  # (HW, Cp)
            y = jnp.maximum(v * sc_ref[...] + sh_ref[...], 0.0)
            ybuf[1:1 + Ho, 1:1 + Wo, :] = (
                y.reshape(Ho, Wo, Cp).astype(ybuf.dtype))

        cols = [ybuf[a:a + Ho, b:b + Wo, :]
                for a in range(3) for b in range(3)]
        patch = jnp.concatenate(cols, axis=-1).reshape(HW, 9 * Cp)
        acc = jnp.dot(patch, w_ref[...], preferred_element_type=jnp.float32)
        zb = acc.astype(z2_ref.dtype)
        z2_ref[0] = zb
        zf = zb.astype(jnp.float32)
        st_ref[0] = jnp.concatenate(
            [jnp.sum(zf, axis=0, keepdims=True),
             jnp.sum(zf * zf, axis=0, keepdims=True)], axis=0)

    return kernel


def _bn_relu_conv2(z1, w2_flat, scale1, shift1, Ho, Wo, tn):
    N, HW, Cp = z1.shape
    K9 = w2_flat.shape[0]
    Jc = Cp // tn
    kernel = _make_bn_relu_conv2_kernel(Ho, Wo, Cp)
    return pl.pallas_call(
        kernel,
        out_shape=(jax.ShapeDtypeStruct((N, HW, Cp), jnp.bfloat16),
                   jax.ShapeDtypeStruct((N, 2, Cp), jnp.float32)),
        grid=(N, Jc),
        in_specs=[pl.BlockSpec((1, HW, Cp), lambda n, j: (n, 0, 0)),
                  pl.BlockSpec((K9, tn), lambda n, j: (0, j)),
                  pl.BlockSpec((1, Cp), lambda n, j: (0, 0)),
                  pl.BlockSpec((1, Cp), lambda n, j: (0, 0))],
        out_specs=(pl.BlockSpec((1, HW, tn), lambda n, j: (n, 0, j)),
                   pl.BlockSpec((1, 2, tn), lambda n, j: (n, 0, j))),
        scratch_shapes=[pltpu.VMEM((Ho + 2, Wo + 2, Cp), jnp.bfloat16)],
        compiler_params=pltpu.CompilerParams(
            dimension_semantics=("parallel", "arbitrary"),
            vmem_limit_bytes=_vmem_limit()),
    )(z1, w2_flat, scale1, shift1)


# --------------------------------------------------------------------------
# Kernel C: out = relu(BN2-affine(z2) + shortcut)   (elementwise epilogue)
# bf16 inputs; identity shortcut keeps its true Cin channels.
# --------------------------------------------------------------------------
def _make_epilogue_kernel(has_proj, Cin, Cp):
    if has_proj:
        def kernel(z2_ref, s_ref, a2_ref, b2_ref, as_ref, bs_ref, o_ref):
            t = z2_ref[0].astype(jnp.float32) * a2_ref[...] + b2_ref[...]
            s = s_ref[0].astype(jnp.float32) * as_ref[...] + bs_ref[...]
            o_ref[0] = jnp.maximum(t + s, 0.0).astype(o_ref.dtype)
    else:
        def kernel(z2_ref, x_ref, a2_ref, b2_ref, o_ref):
            t = z2_ref[0].astype(jnp.float32) * a2_ref[...] + b2_ref[...]
            s = x_ref[0].astype(jnp.float32)                   # (HW, Cin)
            if Cin == Cp:
                o_ref[0] = jnp.maximum(t + s, 0.0).astype(o_ref.dtype)
            else:
                # padded lanes of t are exactly zero (gamma/beta zero padded),
                # so only the real channels need the shortcut add.
                o_ref[0] = jnp.maximum(t, 0.0).astype(o_ref.dtype)
                o_ref[0, :, :Cin] = jnp.maximum(
                    t[:, :Cin] + s, 0.0).astype(o_ref.dtype)
    return kernel


def _epilogue(z2, s_in, a2, b2, a_sc, b_sc, cin, has_proj):
    N, HW, Cp = z2.shape
    kernel = _make_epilogue_kernel(has_proj, cin, Cp)
    vec = pl.BlockSpec((1, Cp), lambda n: (0, 0))
    in_specs = [pl.BlockSpec((1, HW, Cp), lambda n: (n, 0, 0)),
                pl.BlockSpec((1, HW, s_in.shape[-1]), lambda n: (n, 0, 0)),
                vec, vec]
    args = [z2, s_in, a2, b2]
    if has_proj:
        in_specs += [vec, vec]
        args += [a_sc, b_sc]
    return pl.pallas_call(
        kernel,
        out_shape=jax.ShapeDtypeStruct((N, HW, Cp), jnp.float32),
        grid=(N,),
        in_specs=in_specs,
        out_specs=pl.BlockSpec((1, HW, Cp), lambda n: (n, 0, 0)),
        compiler_params=pltpu.CompilerParams(
            dimension_semantics=("parallel",),
            vmem_limit_bytes=_vmem_limit()),
    )(*args)


# --------------------------------------------------------------------------
# Wrapper: layout plumbing (NCHW<->NHWC, flattened tap-weight matrices,
# channel/lane padding, space-to-depth for stride 2) + per-channel BN folding.
# --------------------------------------------------------------------------
def basic_block_forward(x_nchw, params, stride):
    if stride not in (1, 2):
        raise ValueError("BasicBlock only uses stride 1 or 2")
    x = jnp.transpose(x_nchw, (0, 2, 3, 1)).astype(jnp.float32)   # NCHW->NHWC
    N, H, W, Cin = x.shape
    Cout = params["w1"].shape[0]
    Cp = _round_up(Cout, LANES)                 # lane-dense output channels
    tn = 256 if Cp % 256 == 0 else 128          # Cout tile per grid step
    Ho = (H + 2 - 3) // stride + 1
    Wo = (W + 2 - 3) // stride + 1
    HW = Ho * Wo
    M = N * HW
    has_proj = params["wsc"] is not None

    def tapw(w, dh, dw):                        # (Cout,Cin,3,3) -> (Cin, Cp)
        wt = jnp.transpose(w[:, :, dh, dw], (1, 0))
        return jnp.pad(wt, ((0, 0), (0, Cp - Cout)))

    # ---- conv1 input slab + flattened tap-merged weight matrix ----------
    if stride == 1:
        slab = jnp.pad(x, ((0, 0), (1, 1), (1, 1), (0, 0)))
        offsets = [(dh, dw) for dh in range(3) for dw in range(3)]
        w1_flat = jnp.concatenate(
            [tapw(params["w1"], dh, dw) for dh, dw in offsets], axis=0)
        sc_tap = offsets.index((1, 1))
        wsc_mat = None
        if has_proj:
            wsc_mat = jnp.pad(params["wsc"].reshape(Cout, Cin).T,
                              ((0, 0), (0, Cp - Cout)))
    else:
        # stride 2: space-to-depth so every conv tap is a unit-stride slice.
        Hp2, Wp2 = H + 2, W + 2
        He, We = _round_up(Hp2, 2), _round_up(Wp2, 2)
        xp = jnp.pad(x, ((0, 0), (1, 1 + He - Hp2), (1, 1 + We - Wp2), (0, 0)))
        slab = xp.reshape(N, He // 2, 2, We // 2, 2, Cin)
        slab = jnp.transpose(slab, (0, 1, 3, 2, 4, 5)).reshape(
            N, He // 2, We // 2, 4 * Cin)
        offsets = [(0, 0), (0, 1), (1, 0), (1, 1)]
        w1_parts = []
        for (A, B) in offsets:
            wg = jnp.zeros((4 * Cin, Cp), jnp.float32)
            for dh in range(3):
                for dw in range(3):
                    if (dh // 2, dw // 2) == (A, B):
                        g = (dh % 2) * 2 + (dw % 2)
                        wg = wg.at[g * Cin:(g + 1) * Cin].set(
                            tapw(params["w1"], dh, dw))
            w1_parts.append(wg)
        w1_flat = jnp.concatenate(w1_parts, axis=0)
        sc_tap = 0
        wsc_mat = None
        if has_proj:
            wsc_mat = jnp.zeros((4 * Cin, Cp), jnp.float32)
            wsc_mat = wsc_mat.at[3 * Cin:4 * Cin].set(
                jnp.pad(params["wsc"].reshape(Cout, Cin).T,
                        ((0, 0), (0, Cp - Cout))))

    slab = slab.astype(jnp.bfloat16)
    w1_flat = w1_flat.astype(jnp.bfloat16)
    wsc_bf = None if wsc_mat is None else wsc_mat.astype(jnp.bfloat16)

    outs = _conv1_and_shortcut(slab, w1_flat, wsc_bf, offsets, Ho, Wo,
                               sc_tap, tn)
    if has_proj:
        z1, st1, zsc, stsc = outs
    else:
        z1, st1 = outs

    # ---- fold batch statistics into per-channel scale/shift (tiny) ------
    def affine(stats, gamma, beta):
        s = jnp.sum(stats, axis=0)                      # (2, Cp)
        mean = s[0] / M
        var = jnp.maximum(s[1] / M - mean * mean, 0.0)
        g = jnp.pad(gamma, (0, Cp - Cout))
        b = jnp.pad(beta, (0, Cp - Cout))
        scale = g * jax.lax.rsqrt(var + EPS)
        shift = b - mean * scale
        return (scale.reshape(1, Cp).astype(jnp.float32),
                shift.reshape(1, Cp).astype(jnp.float32))

    scale1, shift1 = affine(st1, params["g1"], params["b1"])

    # ---- conv2 weights, flattened over the 9 taps ------------------------
    w2_flat = jnp.concatenate(
        [jnp.pad(jnp.transpose(params["w2"][:, :, dh, dw], (1, 0)),
                 ((0, Cp - Cout), (0, Cp - Cout)))
         for dh in range(3) for dw in range(3)], axis=0).astype(jnp.bfloat16)

    z2, st2 = _bn_relu_conv2(z1, w2_flat, scale1, shift1, Ho, Wo, tn)
    scale2, shift2 = affine(st2, params["g2"], params["b2"])

    if has_proj:
        scale_sc, shift_sc = affine(stsc, params["gsc"], params["bsc"])
        out = _epilogue(z2, zsc, scale2, shift2, scale_sc, shift_sc, Cp, True)
    else:
        # identity shortcut: Cin == Cout; pass x with its true channel count.
        x_flat = x.reshape(N, HW, Cin).astype(jnp.bfloat16)
        out = _epilogue(z2, x_flat, scale2, shift2, None, None, Cin, False)

    out = out[:, :, :Cout].reshape(N, Ho, Wo, Cout)
    return jnp.transpose(out, (0, 3, 1, 2))             # NHWC -> NCHW


basic_block_forward_jit = jax.jit(basic_block_forward, static_argnums=(2,))


# --------------------------------------------------------------------------
# Parameters + pure-JAX reference (for correctness check)
# --------------------------------------------------------------------------
def init_params(key, cin, cout, stride):
    ks = jax.random.split(key, 9)
    p = {
        "w1": 0.1 * jax.random.normal(ks[0], (cout, cin, 3, 3), jnp.float32),
        "g1": 1.0 + 0.1 * jax.random.normal(ks[1], (cout,), jnp.float32),
        "b1": 0.1 * jax.random.normal(ks[2], (cout,), jnp.float32),
        "w2": 0.1 * jax.random.normal(ks[3], (cout, cout, 3, 3), jnp.float32),
        "g2": 1.0 + 0.1 * jax.random.normal(ks[4], (cout,), jnp.float32),
        "b2": 0.1 * jax.random.normal(ks[5], (cout,), jnp.float32),
        "wsc": None, "gsc": None, "bsc": None,
    }
    if stride != 1 or cin != cout:
        p["wsc"] = 0.1 * jax.random.normal(ks[6], (cout, cin, 1, 1), jnp.float32)
        p["gsc"] = 1.0 + 0.1 * jax.random.normal(ks[7], (cout,), jnp.float32)
        p["bsc"] = 0.1 * jax.random.normal(ks[8], (cout,), jnp.float32)
    return p


def ref_forward(x, params, stride):
    def conv(x, w, s, pad):
        return jax.lax.conv_general_dilated(
            x, w, (s, s), [(pad, pad), (pad, pad)],
            dimension_numbers=("NCHW", "OIHW", "NCHW"))

    def bn(y, g, b):
        mean = y.mean(axis=(0, 2, 3), keepdims=True)
        var = ((y - mean) ** 2).mean(axis=(0, 2, 3), keepdims=True)
        return ((y - mean) * jax.lax.rsqrt(var + EPS)
                * g[None, :, None, None] + b[None, :, None, None])

    r = jax.nn.relu(bn(conv(x, params["w1"], stride, 1),
                       params["g1"], params["b1"]))
    r = bn(conv(r, params["w2"], 1, 1), params["g2"], params["b2"])
    if params["wsc"] is not None:
        s = bn(conv(x, params["wsc"], stride, 0), params["gsc"], params["bsc"])
    else:
        s = x
    return jax.nn.relu(r + s)


# --------------------------------------------------------------------------
if __name__ == "__main__":
    key = jax.random.PRNGKey(0)
    kx, kp1, kp2 = jax.random.split(key, 3)

    # case 1: downsampling block (stride=2, channel expansion -> conv shortcut)
    x = jax.random.normal(kx, (2, 4, 16, 16), jnp.float32)
    params_a = init_params(kp1, cin=4, cout=8, stride=2)
    out_a = basic_block_forward_jit(x, params_a, 2)
    jax.block_until_ready(out_a)
    ref_a = ref_forward(x, params_a, 2)
    assert out_a.shape == (2, 8, 8, 8), out_a.shape
    assert jnp.allclose(out_a, ref_a, atol=5e-2, rtol=5e-2), (
        float(jnp.max(jnp.abs(out_a - ref_a))))

    # case 2: identity-shortcut block (stride=1, cin == cout)
    params_b = init_params(kp2, cin=4, cout=4, stride=1)
    out_b = basic_block_forward_jit(x, params_b, 1)
    jax.block_until_ready(out_b)
    ref_b = ref_forward(x, params_b, 1)
    assert out_b.shape == (2, 4, 16, 16), out_b.shape
    assert jnp.allclose(out_b, ref_b, atol=5e-2, rtol=5e-2), (
        float(jnp.max(jnp.abs(out_b - ref_b))))

    print("KERNEL_OK")
</pallas_src>

<mosaic_0001>
module attributes {stable_mosaic.version = 11 : i64} {
  func.func @kernel(%arg0: i32, %arg1: i32, %arg2: memref<1x9x9x16xbf16, #tpu.memory_space<vmem>>, %arg3: memref<64x128xbf16, #tpu.memory_space<vmem>>, %arg4: memref<16x128xbf16, #tpu.memory_space<vmem>>, %arg5: memref<1x64x128xbf16, #tpu.memory_space<vmem>>, %arg6: memref<1x2x128xf32, #tpu.memory_space<vmem>>, %arg7: memref<1x64x128xbf16, #tpu.memory_space<vmem>>, %arg8: memref<1x2x128xf32, #tpu.memory_space<vmem>>) attributes {dimension_semantics = [#tpu.dimension_semantics<parallel>, #tpu.dimension_semantics<parallel>], iteration_bounds = array<i64: 2, 1>, scalar_prefetch = 0 : i64, scratch_operands = 0 : i64, tpu.core_type = #tpu.core_type<tc>, window_params = [{transform_indices = @transform_0, window_bounds = array<i64: 1, 9, 9, 16>}, {transform_indices = @transform_1, window_bounds = array<i64: 64, 128>}, {transform_indices = @transform_2, window_bounds = array<i64: 16, 128>}, {transform_indices = @transform_3, window_bounds = array<i64: 1, 64, 128>}, {transform_indices = @transform_4, window_bounds = array<i64: 1, 2, 128>}, {transform_indices = @transform_5, window_bounds = array<i64: 1, 64, 128>}, {transform_indices = @transform_6, window_bounds = array<i64: 1, 2, 128>}]} {
    %c0 = arith.constant 0 : index
    %c0_0 = arith.constant 0 : index
    %c0_1 = arith.constant 0 : index
    %c0_2 = arith.constant 0 : index
    %0 = vector.load %arg2[%c0, %c0_0, %c0_1, %c0_2] : memref<1x9x9x16xbf16, #tpu.memory_space<vmem>>, vector<1x8x8x16xbf16>
    %1 = vector.shape_cast %0 : vector<1x8x8x16xbf16> to vector<8x8x16xbf16>
    %c0_3 = arith.constant 0 : index
    %c0_4 = arith.constant 0 : index
    %c1 = arith.constant 1 : index
    %c0_5 = arith.constant 0 : index
    %2 = vector.load %arg2[%c0_3, %c0_4, %c1, %c0_5] : memref<1x9x9x16xbf16, #tpu.memory_space<vmem>>, vector<1x8x8x16xbf16>
    %3 = vector.shape_cast %2 : vector<1x8x8x16xbf16> to vector<8x8x16xbf16>
    %c0_6 = arith.constant 0 : index
    %c1_7 = arith.constant 1 : index
    %c0_8 = arith.constant 0 : index
    %c0_9 = arith.constant 0 : index
    %4 = vector.load %arg2[%c0_6, %c1_7, %c0_8, %c0_9] : memref<1x9x9x16xbf16, #tpu.memory_space<vmem>>, vector<1x8x8x16xbf16>
    %5 = vector.shape_cast %4 : vector<1x8x8x16xbf16> to vector<8x8x16xbf16>
    %c0_10 = arith.constant 0 : index
    %c1_11 = arith.constant 1 : index
    %c1_12 = arith.constant 1 : index
    %c0_13 = arith.constant 0 : index
    %6 = vector.load %arg2[%c0_10, %c1_11, %c1_12, %c0_13] : memref<1x9x9x16xbf16, #tpu.memory_space<vmem>>, vector<1x8x8x16xbf16>
    %7 = vector.shape_cast %6 : vector<1x8x8x16xbf16> to vector<8x8x16xbf16>
    %8 = tpu.concatenate %1, %3, %5, %7 in 2 : vector<8x8x16xbf16>, vector<8x8x16xbf16>, vector<8x8x16xbf16>, vector<8x8x16xbf16> -> vector<8x8x64xbf16>
    %9 = vector.shape_cast %8 : vector<8x8x64xbf16> to vector<64x64xbf16>
    %c0_14 = arith.constant 0 : index
    %c0_15 = arith.constant 0 : index
    %10 = vector.load %arg3[%c0_14, %c0_15] : memref<64x128xbf16, #tpu.memory_space<vmem>>, vector<64x128xbf16>
    %cst = arith.constant dense<0.000000e+00> : vector<64x128xf32>
    %11 = tpu.matmul %9, %10, %cst {dimension_numbers = #tpu.dot_dimension_numbers<[1], [0], [0], [1], [0, 0, 1, 1], [], []>} : vector<64x64xbf16>, vector<64x128xbf16>, vector<64x128xf32> -> vector<64x128xf32>
    %12 = arith.truncf %11 : vector<64x128xf32> to vector<64x128xbf16>
    %c0_16 = arith.constant 0 : index
    %c0_17 = arith.constant 0 : index
    %c0_18 = arith.constant 0 : index
    %13 = vector.load %arg5[%c0_16, %c0_17, %c0_18] : memref<1x64x128xbf16, #tpu.memory_space<vmem>>, vector<1x64x128xbf16>
    %14 = vector.shape_cast %13 : vector<1x64x128xbf16> to vector<64x128xbf16>
    %15 = vector.shape_cast %12 : vector<64x128xbf16> to vector<1x64x128xbf16>
    tpu.vector_store %arg5[%c0_16, %c0_17, %c0_18], %15 {strides = array<i32>} : memref<1x64x128xbf16, #tpu.memory_space<vmem>>, vector<1x64x128xbf16>,
    %16 = arith.extf %12 : vector<64x128xbf16> to vector<64x128xf32>
    %cst_19 = arith.constant dense<0.000000e+00> : vector<128xf32>
    %17 = vector.multi_reduction <add>, %16, %cst_19 [0] : vector<64x128xf32> to vector<128xf32>
    %18 = vector.shape_cast %17 : vector<128xf32> to vector<1x128xf32>
    %19 = arith.mulf %16, %16 : vector<64x128xf32>
    %cst_20 = arith.constant dense<0.000000e+00> : vector<128xf32>
    %20 = vector.multi_reduction <add>, %19, %cst_20 [0] : vector<64x128xf32> to vector<128xf32>
    %21 = vector.shape_cast %20 : vector<128xf32> to vector<1x128xf32>
    %22 = tpu.concatenate %18, %21 in 0 : vector<1x128xf32>, vector<1x128xf32> -> vector<2x128xf32>
    %c0_21 = arith.constant 0 : index
    %c0_22 = arith.constant 0 : index
    %c0_23 = arith.constant 0 : index
    %23 = vector.load %arg6[%c0_21, %c0_22, %c0_23] : memref<1x2x128xf32, #tpu.memory_space<vmem>>, vector<1x2x128xf32>
    %24 = vector.shape_cast %23 : vector<1x2x128xf32> to vector<2x128xf32>
    %25 = vector.shape_cast %22 : vector<2x128xf32> to vector<1x2x128xf32>
    tpu.vector_store %arg6[%c0_21, %c0_22, %c0_23], %25 {strides = array<i32>} : memref<1x2x128xf32, #tpu.memory_space<vmem>>, vector<1x2x128xf32>,
    %26 = vector.shape_cast %1 : vector<8x8x16xbf16> to vector<64x16xbf16>
    %c0_24 = arith.constant 0 : index
    %c0_25 = arith.constant 0 : index
    %27 = vector.load %arg4[%c0_24, %c0_25] : memref<16x128xbf16, #tpu.memory_space<vmem>>, vector<16x128xbf16>
    %cst_26 = arith.constant dense<0.000000e+00> : vector<64x128xf32>
    %28 = tpu.matmul %26, %27, %cst_26 {dimension_numbers = #tpu.dot_dimension_numbers<[1], [0], [0], [1], [0, 0, 1, 1], [], []>} : vector<64x16xbf16>, vector<16x128xbf16>, vector<64x128xf32> -> vector<64x128xf32>
    %29 = arith.truncf %28 : vector<64x128xf32> to vector<64x128xbf16>
    %c0_27 = arith.constant 0 : index
    %c0_28 = arith.constant 0 : index
    %c0_29 = arith.constant 0 : index
    %30 = vector.load %arg7[%c0_27, %c0_28, %c0_29] : memref<1x64x128xbf16, #tpu.memory_space<vmem>>, vector<1x64x128xbf16>
    %31 = vector.shape_cast %30 : vector<1x64x128xbf16> to vector<64x128xbf16>
    %32 = vector.shape_cast %29 : vector<64x128xbf16> to vector<1x64x128xbf16>
    tpu.vector_store %arg7[%c0_27, %c0_28, %c0_29], %32 {strides = array<i32>} : memref<1x64x128xbf16, #tpu.memory_space<vmem>>, vector<1x64x128xbf16>,
    %33 = arith.extf %29 : vector<64x128xbf16> to vector<64x128xf32>
    %cst_30 = arith.constant dense<0.000000e+00> : vector<128xf32>
    %34 = vector.multi_reduction <add>, %33, %cst_30 [0] : vector<64x128xf32> to vector<128xf32>
    %35 = vector.shape_cast %34 : vector<128xf32> to vector<1x128xf32>
    %36 = arith.mulf %33, %33 : vector<64x128xf32>
    %cst_31 = arith.constant dense<0.000000e+00> : vector<128xf32>
    %37 = vector.multi_reduction <add>, %36, %cst_31 [0] : vector<64x128xf32> to vector<128xf32>
    %38 = vector.shape_cast %37 : vector<128xf32> to vector<1x128xf32>
    %39 = tpu.concatenate %35, %38 in 0 : vector<1x128xf32>, vector<1x128xf32> -> vector<2x128xf32>
    %c0_32 = arith.constant 0 : index
    %c0_33 = arith.constant 0 : index
    %c0_34 = arith.constant 0 : index
    %40 = vector.load %arg8[%c0_32, %c0_33, %c0_34] : memref<1x2x128xf32, #tpu.memory_space<vmem>>, vector<1x2x128xf32>
    %41 = vector.shape_cast %40 : vector<1x2x128xf32> to vector<2x128xf32>
    %42 = vector.shape_cast %39 : vector<2x128xf32> to vector<1x2x128xf32>
    tpu.vector_store %arg8[%c0_32, %c0_33, %c0_34], %42 {strides = array<i32>} : memref<1x2x128xf32, #tpu.memory_space<vmem>>, vector<1x2x128xf32>,
    return
  }
  func.func @transform_0(%arg0: i32, %arg1: i32) -> (i32, i32, i32, i32) {
    %c0_i32 = arith.constant 0 : i32
    %c0_i32_0 = arith.constant 0 : i32
    %c0_i32_1 = arith.constant 0 : i32
    %c0_i32_2 = arith.constant 0 : i32
    return %arg0, %c0_i32, %c0_i32_0, %c0_i32_1 : i32, i32, i32, i32
  }
  func.func @transform_1(%arg0: i32, %arg1: i32) -> (i32, i32) {
    %c0_i32 = arith.constant 0 : i32
    %c0_i32_0 = arith.constant 0 : i32
    return %c0_i32, %arg1 : i32, i32
  }
  func.func @transform_2(%arg0: i32, %arg1: i32) -> (i32, i32) {
    %c0_i32 = arith.constant 0 : i32
    %c0_i32_0 = arith.constant 0 : i32
    return %c0_i32, %arg1 : i32, i32
  }
  func.func @transform_3(%arg0: i32, %arg1: i32) -> (i32, i32, i32) {
    %c0_i32 = arith.constant 0 : i32
    %c0_i32_0 = arith.constant 0 : i32
    return %arg0, %c0_i32, %arg1 : i32, i32, i32
  }
  func.func @transform_4(%arg0: i32, %arg1: i32) -> (i32, i32, i32) {
    %c0_i32 = arith.constant 0 : i32
    %c0_i32_0 = arith.constant 0 : i32
    return %arg0, %c0_i32, %arg1 : i32, i32, i32
  }
  func.func @transform_5(%arg0: i32, %arg1: i32) -> (i32, i32, i32) {
    %c0_i32 = arith.constant 0 : i32
    %c0_i32_0 = arith.constant 0 : i32
    return %arg0, %c0_i32, %arg1 : i32, i32, i32
  }
  func.func @transform_6(%arg0: i32, %arg1: i32) -> (i32, i32, i32) {
    %c0_i32 = arith.constant 0 : i32
    %c0_i32_0 = arith.constant 0 : i32
    return %arg0, %c0_i32, %arg1 : i32, i32, i32
  }
}

module attributes {stable_mosaic.version = 11 : i64} {
  func.func @kernel(%arg0: i32, %arg1: i32, %arg2: memref<1x64x128xbf16, #tpu.memory_space<vmem>>, %arg3: memref<1152x128xbf16, #tpu.memory_space<vmem>>, %arg4: memref<1x128xf32, #tpu.memory_space<vmem>>, %arg5: memref<1x128xf32, #tpu.memory_space<vmem>>, %arg6: memref<1x64x128xbf16, #tpu.memory_space<vmem>>, %arg7: memref<1x2x128xf32, #tpu.memory_space<vmem>>, %arg8: memref<10x10x128xbf16, #tpu.memory_space<vmem>>) attributes {dimension_semantics = [#tpu.dimension_semantics<parallel>, #tpu.dimension_semantics<arbitrary>], iteration_bounds = array<i64: 2, 1>, scalar_prefetch = 0 : i64, scratch_operands = 1 : i64, tpu.core_type = #tpu.core_type<tc>, window_params = [{transform_indices = @transform_0, window_bounds = array<i64: 1, 64, 128>}, {transform_indices = @transform_1, window_bounds = array<i64: 1152, 128>}, {pipeline_mode = #tpu.pipeline_mode<synchronous>, transform_indices = @transform_2, window_bounds = array<i64: 1, 128>}, {pipeline_mode = #tpu.pipeline_mode<synchronous>, transform_indices = @transform_3, window_bounds = array<i64: 1, 128>}, {transform_indices = @transform_4, window_bounds = array<i64: 1, 64, 128>}, {transform_indices = @transform_5, window_bounds = array<i64: 1, 2, 128>}]} {
    %c0_i32 = arith.constant 0 : i32
    %0 = arith.cmpi eq, %arg1, %c0_i32 : i32
    %1 = arith.extui %0 : i1 to i32
    %c0_i32_0 = arith.constant 0 : i32
    %2 = arith.cmpi ne, %1, %c0_i32_0 : i32
    scf.if %2 {
      %cst_35 = arith.constant 0.000000e+00 : bf16
      %30 = vector.broadcast %cst_35 : bf16 to vector<10x10x128xbf16>
      %c0_36 = arith.constant 0 : index
      %c0_37 = arith.constant 0 : index
      %c0_38 = arith.constant 0 : index
      %31 = vector.load %arg8[%c0_36, %c0_37, %c0_38] : memref<10x10x128xbf16, #tpu.memory_space<vmem>>, vector<10x10x128xbf16>
      tpu.vector_store %arg8[%c0_36, %c0_37, %c0_38], %30 {strides = array<i32>} : memref<10x10x128xbf16, #tpu.memory_space<vmem>>, vector<10x10x128xbf16>,
      %c0_39 = arith.constant 0 : index
      %c0_40 = arith.constant 0 : index
      %c0_41 = arith.constant 0 : index
      %32 = vector.load %arg2[%c0_39, %c0_40, %c0_41] : memref<1x64x128xbf16, #tpu.memory_space<vmem>>, vector<1x64x128xbf16>
      %33 = vector.shape_cast %32 : vector<1x64x128xbf16> to vector<64x128xbf16>
      %34 = arith.extf %33 : vector<64x128xbf16> to vector<64x128xf32>
      %c0_42 = arith.constant 0 : index
      %c0_43 = arith.constant 0 : index
      %35 = vector.load %arg4[%c0_42, %c0_43] : memref<1x128xf32, #tpu.memory_space<vmem>>, vector<1x128xf32>
      %36 = vector.broadcast %35 : vector<1x128xf32> to vector<64x128xf32>
      %37 = arith.mulf %34, %36 : vector<64x128xf32>
      %c0_44 = arith.constant 0 : index
      %c0_45 = arith.constant 0 : index
      %38 = vector.load %arg5[%c0_44, %c0_45] : memref<1x128xf32, #tpu.memory_space<vmem>>, vector<1x128xf32>
      %39 = vector.broadcast %38 : vector<1x128xf32> to vector<64x128xf32>
      %40 = arith.addf %37, %39 : vector<64x128xf32>
      %cst_46 = arith.constant 0.000000e+00 : f32
      %41 = vector.broadcast %cst_46 : f32 to vector<64x128xf32>
      %42 = arith.maximumf %40, %41 : vector<64x128xf32>
      %43 = vector.shape_cast %42 : vector<64x128xf32> to vector<8x8x128xf32>
      %44 = arith.truncf %43 : vector<8x8x128xf32> to vector<8x8x128xbf16>
      %c1_47 = arith.constant 1 : index
      %c1_48 = arith.constant 1 : index
      %c0_49 = arith.constant 0 : index
      %45 = vector.load %arg8[%c1_47, %c1_48, %c0_49] : memref<10x10x128xbf16, #tpu.memory_space<vmem>>, vector<8x8x128xbf16>
      tpu.vector_store %arg8[%c1_47, %c1_48, %c0_49], %44 {strides = array<i32>} : memref<10x10x128xbf16, #tpu.memory_space<vmem>>, vector<8x8x128xbf16>,
    } else {
    }
    %c0 = arith.constant 0 : index
    %c0_1 = arith.constant 0 : index
    %c0_2 = arith.constant 0 : index
    %3 = vector.load %arg8[%c0, %c0_1, %c0_2] : memref<10x10x128xbf16, #tpu.memory_space<vmem>>, vector<8x8x128xbf16>
    %c0_3 = arith.constant 0 : index
    %c1 = arith.constant 1 : index
    %c0_4 = arith.constant 0 : index
    %4 = vector.load %arg8[%c0_3, %c1, %c0_4] : memref<10x10x128xbf16, #tpu.memory_space<vmem>>, vector<8x8x128xbf16>
    %c0_5 = arith.constant 0 : index
    %c2 = arith.constant 2 : index
    %c0_6 = arith.constant 0 : index
    %5 = vector.load %arg8[%c0_5, %c2, %c0_6] : memref<10x10x128xbf16, #tpu.memory_space<vmem>>, vector<8x8x128xbf16>
    %c1_7 = arith.constant 1 : index
    %c0_8 = arith.constant 0 : index
    %c0_9 = arith.constant 0 : index
    %6 = vector.load %arg8[%c1_7, %c0_8, %c0_9] : memref<10x10x128xbf16, #tpu.memory_space<vmem>>, vector<8x8x128xbf16>
    %c1_10 = arith.constant 1 : index
    %c1_11 = arith.constant 1 : index
    %c0_12 = arith.constant 0 : index
    %7 = vector.load %arg8[%c1_10, %c1_11, %c0_12] : memref<10x10x128xbf16, #tpu.memory_space<vmem>>, vector<8x8x128xbf16>
    %c1_13 = arith.constant 1 : index
    %c2_14 = arith.constant 2 : index
    %c0_15 = arith.constant 0 : index
    %8 = vector.load %arg8[%c1_13, %c2_14, %c0_15] : memref<10x10x128xbf16, #tpu.memory_space<vmem>>, vector<8x8x128xbf16>
    %c2_16 = arith.constant 2 : index
    %c0_17 = arith.constant 0 : index
    %c0_18 = arith.constant 0 : index
    %9 = vector.load %arg8[%c2_16, %c0_17, %c0_18] : memref<10x10x128xbf16, #tpu.memory_space<vmem>>, vector<8x8x128xbf16>
    %c2_19 = arith.constant 2 : index
    %c1_20 = arith.constant 1 : index
    %c0_21 = arith.constant 0 : index
    %10 = vector.load %arg8[%c2_19, %c1_20, %c0_21] : memref<10x10x128xbf16, #tpu.memory_space<vmem>>, vector<8x8x128xbf16>
    %c2_22 = arith.constant 2 : index
    %c2_23 = arith.constant 2 : index
    %c0_24 = arith.constant 0 : index
    %11 = vector.load %arg8[%c2_22, %c2_23, %c0_24] : memref<10x10x128xbf16, #tpu.memory_space<vmem>>, vector<8x8x128xbf16>
    %12 = tpu.concatenate %3, %4, %5, %6, %7, %8, %9, %10, %11 in 2 : vector<8x8x128xbf16>, vector<8x8x128xbf16>, vector<8x8x128xbf16>, vector<8x8x128xbf16>, vector<8x8x128xbf16>, vector<8x8x128xbf16>, vector<8x8x128xbf16>, vector<8x8x128xbf16>, vector<8x8x128xbf16> -> vector<8x8x1152xbf16>
    %13 = vector.shape_cast %12 : vector<8x8x1152xbf16> to vector<64x1152xbf16>
    %c0_25 = arith.constant 0 : index
    %c0_26 = arith.constant 0 : index
    %14 = vector.load %arg3[%c0_25, %c0_26] : memref<1152x128xbf16, #tpu.memory_space<vmem>>, vector<1152x128xbf16>
    %cst = arith.constant dense<0.000000e+00> : vector<64x128xf32>
    %15 = tpu.matmul %13, %14, %cst {dimension_numbers = #tpu.dot_dimension_numbers<[1], [0], [0], [1], [0, 0, 1, 1], [], []>} : vector<64x1152xbf16>, vector<1152x128xbf16>, vector<64x128xf32> -> vector<64x128xf32>
    %16 = arith.truncf %15 : vector<64x128xf32> to vector<64x128xbf16>
    %c0_27 = arith.constant 0 : index
    %c0_28 = arith.constant 0 : index
    %c0_29 = arith.constant 0 : index
    %17 = vector.load %arg6[%c0_27, %c0_28, %c0_29] : memref<1x64x128xbf16, #tpu.memory_space<vmem>>, vector<1x64x128xbf16>
    %18 = vector.shape_cast %17 : vector<1x64x128xbf16> to vector<64x128xbf16>
    %19 = vector.shape_cast %16 : vector<64x128xbf16> to vector<1x64x128xbf16>
    tpu.vector_store %arg6[%c0_27, %c0_28, %c0_29], %19 {strides = array<i32>} : memref<1x64x128xbf16, #tpu.memory_space<vmem>>, vector<1x64x128xbf16>,
    %20 = arith.extf %16 : vector<64x128xbf16> to vector<64x128xf32>
    %cst_30 = arith.constant dense<0.000000e+00> : vector<128xf32>
    %21 = vector.multi_reduction <add>, %20, %cst_30 [0] : vector<64x128xf32> to vector<128xf32>
    %22 = vector.shape_cast %21 : vector<128xf32> to vector<1x128xf32>
    %23 = arith.mulf %20, %20 : vector<64x128xf32>
    %cst_31 = arith.constant dense<0.000000e+00> : vector<128xf32>
    %24 = vector.multi_reduction <add>, %23, %cst_31 [0] : vector<64x128xf32> to vector<128xf32>
    %25 = vector.shape_cast %24 : vector<128xf32> to vector<1x128xf32>
    %26 = tpu.concatenate %22, %25 in 0 : vector<1x128xf32>, vector<1x128xf32> -> vector<2x128xf32>
    %c0_32 = arith.constant 0 : index
    %c0_33 = arith.constant 0 : index
    %c0_34 = arith.constant 0 : index
    %27 = vector.load %arg7[%c0_32, %c0_33, %c0_34] : memref<1x2x128xf32, #tpu.memory_space<vmem>>, vector<1x2x128xf32>
    %28 = vector.shape_cast %27 : vector<1x2x128xf32> to vector<2x128xf32>
    %29 = vector.shape_cast %26 : vector<2x128xf32> to vector<1x2x128xf32>
    tpu.vector_store %arg7[%c0_32, %c0_33, %c0_34], %29 {strides = array<i32>} : memref<1x2x128xf32, #tpu.memory_space<vmem>>, vector<1x2x128xf32>,
    return
  }
  func.func @transform_0(%arg0: i32, %arg1: i32) -> (i32, i32, i32) {
    %c0_i32 = arith.constant 0 : i32
    %c0_i32_0 = arith.constant 0 : i32
    %c0_i32_1 = arith.constant 0 : i32
    return %arg0, %c0_i32, %c0_i32_0 : i32, i32, i32
  }
  func.func @transform_1(%arg0: i32, %arg1: i32) -> (i32, i32) {
    %c0_i32 = arith.constant 0 : i32
    %c0_i32_0 = arith.constant 0 : i32
    return %c0_i32, %arg1 : i32, i32
  }
  func.func @transform_2(%arg0: i32, %arg1: i32) -> (i32, i32) {
    %c0_i32 = arith.constant 0 : i32
    %c0_i32_0 = arith.constant 0 : i32
    %c0_i32_1 = arith.constant 0 : i32
    return %c0_i32, %c0_i32_0 : i32, i32
  }
  func.func @transform_3(%arg0: i32, %arg1: i32) -> (i32, i32) {
    %c0_i32 = arith.constant 0 : i32
    %c0_i32_0 = arith.constant 0 : i32
    %c0_i32_1 = arith.constant 0 : i32
    return %c0_i32, %c0_i32_0 : i32, i32
  }
  func.func @transform_4(%arg0: i32, %arg1: i32) -> (i32, i32, i32) {
    %c0_i32 = arith.constant 0 : i32
    %c0_i32_0 = arith.constant 0 : i32
    return %arg0, %c0_i32, %arg1 : i32, i32, i32
  }
  func.func @transform_5(%arg0: i32, %arg1: i32) -> (i32, i32, i32) {
    %c0_i32 = arith.constant 0 : i32
    %c0_i32_0 = arith.constant 0 : i32
    return %arg0, %c0_i32, %arg1 : i32, i32, i32
  }
}

module attributes {stable_mosaic.version = 11 : i64} {
  func.func @kernel(%arg0: i32, %arg1: memref<1x64x128xbf16, #tpu.memory_space<vmem>>, %arg2: memref<1x64x128xbf16, #tpu.memory_space<vmem>>, %arg3: memref<1x128xf32, #tpu.memory_space<vmem>>, %arg4: memref<1x128xf32, #tpu.memory_space<vmem>>, %arg5: memref<1x128xf32, #tpu.memory_space<vmem>>, %arg6: memref<1x128xf32, #tpu.memory_space<vmem>>, %arg7: memref<1x64x128xf32, #tpu.memory_space<vmem>>) attributes {dimension_semantics = [#tpu.dimension_semantics<parallel>], iteration_bounds = array<i64: 2>, scalar_prefetch = 0 : i64, scratch_operands = 0 : i64, tpu.core_type = #tpu.core_type<tc>, window_params = [{transform_indices = @transform_0, window_bounds = array<i64: 1, 64, 128>}, {transform_indices = @transform_1, window_bounds = array<i64: 1, 64, 128>}, {pipeline_mode = #tpu.pipeline_mode<synchronous>, transform_indices = @transform_2, window_bounds = array<i64: 1, 128>}, {pipeline_mode = #tpu.pipeline_mode<synchronous>, transform_indices = @transform_3, window_bounds = array<i64: 1, 128>}, {pipeline_mode = #tpu.pipeline_mode<synchronous>, transform_indices = @transform_4, window_bounds = array<i64: 1, 128>}, {pipeline_mode = #tpu.pipeline_mode<synchronous>, transform_indices = @transform_5, window_bounds = array<i64: 1, 128>}, {transform_indices = @transform_6, window_bounds = array<i64: 1, 64, 128>}]} {
    %c0 = arith.constant 0 : index
    %c0_0 = arith.constant 0 : index
    %c0_1 = arith.constant 0 : index
    %0 = vector.load %arg1[%c0, %c0_0, %c0_1] : memref<1x64x128xbf16, #tpu.memory_space<vmem>>, vector<1x64x128xbf16>
    %1 = vector.shape_cast %0 : vector<1x64x128xbf16> to vector<64x128xbf16>
    %2 = arith.extf %1 : vector<64x128xbf16> to vector<64x128xf32>
    %c0_2 = arith.constant 0 : index
    %c0_3 = arith.constant 0 : index
    %3 = vector.load %arg3[%c0_2, %c0_3] : memref<1x128xf32, #tpu.memory_space<vmem>>, vector<1x128xf32>
    %4 = vector.broadcast %3 : vector<1x128xf32> to vector<64x128xf32>
    %5 = arith.mulf %2, %4 : vector<64x128xf32>
    %c0_4 = arith.constant 0 : index
    %c0_5 = arith.constant 0 : index
    %6 = vector.load %arg4[%c0_4, %c0_5] : memref<1x128xf32, #tpu.memory_space<vmem>>, vector<1x128xf32>
    %7 = vector.broadcast %6 : vector<1x128xf32> to vector<64x128xf32>
    %8 = arith.addf %5, %7 : vector<64x128xf32>
    %c0_6 = arith.constant 0 : index
    %c0_7 = arith.constant 0 : index
    %c0_8 = arith.constant 0 : index
    %9 = vector.load %arg2[%c0_6, %c0_7, %c0_8] : memref<1x64x128xbf16, #tpu.memory_space<vmem>>, vector<1x64x128xbf16>
    %10 = vector.shape_cast %9 : vector<1x64x128xbf16> to vector<64x128xbf16>
    %11 = arith.extf %10 : vector<64x128xbf16> to vector<64x128xf32>
    %c0_9 = arith.constant 0 : index
    %c0_10 = arith.constant 0 : index
    %12 = vector.load %arg5[%c0_9, %c0_10] : memref<1x128xf32, #tpu.memory_space<vmem>>, vector<1x128xf32>
    %13 = vector.broadcast %12 : vector<1x128xf32> to vector<64x128xf32>
    %14 = arith.mulf %11, %13 : vector<64x128xf32>
    %c0_11 = arith.constant 0 : index
    %c0_12 = arith.constant 0 : index
    %15 = vector.load %arg6[%c0_11, %c0_12] : memref<1x128xf32, #tpu.memory_space<vmem>>, vector<1x128xf32>
    %16 = vector.broadcast %15 : vector<1x128xf32> to vector<64x128xf32>
    %17 = arith.addf %14, %16 : vector<64x128xf32>
    %18 = arith.addf %8, %17 : vector<64x128xf32>
    %cst = arith.constant 0.000000e+00 : f32
    %19 = vector.broadcast %cst : f32 to vector<64x128xf32>
    %20 = arith.maximumf %18, %19 : vector<64x128xf32>
    %c0_13 = arith.constant 0 : index
    %c0_14 = arith.constant 0 : index
    %c0_15 = arith.constant 0 : index
    %21 = vector.load %arg7[%c0_13, %c0_14, %c0_15] : memref<1x64x128xf32, #tpu.memory_space<vmem>>, vector<1x64x128xf32>
    %22 = vector.shape_cast %21 : vector<1x64x128xf32> to vector<64x128xf32>
    %23 = vector.shape_cast %20 : vector<64x128xf32> to vector<1x64x128xf32>
    tpu.vector_store %arg7[%c0_13, %c0_14, %c0_15], %23 {strides = array<i32>} : memref<1x64x128xf32, #tpu.memory_space<vmem>>, vector<1x64x128xf32>,
    return
  }
  func.func @transform_0(%arg0: i32) -> (i32, i32, i32) {
    %c0_i32 = arith.constant 0 : i32
    %c0_i32_0 = arith.constant 0 : i32
    %c0_i32_1 = arith.constant 0 : i32
    return %arg0, %c0_i32, %c0_i32_0 : i32, i32, i32
  }
  func.func @transform_1(%arg0: i32) -> (i32, i32, i32) {
    %c0_i32 = arith.constant 0 : i32
    %c0_i32_0 = arith.constant 0 : i32
    %c0_i32_1 = arith.constant 0 : i32
    return %arg0, %c0_i32, %c0_i32_0 : i32, i32, i32
  }
  func.func @transform_2(%arg0: i32) -> (i32, i32) {
    %c0_i32 = arith.constant 0 : i32
    %c0_i32_0 = arith.constant 0 : i32
    %c0_i32_1 = arith.constant 0 : i32
    return %c0_i32, %c0_i32_0 : i32, i32
  }
  func.func @transform_3(%arg0: i32) -> (i32, i32) {
    %c0_i32 = arith.constant 0 : i32
    %c0_i32_0 = arith.constant 0 : i32
    %c0_i32_1 = arith.constant 0 : i32
    return %c0_i32, %c0_i32_0 : i32, i32
  }
  func.func @transform_4(%arg0: i32) -> (i32, i32) {
    %c0_i32 = arith.constant 0 : i32
    %c0_i32_0 = arith.constant 0 : i32
    %c0_i32_1 = arith.constant 0 : i32
    return %c0_i32, %c0_i32_0 : i32, i32
  }
  func.func @transform_5(%arg0: i32) -> (i32, i32) {
    %c0_i32 = arith.constant 0 : i32
    %c0_i32_0 = arith.constant 0 : i32
    %c0_i32_1 = arith.constant 0 : i32
    return %c0_i32, %c0_i32_0 : i32, i32
  }
  func.func @transform_6(%arg0: i32) -> (i32, i32, i32) {
    %c0_i32 = arith.constant 0 : i32
    %c0_i32_0 = arith.constant 0 : i32
    %c0_i32_1 = arith.constant 0 : i32
    return %arg0, %c0_i32, %c0_i32_0 : i32, i32, i32
  }
}

</mosaic_0001>

<llo_original>
// kernel: basic_block_forward.3
$region0: #{basic_block_forward.3}
  #allocation0 [shape = 'u32[]', space=smem, size = 0x4, offset = 0x4, fixed_abs, tag = 'smem constant byte address 0x4 - core index']
  #allocation1 [shape = 'u32[72,128]{1,0:T(1,128)}', space=vmem, size = 0x9000, scoped, tag = 'internal scratch']
  %s0 = inlined_call_operand.vmem [shape: bf16[2,9,9,16], index: 0, kind: input, shape index: {}]
  %s1 = inlined_call_operand.vmem [shape: bf16[64,128], index: 1, kind: input, shape index: {}]
  %s2 = inlined_call_operand.vmem [shape: bf16[16,128], index: 2, kind: input, shape index: {}]
  %s3 = inlined_call_operand.vmem [shape: bf16[2,64,128], index: 3, kind: output, shape index: {0}]
  %s4 = inlined_call_operand.vmem [shape: f32[2,2,128], index: 4, kind: output, shape index: {1}]
  %s5 = inlined_call_operand.vmem [shape: bf16[2,64,128], index: 5, kind: output, shape index: {2}]
  %s6 = inlined_call_operand.vmem [shape: f32[2,2,128], index: 6, kind: output, shape index: {3}]
  %7 = xla_tuple %s3, %s4, %s5, %s6
  %s8 = sld [smem:[#allocation0]]
  $region69: #{basic_block_forward.3} parent=0
    _
  %s10 = ssub.s32 1, %s8
  %s11 = scalar_select 0, %s10, %s8
  loop: start=0, step=1, limit=4
  $region2: #{basic_block_forward.3} parent=0 // loop_pre_header
    _
  $region3: #{basic_block_forward.3} parent=0 // loop_header
    %s13 = sphi 0, %s17
    %p14 = scmp.ge.s32.totalorder %s13, 4
    %s20 = sphi 0, %s32
    %s21 = sphi 0, %s28
    %s22 = sphi 0, %s20
    %s23 = sphi 0, %s21
    %s24 = sphi 0, %s22
    %s25 = sphi 0, %s23
    %s35 = sphi 0, %s37
    %s38 = sphi 0, %s35
    %s39 = sphi 0, %s38
    %s55 = sphi 0, %s39
    %s61 = sphi 0, %s63
    %s64 = sphi 0, %s61
    %s65 = sphi 0, %s64
    %s81 = sphi 0, %s65
    %s87 = sphi 0, %s89
    %s90 = sphi 0, %s87
    %s91 = sphi 0, %s90
    %s107 = sphi 0, %s91
    %s115 = sphi 0, %s117
    %s118 = sphi 0, %s115
    %s119 = sphi 0, %s118
    %s135 = sphi 0, %s119
    %s143 = sphi 0, %s145
    %s146 = sphi 0, %s143
    %s147 = sphi 0, %s146
    %s163 = sphi 0, %s147
    %s171 = sphi 0, %s173
    %s174 = sphi 0, %s171
    %s175 = sphi 0, %s174
    %s191 = sphi 0, %s175
    %s199 = sphi 0, %s201
    %s202 = sphi 0, %s199
    %s203 = sphi 0, %s202
    %s219 = sphi 0, %s203
  $region4: #{basic_block_forward.3} parent=0 // loop_header_branch
    %16 = sbr.rel (%p14) target = $region8
  $region5: #{basic_block_forward.3} parent=0 // loop_body
    %s18 = ssub.s32 %s13, 1
    %s19 = ssub.s32 %s13, 2
    %s26 = sadd.s32 1, %s21
    %p27 = scmp.ge.s32.totalorder %s26, 1
    %s28 = scalar_select %p27, 0, %s26
    %s29 = sadd.s32 1, %s20
    %s30 = scalar_select %p27, %s29, %s20
    %p31 = scmp.ge.s32.totalorder %s30, 2
    %s32 = scalar_select %p31, 0, %s30
    %s33 = ssub.s32 %s20, %s32
    %p34 = scmp.eq.s32.totalorder %s33, 0
    %s36 = sadd.s32 %s35, 1
    %s37 = scalar_select %p34, %s35, %s36
    %p40 = pneg %p34
    %p41 = scmp.eq.s32.totalorder %s13, 1
    %p42 = por %p40, %p41
    %p43 = scmp.ne.s32.totalorder %s35, %s38
    %p44 = scmp.eq.s32.totalorder %s13, 0
    %p45 = por %p43, %p44
    %p46 = scmp.ne.s32.totalorder %s35, %s38
    %p47 = scmp.eq.s32.totalorder %s18, 1
    %p48 = por %p46, %p47
    %p49 = scmp.ne.s32.totalorder %s38, %s39
    %p50 = scmp.eq.s32.totalorder %s18, 0
    %p51 = por %p49, %p50
    %p52 = scmp.ne.s32.totalorder %s38, %s39
    %p53 = scmp.eq.s32.totalorder %s19, 1
    %p54 = por %p52, %p53
    %p56 = scmp.ne.s32.totalorder %s39, %s55
    %p57 = scmp.eq.s32.totalorder %s19, 0
    %p58 = por %p56, %p57
    %s59 = ssub.s32 %s21, %s28
    %p60 = scmp.eq.s32.totalorder %s59, 0
    %s62 = sadd.s32 %s61, 1
    %s63 = scalar_select %p60, %s61, %s62
    %p66 = pneg %p60
    %p67 = scmp.eq.s32.totalorder %s13, 1
    %p68 = por %p66, %p67
    %p69 = scmp.ne.s32.totalorder %s61, %s64
    %p70 = scmp.eq.s32.totalorder %s13, 0
    %p71 = por %p69, %p70
    %p72 = scmp.ne.s32.totalorder %s61, %s64
    %p73 = scmp.eq.s32.totalorder %s18, 1
    %p74 = por %p72, %p73
    %p75 = scmp.ne.s32.totalorder %s64, %s65
    %p76 = scmp.eq.s32.totalorder %s18, 0
    %p77 = por %p75, %p76
    %p78 = scmp.ne.s32.totalorder %s64, %s65
    %p79 = scmp.eq.s32.totalorder %s19, 1
    %p80 = por %p78, %p79
    %p82 = scmp.ne.s32.totalorder %s65, %s81
    %p83 = scmp.eq.s32.totalorder %s19, 0
    %p84 = por %p82, %p83
    %s85 = ssub.s32 %s21, %s28
    %p86 = scmp.eq.s32.totalorder %s85, 0
    %s88 = sadd.s32 %s87, 1
    %s89 = scalar_select %p86, %s87, %s88
    %p92 = pneg %p86
    %p93 = scmp.eq.s32.totalorder %s13, 1
    %p94 = por %p92, %p93
    %p95 = scmp.ne.s32.totalorder %s87, %s90
    %p96 = scmp.eq.s32.totalorder %s13, 0
    %p97 = por %p95, %p96
    %p98 = scmp.ne.s32.totalorder %s87, %s90
    %p99 = scmp.eq.s32.totalorder %s18, 1
    %p100 = por %p98, %p99
    %p101 = scmp.ne.s32.totalorder %s90, %s91
    %p102 = scmp.eq.s32.totalorder %s18, 0
    %p103 = por %p101, %p102
    %p104 = scmp.ne.s32.totalorder %s90, %s91
    %p105 = scmp.eq.s32.totalorder %s19, 1
    %p106 = por %p104, %p105
    %p108 = scmp.ne.s32.totalorder %s91, %s107
    %p109 = scmp.eq.s32.totalorder %s19, 0
    %p110 = por %p108, %p109
    %s111 = ssub.s32 %s20, %s32
    %s112 = ssub.s32 %s21, %s28
    %s113 = sor.u32 %s111, %s112
    %p114 = scmp.eq.s32.totalorder %s113, 0
    %s116 = sadd.s32 %s115, 1
    %s117 = scalar_select %p114, %s115, %s116
    %p120 = pneg %p114
    %p121 = scmp.eq.s32.totalorder %s13, 1
    %p122 = por %p120, %p121
    %p123 = scmp.ne.s32.totalorder %s115, %s118
    %p124 = scmp.eq.s32.totalorder %s13, 0
    %p125 = por %p123, %p124
    %p126 = scmp.ne.s32.totalorder %s115, %s118
    %p127 = scmp.eq.s32.totalorder %s18, 1
    %p128 = por %p126, %p127
    %p129 = scmp.ne.s32.totalorder %s118, %s119
    %p130 = scmp.eq.s32.totalorder %s18, 0
    %p131 = por %p129, %p130
    %p132 = scmp.ne.s32.totalorder %s118, %s119
    %p133 = scmp.eq.s32.totalorder %s19, 1
    %p134 = por %p132, %p133
    %p136 = scmp.ne.s32.totalorder %s119, %s135
    %p137 = scmp.eq.s32.totalorder %s19, 0
    %p138 = por %p136, %p137
    %s139 = ssub.s32 %s20, %s32
    %s140 = ssub.s32 %s21, %s28
    %s141 = sor.u32 %s139, %s140
    %p142 = scmp.eq.s32.totalorder %s141, 0
    %s144 = sadd.s32 %s143, 1
    %s145 = scalar_select %p142, %s143, %s144
    %p148 = pneg %p142
    %p149 = scmp.eq.s32.totalorder %s13, 1
    %p150 = por %p148, %p149
    %p151 = scmp.ne.s32.totalorder %s143, %s146
    %p152 = scmp.eq.s32.totalorder %s13, 0
    %p153 = por %p151, %p152
    %p154 = scmp.ne.s32.totalorder %s143, %s146
    %p155 = scmp.eq.s32.totalorder %s18, 1
    %p156 = por %p154, %p155
    %p157 = scmp.ne.s32.totalorder %s146, %s147
    %p158 = scmp.eq.s32.totalorder %s18, 0
    %p159 = por %p157, %p158
    %p160 = scmp.ne.s32.totalorder %s146, %s147
    %p161 = scmp.eq.s32.totalorder %s19, 1
    %p162 = por %p160, %p161
    %p164 = scmp.ne.s32.totalorder %s147, %s163
    %p165 = scmp.eq.s32.totalorder %s19, 0
    %p166 = por %p164, %p165
    %s167 = ssub.s32 %s20, %s32
    %s168 = ssub.s32 %s21, %s28
    %s169 = sor.u32 %s167, %s168
    %p170 = scmp.eq.s32.totalorder %s169, 0
    %s172 = sadd.s32 %s171, 1
    %s173 = scalar_select %p170, %s171, %s172
    %p176 = pneg %p170
    %p177 = scmp.eq.s32.totalorder %s13, 1
    %p178 = por %p176, %p177
    %p179 = scmp.ne.s32.totalorder %s171, %s174
    %p180 = scmp.eq.s32.totalorder %s13, 0
    %p181 = por %p179, %p180
    %p182 = scmp.ne.s32.totalorder %s171, %s174
    %p183 = scmp.eq.s32.totalorder %s18, 1
    %p184 = por %p182, %p183
    %p185 = scmp.ne.s32.totalorder %s174, %s175
    %p186 = scmp.eq.s32.totalorder %s18, 0
    %p187 = por %p185, %p186
    %p188 = scmp.ne.s32.totalorder %s174, %s175
    %p189 = scmp.eq.s32.totalorder %s19, 1
    %p190 = por %p188, %p189
    %p192 = scmp.ne.s32.totalorder %s175, %s191
    %p193 = scmp.eq.s32.totalorder %s19, 0
    %p194 = por %p192, %p193
    %s195 = ssub.s32 %s20, %s32
    %s196 = ssub.s32 %s21, %s28
    %s197 = sor.u32 %s195, %s196
    %p198 = scmp.eq.s32.totalorder %s197, 0
    %s200 = sadd.s32 %s199, 1
    %s201 = scalar_select %p198, %s199, %s200
    %p204 = pneg %p198
    %p205 = scmp.eq.s32.totalorder %s13, 1
    %p206 = por %p204, %p205
    %p207 = scmp.ne.s32.totalorder %s199, %s202
    %p208 = scmp.eq.s32.totalorder %s13, 0
    %p209 = por %p207, %p208
    %p210 = scmp.ne.s32.totalorder %s199, %s202
    %p211 = scmp.eq.s32.totalorder %s18, 1
    %p212 = por %p210, %p211
    %p213 = scmp.ne.s32.totalorder %s202, %s203
    %p214 = scmp.eq.s32.totalorder %s18, 0
    %p215 = por %p213, %p214
    %p216 = scmp.ne.s32.totalorder %s202, %s203
    %p217 = scmp.eq.s32.totalorder %s19, 1
    %p218 = por %p216, %p217
    %p220 = scmp.ne.s32.totalorder %s203, %s219
    %p221 = scmp.eq.s32.totalorder %s19, 0
    %p222 = por %p220, %p221
    %p223 = scmp.le.s32.totalorder 1, %s13
    %p224 = scmp.lt.s32.totalorder %s13, 3
    %p225 = pnand %p223, %p224
    %p226 = pneg %p225
    // Predicated region
    $region9: #{basic_block_forward.3} parent=5 // pred_check
      _
    $region10: #{basic_block_forward.3} parent=5 // pred_check_branch
      %228 = sbr.rel (%p225) target = $region12
    $region11: #{basic_block_forward.3} parent=5 // pred_region
      %s229 = ssub.s32 %s13, 1
      // Predicated region
      $region13: #{basic_block_forward.3} parent=11 // pred_check
        %p230 = pneg %p77
      $region14: #{basic_block_forward.3} parent=11 // pred_check_branch
        %232 = sbr.rel (%p230) target = $region16
      $region15: #{basic_block_forward.3} parent=11 // pred_region
        %p233 = scmp.lt.s32.totalorder %s23, 0
        %s234 = scalar_select %p233, %s23, 0
        %s235 = smul.addr %s234, 4
        %s236 = scalar_lea.vmem %s1, %s235
      $region16: #{basic_block_forward.3} parent=11 // pred_fallthru
        _
      // Predicated region
      $region17: #{basic_block_forward.3} parent=11 // pred_check
        %p237 = pneg %p103
      $region18: #{basic_block_forward.3} parent=11 // pred_check_branch
        %239 = sbr.rel (%p237) target = $region20
      $region19: #{basic_block_forward.3} parent=11 // pred_region
        %p240 = scmp.lt.s32.totalorder %s23, 0
        %s241 = scalar_select %p240, %s23, 0
        %s242 = smul.addr %s241, 4
        %s243 = scalar_lea.vmem %s2, %s242
      $region20: #{basic_block_forward.3} parent=11 // pred_fallthru
        _
    $region12: #{basic_block_forward.3} parent=5 // pred_fallthru
      _
    %p244 = scmp.lt.s32.totalorder %s13, 2
    // Predicated region
    $region21: #{basic_block_forward.3} parent=5 // pred_check
      %p245 = pneg %p244
    $region22: #{basic_block_forward.3} parent=5 // pred_check_branch
      %247 = sbr.rel (%p245) target = $region24
    $region23: #{basic_block_forward.3} parent=5 // pred_region
      // Predicated region
      $region25: #{basic_block_forward.3} parent=23 // pred_check
        %p248 = pneg %p45
      $region26: #{basic_block_forward.3} parent=23 // pred_check_branch
        %250 = sbr.rel (%p248) target = $region28
      $region27: #{basic_block_forward.3} parent=23 // pred_region
        %p251 = scmp.lt.s32.totalorder %s20, 1
        %s252 = scalar_select %p251, %s20, 1
        %s253 = smul.addr %s252, 18
        %s254 = smul.addr %s253, 4
        %s255 = scalar_lea.vmem %s0, %s254
      $region28: #{basic_block_forward.3} parent=23 // pred_fallthru
        _
    $region24: #{basic_block_forward.3} parent=5 // pred_fallthru
      _
    %p256 = scmp.le.s32.totalorder 1, %s13
    %p257 = scmp.lt.s32.totalorder %s13, 3
    %p258 = pnand %p256, %p257
    %p259 = pneg %p258
    // Predicated region
    $region29: #{basic_block_forward.3} parent=5 // pred_check
      _
    $region30: #{basic_block_forward.3} parent=5 // pred_check_branch
      %261 = sbr.rel (%p258) target = $region32
    $region31: #{basic_block_forward.3} parent=5 // pred_region
      %s262 = ssub.s32 %s13, 1
      %p263 = scmp.lt.s32.totalorder %s22, 1
      %s264 = scalar_select %p263, %s22, 1
      %s265 = smul.addr %s264, 18
      %s266 = smul.addr %s265, 4
      %s267 = scalar_lea.vmem %s0, %s266
      %p268 = pneg %p51
      %p269 = pneg %p48
      %p270 = scmp.lt.s32.totalorder %s23, 0
      %s271 = scalar_select %p270, %s23, 0
      %s272 = smul.addr %s271, 4
      %s273 = scalar_lea.vmem %s1, %s272
      %p274 = pneg %p77
      %p275 = pneg %p74
      %p276 = scmp.lt.s32.totalorder %s23, 0
      %s277 = scalar_select %p276, %s23, 0
      %s278 = smul.addr %s277, 4
      %s279 = scalar_lea.vmem %s2, %s278
      %p280 = pneg %p103
      %p281 = pneg %p100
      %p282 = pneg %p131
      %p283 = pneg %p128
      %p284 = scmp.lt.s32.totalorder %s22, 1
      %s285 = scalar_select %p284, %s22, 1
      %p286 = scmp.lt.s32.totalorder %s23, 0
      %s287 = scalar_select %p286, %s23, 0
      %s288 = smul.addr %s285, 8
      %s289 = sadd.s32 %s287, %s288
      %s290 = smul.addr %s289, 4
      %s291 = scalar_lea.vmem %s3, %s290
      %p292 = pneg %p159
      %p293 = pneg %p156
      %p294 = scmp.lt.s32.totalorder %s22, 1
      %s295 = scalar_select %p294, %s22, 1
      %p296 = scmp.lt.s32.totalorder %s23, 0
      %s297 = scalar_select %p296, %s23, 0
      %s298 = sadd.s32 %s297, %s295
      %s299 = smul.addr %s298, 2
      %s300 = scalar_lea.vmem %s4, %s299
      %p301 = pneg %p187
      %p302 = pneg %p184
      %p303 = scmp.lt.s32.totalorder %s22, 1
      %s304 = scalar_select %p303, %s22, 1
      %p305 = scmp.lt.s32.totalorder %s23, 0
      %s306 = scalar_select %p305, %s23, 0
      %s307 = smul.addr %s304, 8
      %s308 = sadd.s32 %s306, %s307
      %s309 = smul.addr %s308, 4
      %s310 = scalar_lea.vmem %s5, %s309
      %p311 = pneg %p215
      %p312 = pneg %p212
      %p313 = scmp.lt.s32.totalorder %s22, 1
      %s314 = scalar_select %p313, %s22, 1
      %p315 = scmp.lt.s32.totalorder %s23, 0
      %s316 = scalar_select %p315, %s23, 0
      %s317 = sadd.s32 %s316, %s314
      %s318 = smul.addr %s317, 2
      %s319 = scalar_lea.vmem %s6, %s318
      %p320 = scmp.lt.s32.totalorder %s22, 1
      %s321 = scalar_select %p320, %s22, 1
      %s322 = smul.addr %s321, 18
      %s323 = smul.addr %s322, 4
      %s324 = scalar_lea.vmem %s0, %s323
      %p325 = scmp.lt.s32.totalorder %s23, 0
      %s326 = scalar_select %p325, %s23, 0
      %s327 = smul.addr %s326, 4
      %s328 = scalar_lea.vmem %s1, %s327
      %p329 = scmp.lt.s32.totalorder %s23, 0
      %s330 = scalar_select %p329, %s23, 0
      %s331 = smul.addr %s330, 4
      %s332 = scalar_lea.vmem %s2, %s331
      %p333 = scmp.lt.s32.totalorder %s22, 1
      %s334 = scalar_select %p333, %s22, 1
      %p335 = scmp.lt.s32.totalorder %s23, 0
      %s336 = scalar_select %p335, %s23, 0
      %s337 = smul.addr %s334, 8
      %s338 = sadd.s32 %s336, %s337
      %s339 = smul.addr %s338, 4
      %s340 = scalar_lea.vmem %s3, %s339
      %p341 = scmp.lt.s32.totalorder %s22, 1
      %s342 = scalar_select %p341, %s22, 1
      %p343 = scmp.lt.s32.totalorder %s23, 0
      %s344 = scalar_select %p343, %s23, 0
      %s345 = sadd.s32 %s344, %s342
      %s346 = smul.addr %s345, 2
      %s347 = scalar_lea.vmem %s4, %s346
      %p348 = scmp.lt.s32.totalorder %s22, 1
      %s349 = scalar_select %p348, %s22, 1
      %p350 = scmp.lt.s32.totalorder %s23, 0
      %s351 = scalar_select %p350, %s23, 0
      %s352 = smul.addr %s349, 8
      %s353 = sadd.s32 %s351, %s352
      %s354 = smul.addr %s353, 4
      %s355 = scalar_lea.vmem %s5, %s354
      %p356 = scmp.lt.s32.totalorder %s22, 1
      %s357 = scalar_select %p356, %s22, 1
      %p358 = scmp.lt.s32.totalorder %s23, 0
      %s359 = scalar_select %p358, %s23, 0
      %s360 = sadd.s32 %s359, %s357
      %s361 = smul.addr %s360, 2
      %s362 = scalar_lea.vmem %s6, %s361
      %v364 = vld [vmem:[%s324] sm:$0xf]
      %v365 = vld [vmem:[%s324 + $0x8] sm:$0xf]
      %v366 = vld [vmem:[%s324 + $0x10] sm:$0xf]
      %v367 = vld [vmem:[%s324 + $0x18] sm:$0xf]
      %v368 = vld [vmem:[%s324 + $0x20] sm:$0xf]
      %v369 = vld [vmem:[%s324 + $0x28] sm:$0xf]
      %v370 = vld [vmem:[%s324 + $0x30] sm:$0xf]
      %v371 = vld [vmem:[%s324 + $0x38] sm:$0xf]
      %v372 = vld [vmem:[%s324 + $0x4] sm:$0x1]
      %v373 = vld [vmem:[%s324 + $0xc] sm:$0x1]
      %v374 = vld [vmem:[%s324 + $0x14] sm:$0x1]
      %v375 = vld [vmem:[%s324 + $0x1c] sm:$0x1]
      %v376 = vld [vmem:[%s324 + $0x24] sm:$0x1]
      %v377 = vld [vmem:[%s324 + $0x2c] sm:$0x1]
      %v378 = vld [vmem:[%s324 + $0x34] sm:$0x1]
      %v379 = vld [vmem:[%s324 + $0x3c] sm:$0x1]
      %s380 = scalar_lea.vmem %s324, 8
      %v381 = vld [vmem:[%s380] sm:$0xf]
      %v382 = vld [vmem:[%s380 + $0x8] sm:$0xf]
      %v383 = vld [vmem:[%s380 + $0x10] sm:$0xf]
      %v384 = vld [vmem:[%s380 + $0x18] sm:$0xf]
      %v385 = vld [vmem:[%s380 + $0x20] sm:$0xf]
      %v386 = vld [vmem:[%s380 + $0x28] sm:$0xf]
      %v387 = vld [vmem:[%s380 + $0x30] sm:$0xf]
      %v388 = vld [vmem:[%s380 + $0x38] sm:$0xf]
      %v389 = vld [vmem:[%s380 + $0x4] sm:$0x1]
      %v390 = vld [vmem:[%s380 + $0xc] sm:$0x1]
      %v391 = vld [vmem:[%s380 + $0x14] sm:$0x1]
      %v392 = vld [vmem:[%s380 + $0x1c] sm:$0x1]
      %v393 = vld [vmem:[%s380 + $0x24] sm:$0x1]
      %v394 = vld [vmem:[%s380 + $0x2c] sm:$0x1]
      %v395 = vld [vmem:[%s380 + $0x34] sm:$0x1]
      %v396 = vld [vmem:[%s380 + $0x3c] sm:$0x1]
      %v413 = vunpack.c.l.b16 %v364
      %v414 = vunpack.c.l.b16 %v372
      %v415 = vunpack.c.l.b16 %v365
      %v416 = vunpack.c.l.b16 %v373
      %v417 = vunpack.c.l.b16 %v366
      %v418 = vunpack.c.l.b16 %v374
      %v419 = vunpack.c.l.b16 %v367
      %v420 = vunpack.c.l.b16 %v375
      %v421 = vunpack.c.l.b16 %v368
      %v422 = vunpack.c.l.b16 %v376
      %v423 = vunpack.c.l.b16 %v369
      %v424 = vunpack.c.l.b16 %v377
      %v425 = vunpack.c.l.b16 %v370
      %v426 = vunpack.c.l.b16 %v378
      %v427 = vunpack.c.l.b16 %v371
      %v428 = vunpack.c.l.b16 %v379
      %v429 = vpack.c.b16 %v414, %v413
      %v430 = vpack.c.b16 %v416, %v415
      %v431 = vpack.c.b16 %v418, %v417
      %v432 = vpack.c.b16 %v420, %v419
      %v433 = vpack.c.b16 %v422, %v421
      %v434 = vpack.c.b16 %v424, %v423
      %v435 = vpack.c.b16 %v426, %v425
      %v436 = vpack.c.b16 %v428, %v427
      %v438 = vshrl.u32 %v429, 16
      %v440 = vshll.u32 %v429, 16
      %v442 = vrot.slane %v440, 1
      %v443 = vor.u32 %v438, %v442
      %v445 = vshrl.u32 %v430, 16
      %v447 = vshll.u32 %v430, 16
      %v449 = vrot.slane %v447, 1
      %v450 = vor.u32 %v445, %v449
      %v452 = vshrl.u32 %v431, 16
      %v454 = vshll.u32 %v431, 16
      %v456 = vrot.slane %v454, 1
      %v457 = vor.u32 %v452, %v456
      %v459 = vshrl.u32 %v432, 16
      %v461 = vshll.u32 %v432, 16
      %v463 = vrot.slane %v461, 1
      %v464 = vor.u32 %v459, %v463
      %v466 = vshrl.u32 %v433, 16
      %v468 = vshll.u32 %v433, 16
      %v470 = vrot.slane %v468, 1
      %v471 = vor.u32 %v466, %v470
      %v473 = vshrl.u32 %v434, 16
      %v475 = vshll.u32 %v434, 16
      %v477 = vrot.slane %v475, 1
      %v478 = vor.u32 %v473, %v477
      %v480 = vshrl.u32 %v435, 16
      %v482 = vshll.u32 %v435, 16
      %v484 = vrot.slane %v482, 1
      %v485 = vor.u32 %v480, %v484
      %v487 = vshrl.u32 %v436, 16
      %v489 = vshll.u32 %v436, 16
      %v491 = vrot.slane %v489, 1
      %v492 = vor.u32 %v487, %v491
      %493 = vrot.lane.b32.xlu0 %v443, 16
      %v494 = vpop.permute.xlu0 %493
      %495 = vrot.lane.b32.xlu0 %v450, 16
      %v496 = vpop.permute.xlu0 %495
      %497 = vrot.lane.b32.xlu0 %v457, 16
      %v498 = vpop.permute.xlu0 %497
      %499 = vrot.lane.b32.xlu0 %v464, 16
      %v500 = vpop.permute.xlu0 %499
      %501 = vrot.lane.b32.xlu0 %v471, 16
      %v502 = vpop.permute.xlu0 %501
      %503 = vrot.lane.b32.xlu0 %v478, 16
      %v504 = vpop.permute.xlu0 %503
      %505 = vrot.lane.b32.xlu0 %v485, 16
      %v506 = vpop.permute.xlu0 %505
      %507 = vrot.lane.b32.xlu0 %v492, 16
      %v508 = vpop.permute.xlu0 %507
      %v517 = vunpack.c.l.b16 %v381
      %v518 = vunpack.c.l.b16 %v382
      %v519 = vunpack.c.l.b16 %v383
      %v520 = vunpack.c.l.b16 %v384
      %v521 = vunpack.c.l.b16 %v385
      %v522 = vunpack.c.l.b16 %v386
      %v523 = vunpack.c.l.b16 %v387
      %v524 = vunpack.c.l.b16 %v388
      %v525 = vpack.c.b16 %v517, %v517
      %v526 = vpack.c.b16 %v518, %v518
      %v527 = vpack.c.b16 %v519, %v519
      %v528 = vpack.c.b16 %v520, %v520
      %v529 = vpack.c.b16 %v521, %v521
      %v530 = vpack.c.b16 %v522, %v522
      %v531 = vpack.c.b16 %v523, %v523
      %v532 = vpack.c.b16 %v524, %v524
      %533 = vrot.lane.b32.xlu0 %v525, 32
      %v534 = vpop.permute.xlu0 %533
      %535 = vrot.lane.b32.xlu0 %v526, 32
      %v536 = vpop.permute.xlu0 %535
      %537 = vrot.lane.b32.xlu0 %v527, 32
      %v538 = vpop.permute.xlu0 %537
      %539 = vrot.lane.b32.xlu0 %v528, 32
      %v540 = vpop.permute.xlu0 %539
      %541 = vrot.lane.b32.xlu0 %v529, 32
      %v542 = vpop.permute.xlu0 %541
      %543 = vrot.lane.b32.xlu0 %v530, 32
      %v544 = vpop.permute.xlu0 %543
      %545 = vrot.lane.b32.xlu0 %v531, 32
      %v546 = vpop.permute.xlu0 %545
      %547 = vrot.lane.b32.xlu0 %v532, 32
      %v548 = vpop.permute.xlu0 %547
      %v557 = vunpack.c.l.b16 %v389
      %v558 = vunpack.c.l.b16 %v390
      %v559 = vunpack.c.l.b16 %v391
      %v560 = vunpack.c.l.b16 %v392
      %v561 = vunpack.c.l.b16 %v393
      %v562 = vunpack.c.l.b16 %v394
      %v563 = vunpack.c.l.b16 %v395
      %v564 = vunpack.c.l.b16 %v396
      %v565 = vpack.c.b16 %v557, %v517
      %v566 = vpack.c.b16 %v558, %v518
      %v567 = vpack.c.b16 %v559, %v519
      %v568 = vpack.c.b16 %v560, %v520
      %v569 = vpack.c.b16 %v561, %v521
      %v570 = vpack.c.b16 %v562, %v522
      %v571 = vpack.c.b16 %v563, %v523
      %v572 = vpack.c.b16 %v564, %v524
      %v574 = vshrl.u32 %v565, 16
      %v576 = vshll.u32 %v565, 16
      %v578 = vrot.slane %v576, 1
      %v579 = vor.u32 %v574, %v578
      %v581 = vshrl.u32 %v566, 16
      %v583 = vshll.u32 %v566, 16
      %v585 = vrot.slane %v583, 1
      %v586 = vor.u32 %v581, %v585
      %v588 = vshrl.u32 %v567, 16
      %v590 = vshll.u32 %v567, 16
      %v592 = vrot.slane %v590, 1
      %v593 = vor.u32 %v588, %v592
      %v595 = vshrl.u32 %v568, 16
      %v597 = vshll.u32 %v568, 16
      %v599 = vrot.slane %v597, 1
      %v600 = vor.u32 %v595, %v599
      %v602 = vshrl.u32 %v569, 16
      %v604 = vshll.u32 %v569, 16
      %v606 = vrot.slane %v604, 1
      %v607 = vor.u32 %v602, %v606
      %v609 = vshrl.u32 %v570, 16
      %v611 = vshll.u32 %v570, 16
      %v613 = vrot.slane %v611, 1
      %v614 = vor.u32 %v609, %v613
      %v616 = vshrl.u32 %v571, 16
      %v618 = vshll.u32 %v571, 16
      %v620 = vrot.slane %v618, 1
      %v621 = vor.u32 %v616, %v620
      %v623 = vshrl.u32 %v572, 16
      %v625 = vshll.u32 %v572, 16
      %v627 = vrot.slane %v625, 1
      %v628 = vor.u32 %v623, %v627
      %629 = vrot.lane.b32.xlu0 %v579, 48
      %v630 = vpop.permute.xlu0 %629
      %631 = vrot.lane.b32.xlu0 %v586, 48
      %v632 = vpop.permute.xlu0 %631
      %633 = vrot.lane.b32.xlu0 %v593, 48
      %v634 = vpop.permute.xlu0 %633
      %635 = vrot.lane.b32.xlu0 %v600, 48
      %v636 = vpop.permute.xlu0 %635
      %637 = vrot.lane.b32.xlu0 %v607, 48
      %v638 = vpop.permute.xlu0 %637
      %639 = vrot.lane.b32.xlu0 %v614, 48
      %v640 = vpop.permute.xlu0 %639
      %641 = vrot.lane.b32.xlu0 %v621, 48
      %v642 = vpop.permute.xlu0 %641
      %643 = vrot.lane.b32.xlu0 %v628, 48
      %v644 = vpop.permute.xlu0 %643
      %vm645 = vcmask 130048
      %v648 = vsel %vm645, %v364, %v494
      %v651 = vsel %vm645, %v365, %v496
      %v654 = vsel %vm645, %v366, %v498
      %v657 = vsel %vm645, %v367, %v500
      %v660 = vsel %vm645, %v368, %v502
      %v663 = vsel %vm645, %v369, %v504
      %v666 = vsel %vm645, %v370, %v506
      %v669 = vsel %vm645, %v371, %v508
      %vm670 = vcmask 261120
      %v672 = vsel %vm670, %v648, %v534
      %v674 = vsel %vm670, %v651, %v536
      %v676 = vsel %vm670, %v654, %v538
      %v678 = vsel %vm670, %v657, %v540
      %v680 = vsel %vm670, %v660, %v542
      %v682 = vsel %vm670, %v663, %v544
      %v684 = vsel %vm670, %v666, %v546
      %v686 = vsel %vm670, %v669, %v548
      %vm687 = vcmask 392192
      %v689 = vsel %vm687, %v672, %v630
      %v691 = vsel %vm687, %v674, %v632
      %v693 = vsel %vm687, %v676, %v634
      %v695 = vsel %vm687, %v678, %v636
      %v697 = vsel %vm687, %v680, %v638
      %v699 = vsel %vm687, %v682, %v640
      %v701 = vsel %vm687, %v684, %v642
      %v703 = vsel %vm687, %v686, %v644
      %v704 = vld [vmem:[%s328] sm:$0xf]
      %v705 = vld [vmem:[%s328 + $0x4] sm:$0xf]
      %v706 = vld [vmem:[%s328 + $0x8] sm:$0xf]
      %v707 = vld [vmem:[%s328 + $0xc] sm:$0xf]
      %v708 = vld [vmem:[%s328 + $0x10] sm:$0xf]
      %v709 = vld [vmem:[%s328 + $0x14] sm:$0xf]
      %v710 = vld [vmem:[%s328 + $0x18] sm:$0xf]
      %v711 = vld [vmem:[%s328 + $0x1c] sm:$0xf]
      %v720 = vunpack.c.l.b16 %v689
      %v721 = vunpack.c.l.b16 %v691
      %v722 = vunpack.c.l.b16 %v693
      %v723 = vunpack.c.l.b16 %v695
      %v724 = vunpack.c.l.b16 %v697
      %v725 = vunpack.c.l.b16 %v699
      %v726 = vunpack.c.l.b16 %v701
      %v727 = vunpack.c.l.b16 %v703
      %v728 = vpack.c.b16 %v721, %v720
      %v729 = vpack.c.b16 %v723, %v722
      %v730 = vpack.c.b16 %v725, %v724
      %v731 = vpack.c.b16 %v727, %v726
      %v740 = vunpack.c.l.b16 %v704
      %v741 = vunpack.c.l.b16 %v705
      %v742 = vunpack.c.l.b16 %v706
      %v743 = vunpack.c.l.b16 %v707
      %v744 = vunpack.c.l.b16 %v708
      %v745 = vunpack.c.l.b16 %v709
      %v746 = vunpack.c.l.b16 %v710
      %v747 = vunpack.c.l.b16 %v711
      %v748 = vpack.c.b16 %v741, %v740
      %v749 = vpack.c.b16 %v743, %v742
      %v750 = vpack.c.b16 %v745, %v744
      %v751 = vpack.c.b16 %v747, %v746
      %vm756 = vcmask 523264
      %v758 = vsel %vm756, %v728, 0
      %v761 = vsel %vm756, %v729, 0
      %v764 = vsel %vm756, %v730, 0
      %v767 = vsel %vm756, %v731, 0
      %769 = vmatpush.bf16.msra.mxu0 0
      %770 = vmatpush.bf16.msra.mxu0 0
      %771 = vmatpush.bf16.msra.mxu0 0
      %772 = vmatpush.bf16.msra.mxu0 0
      %773 = vmatpush.bf16.msra.mxu0 %v751
      %774 = vmatpush.bf16.msra.mxu0 %v750
      %775 = vmatpush.bf16.msra.mxu0 %v749
      %776 = vmatpush.bf16.msra.mxu0 %v748
      %777 = vmatmul.bf16.gmra.mxu0 %v758
      %v778 = vpop.f32.mrf.mxu0
      %v779 = vadd.f32 0.0, %v778
      %v780 = vpop.f32.mrf.mxu0
      %v781 = vadd.f32 0.0, %v780
      %782 = vmatmul.bf16.gmra.mxu0 %v761
      %v783 = vpop.f32.mrf.mxu0
      %v784 = vadd.f32 0.0, %v783
      %v785 = vpop.f32.mrf.mxu0
      %v786 = vadd.f32 0.0, %v785
      %787 = vmatmul.bf16.gmra.mxu0 %v764
      %v788 = vpop.f32.mrf.mxu0
      %v789 = vadd.f32 0.0, %v788
      %v790 = vpop.f32.mrf.mxu0
      %v791 = vadd.f32 0.0, %v790
      %792 = vmatmul.bf16.gmra.mxu0 %v767
      %v793 = vpop.f32.mrf.mxu0
      %v794 = vadd.f32 0.0, %v793
      %v795 = vpop.f32.mrf.mxu0
      %v796 = vadd.f32 0.0, %v795
      %797 = vdwg.mxu0
      %v798 = vpack.c.bf16 %v779, %v779
      %v799 = vpack.c.bf16 %v781, %v781
      %v800 = vpack.c.bf16 %v784, %v784
      %v801 = vpack.c.bf16 %v786, %v786
      %v802 = vpack.c.bf16 %v789, %v789
      %v803 = vpack.c.bf16 %v791, %v791
      %v804 = vpack.c.bf16 %v794, %v794
      %v805 = vpack.c.bf16 %v796, %v796
      %806 = vst [vmem:[%s340] sm:$0xf] %v798
      %807 = vst [vmem:[%s340 + $0x4] sm:$0xf] %v799
      %808 = vst [vmem:[%s340 + $0x8] sm:$0xf] %v800
      %809 = vst [vmem:[%s340 + $0xc] sm:$0xf] %v801
      %810 = vst [vmem:[%s340 + $0x10] sm:$0xf] %v802
      %811 = vst [vmem:[%s340 + $0x14] sm:$0xf] %v803
      %812 = vst [vmem:[%s340 + $0x18] sm:$0xf] %v804
      %813 = vst [vmem:[%s340 + $0x1c] sm:$0xf] %v805
      %v814 = vunpack.c.l.bf16 %v798
      %v815 = vunpack.c.l.bf16 %v799
      %v816 = vunpack.c.l.bf16 %v800
      %v817 = vunpack.c.l.bf16 %v801
      %v818 = vunpack.c.l.bf16 %v802
      %v819 = vunpack.c.l.bf16 %v803
      %v820 = vunpack.c.l.bf16 %v804
      %v821 = vunpack.c.l.bf16 %v805
      %v822 = vadd.f32 %v814, %v815
      %v823 = vadd.f32 %v822, %v816
      %v824 = vadd.f32 %v823, %v817
      %v825 = vadd.f32 %v824, %v818
      %v826 = vadd.f32 %v825, %v819
      %v827 = vadd.f32 %v826, %v820
      %v828 = vadd.f32 %v827, %v821
      %v829 = vrot.slane %v828, 4
      %v830 = vadd.f32 %v828, %v829
      %v831 = vrot.slane %v830, 2
      %v832 = vadd.f32 %v830, %v831
      %v833 = vrot.slane %v832, 1
      %v834 = vadd.f32 %v832, %v833
      %v835 = vmul.f32 %v814, %v814
      %v836 = vmul.f32 %v815, %v815
      %v837 = vmul.f32 %v816, %v816
      %v838 = vmul.f32 %v817, %v817
      %v839 = vmul.f32 %v818, %v818
      %v840 = vmul.f32 %v819, %v819
      %v841 = vmul.f32 %v820, %v820
      %v842 = vmul.f32 %v821, %v821
      %v843 = vadd.f32 %v835, %v836
      %v844 = vadd.f32 %v843, %v837
      %v845 = vadd.f32 %v844, %v838
      %v846 = vadd.f32 %v845, %v839
      %v847 = vadd.f32 %v846, %v840
      %v848 = vadd.f32 %v847, %v841
      %v849 = vadd.f32 %v848, %v842
      %v850 = vrot.slane %v849, 4
      %v851 = vadd.f32 %v849, %v850
      %v852 = vrot.slane %v851, 2
      %v853 = vadd.f32 %v851, %v852
      %v854 = vrot.slane %v853, 1
      %v855 = vadd.f32 %v853, %v854
      %vm856 = vcmask 1040384
      %v857 = vsel %vm856, %v834, %v855
      %858 = vst [vmem:[%s347] sm:$0x3] %v857
      %v859 = vld [vmem:[%s332] sm:$0xf]
      %v860 = vld [vmem:[%s332 + $0x4] sm:$0xf]
      %v861 = vpack.c.b16 %v415, %v413
      %v862 = vpack.c.b16 %v419, %v417
      %v863 = vpack.c.b16 %v423, %v421
      %v864 = vpack.c.b16 %v427, %v425
      %v867 = vunpack.c.l.b16 %v859
      %v868 = vunpack.c.l.b16 %v860
      %v869 = vpack.c.b16 %v868, %v867
      %v872 = vsel %vm645, %v861, 0
      %v875 = vsel %vm645, %v862, 0
      %v878 = vsel %vm645, %v863, 0
      %v881 = vsel %vm645, %v864, 0
      %883 = vmatpush.bf16.msra.mxu0 0
      %884 = vmatpush.bf16.msra.mxu0 0
      %885 = vmatpush.bf16.msra.mxu0 0
      %886 = vmatpush.bf16.msra.mxu0 0
      %887 = vmatpush.bf16.msra.mxu0 0
      %888 = vmatpush.bf16.msra.mxu0 0
      %889 = vmatpush.bf16.msra.mxu0 0
      %890 = vmatpush.bf16.msra.mxu0 %v869
      %891 = vmatmul.bf16.gmra.mxu0 %v872
      %v892 = vpop.f32.mrf.mxu0
      %v893 = vadd.f32 0.0, %v892
      %v894 = vpop.f32.mrf.mxu0
      %v895 = vadd.f32 0.0, %v894
      %896 = vmatmul.bf16.gmra.mxu0 %v875
      %v897 = vpop.f32.mrf.mxu0
      %v898 = vadd.f32 0.0, %v897
      %v899 = vpop.f32.mrf.mxu0
      %v900 = vadd.f32 0.0, %v899
      %901 = vmatmul.bf16.gmra.mxu0 %v878
      %v902 = vpop.f32.mrf.mxu0
      %v903 = vadd.f32 0.0, %v902
      %v904 = vpop.f32.mrf.mxu0
      %v905 = vadd.f32 0.0, %v904
      %906 = vmatmul.bf16.gmra.mxu0 %v881
      %v907 = vpop.f32.mrf.mxu0
      %v908 = vadd.f32 0.0, %v907
      %v909 = vpop.f32.mrf.mxu0
      %v910 = vadd.f32 0.0, %v909
      %911 = vdwg.mxu0
      %v912 = vpack.c.bf16 %v893, %v893
      %v913 = vpack.c.bf16 %v895, %v895
      %v914 = vpack.c.bf16 %v898, %v898
      %v915 = vpack.c.bf16 %v900, %v900
      %v916 = vpack.c.bf16 %v903, %v903
      %v917 = vpack.c.bf16 %v905, %v905
      %v918 = vpack.c.bf16 %v908, %v908
      %v919 = vpack.c.bf16 %v910, %v910
      %920 = vst [vmem:[%s355] sm:$0xf] %v912
      %921 = vst [vmem:[%s355 + $0x4] sm:$0xf] %v913
      %922 = vst [vmem:[%s355 + $0x8] sm:$0xf] %v914
      %923 = vst [vmem:[%s355 + $0xc] sm:$0xf] %v915
      %924 = vst [vmem:[%s355 + $0x10] sm:$0xf] %v916
      %925 = vst [vmem:[%s355 + $0x14] sm:$0xf] %v917
      %926 = vst [vmem:[%s355 + $0x18] sm:$0xf] %v918
      %927 = vst [vmem:[%s355 + $0x1c] sm:$0xf] %v919
      %v928 = vunpack.c.l.bf16 %v912
      %v929 = vunpack.c.l.bf16 %v913
      %v930 = vunpack.c.l.bf16 %v914
      %v931 = vunpack.c.l.bf16 %v915
      %v932 = vunpack.c.l.bf16 %v916
      %v933 = vunpack.c.l.bf16 %v917
      %v934 = vunpack.c.l.bf16 %v918
      %v935 = vunpack.c.l.bf16 %v919
      %v936 = vadd.f32 %v928, %v929
      %v937 = vadd.f32 %v936, %v930
      %v938 = vadd.f32 %v937, %v931
      %v939 = vadd.f32 %v938, %v932
      %v940 = vadd.f32 %v939, %v933
      %v941 = vadd.f32 %v940, %v934
      %v942 = vadd.f32 %v941, %v935
      %v943 = vrot.slane %v942, 4
      %v944 = vadd.f32 %v942, %v943
      %v945 = vrot.slane %v944, 2
      %v946 = vadd.f32 %v944, %v945
      %v947 = vrot.slane %v946, 1
      %v948 = vadd.f32 %v946, %v947
      %v949 = vmul.f32 %v928, %v928
      %v950 = vmul.f32 %v929, %v929
      %v951 = vmul.f32 %v930, %v930
      %v952 = vmul.f32 %v931, %v931
      %v953 = vmul.f32 %v932, %v932
      %v954 = vmul.f32 %v933, %v933
      %v955 = vmul.f32 %v934, %v934
      %v956 = vmul.f32 %v935, %v935
      %v957 = vadd.f32 %v949, %v950
      %v958 = vadd.f32 %v957, %v951
      %v959 = vadd.f32 %v958, %v952
      %v960 = vadd.f32 %v959, %v953
      %v961 = vadd.f32 %v960, %v954
      %v962 = vadd.f32 %v961, %v955
      %v963 = vadd.f32 %v962, %v956
      %v964 = vrot.slane %v963, 4
      %v965 = vadd.f32 %v963, %v964
      %v966 = vrot.slane %v965, 2
      %v967 = vadd.f32 %v965, %v966
      %v968 = vrot.slane %v967, 1
      %v969 = vadd.f32 %v967, %v968
      %v970 = vsel %vm856, %v948, %v969
      %971 = vst [vmem:[%s362] sm:$0x3] %v970
      %p972 = scmp.lt.s32.totalorder %s22, 1
      %s973 = scalar_select %p972, %s22, 1
      %p974 = scmp.lt.s32.totalorder %s23, 0
      %s975 = scalar_select %p974, %s23, 0
      %s976 = smul.addr %s973, 8
      %s977 = sadd.s32 %s975, %s976
      %s978 = smul.addr %s977, 4
      %s979 = scalar_lea.vmem %s3, %s978
      %p980 = scmp.lt.s32.totalorder %s22, 1
      %s981 = scalar_select %p980, %s22, 1
      %p982 = scmp.lt.s32.totalorder %s23, 0
      %s983 = scalar_select %p982, %s23, 0
      %s984 = sadd.s32 %s983, %s981
      %s985 = smul.addr %s984, 2
      %s986 = scalar_lea.vmem %s4, %s985
      %p987 = scmp.lt.s32.totalorder %s22, 1
      %s988 = scalar_select %p987, %s22, 1
      %p989 = scmp.lt.s32.totalorder %s23, 0
      %s990 = scalar_select %p989, %s23, 0
      %s991 = smul.addr %s988, 8
      %s992 = sadd.s32 %s990, %s991
      %s993 = smul.addr %s992, 4
      %s994 = scalar_lea.vmem %s5, %s993
      %p995 = scmp.lt.s32.totalorder %s22, 1
      %s996 = scalar_select %p995, %s22, 1
      %p997 = scmp.lt.s32.totalorder %s23, 0
      %s998 = scalar_select %p997, %s23, 0
      %s999 = sadd.s32 %s998, %s996
      %s1000 = smul.addr %s999, 2
      %s1001 = scalar_lea.vmem %s6, %s1000
      // Predicated region
      $region33: #{basic_block_forward.3} parent=31 // pred_check
        %p1002 = pneg %p128
      $region34: #{basic_block_forward.3} parent=31 // pred_check_branch
        %1004 = sbr.rel (%p1002) target = $region36
      $region35: #{basic_block_forward.3} parent=31 // pred_region
        _
      $region36: #{basic_block_forward.3} parent=31 // pred_fallthru
        _
      // Predicated region
      $region37: #{basic_block_forward.3} parent=31 // pred_check
        %p1005 = pneg %p156
      $region38: #{basic_block_forward.3} parent=31 // pred_check_branch
        %1007 = sbr.rel (%p1005) target = $region40
      $region39: #{basic_block_forward.3} parent=31 // pred_region
        _
      $region40: #{basic_block_forward.3} parent=31 // pred_fallthru
        _
      // Predicated region
      $region41: #{basic_block_forward.3} parent=31 // pred_check
        %p1008 = pneg %p184
      $region42: #{basic_block_forward.3} parent=31 // pred_check_branch
        %1010 = sbr.rel (%p1008) target = $region44
      $region43: #{basic_block_forward.3} parent=31 // pred_region
        _
      $region44: #{basic_block_forward.3} parent=31 // pred_fallthru
        _
      // Predicated region
      $region45: #{basic_block_forward.3} parent=31 // pred_check
        %p1011 = pneg %p212
      $region46: #{basic_block_forward.3} parent=31 // pred_check_branch
        %1013 = sbr.rel (%p1011) target = $region48
      $region47: #{basic_block_forward.3} parent=31 // pred_region
        _
      $region48: #{basic_block_forward.3} parent=31 // pred_fallthru
        _
    $region32: #{basic_block_forward.3} parent=5 // pred_fallthru
      _
    %p1014 = scmp.le.s32.totalorder 2, %s13
    // Predicated region
    $region49: #{basic_block_forward.3} parent=5 // pred_check
      %p1015 = pneg %p1014
    $region50: #{basic_block_forward.3} parent=5 // pred_check_branch
      %1017 = sbr.rel (%p1015) target = $region52
    $region51: #{basic_block_forward.3} parent=5 // pred_region
      %s1018 = ssub.s32 %s13, 2
      // Predicated region
      $region53: #{basic_block_forward.3} parent=51 // pred_check
        %p1019 = pneg %p134
      $region54: #{basic_block_forward.3} parent=51 // pred_check_branch
        %1021 = sbr.rel (%p1019) target = $region56
      $region55: #{basic_block_forward.3} parent=51 // pred_region
        %p1022 = scmp.lt.s32.totalorder %s24, 1
        %s1023 = scalar_select %p1022, %s24, 1
        %p1024 = scmp.lt.s32.totalorder %s25, 0
        %s1025 = scalar_select %p1024, %s25, 0
        %s1026 = smul.addr %s1023, 8
        %s1027 = sadd.s32 %s1025, %s1026
        %s1028 = smul.addr %s1027, 4
        %s1029 = scalar_lea.vmem %s3, %s1028
      $region56: #{basic_block_forward.3} parent=51 // pred_fallthru
        _
      // Predicated region
      $region57: #{basic_block_forward.3} parent=51 // pred_check
        %p1030 = pneg %p162
      $region58: #{basic_block_forward.3} parent=51 // pred_check_branch
        %1032 = sbr.rel (%p1030) target = $region60
      $region59: #{basic_block_forward.3} parent=51 // pred_region
        %p1033 = scmp.lt.s32.totalorder %s24, 1
        %s1034 = scalar_select %p1033, %s24, 1
        %p1035 = scmp.lt.s32.totalorder %s25, 0
        %s1036 = scalar_select %p1035, %s25, 0
        %s1037 = sadd.s32 %s1036, %s1034
        %s1038 = smul.addr %s1037, 2
        %s1039 = scalar_lea.vmem %s4, %s1038
      $region60: #{basic_block_forward.3} parent=51 // pred_fallthru
        _
      // Predicated region
      $region61: #{basic_block_forward.3} parent=51 // pred_check
        %p1040 = pneg %p190
      $region62: #{basic_block_forward.3} parent=51 // pred_check_branch
        %1042 = sbr.rel (%p1040) target = $region64
      $region63: #{basic_block_forward.3} parent=51 // pred_region
        %p1043 = scmp.lt.s32.totalorder %s24, 1
        %s1044 = scalar_select %p1043, %s24, 1
        %p1045 = scmp.lt.s32.totalorder %s25, 0
        %s1046 = scalar_select %p1045, %s25, 0
        %s1047 = smul.addr %s1044, 8
        %s1048 = sadd.s32 %s1046, %s1047
        %s1049 = smul.addr %s1048, 4
        %s1050 = scalar_lea.vmem %s5, %s1049
      $region64: #{basic_block_forward.3} parent=51 // pred_fallthru
        _
      // Predicated region
      $region65: #{basic_block_forward.3} parent=51 // pred_check
        %p1051 = pneg %p218
      $region66: #{basic_block_forward.3} parent=51 // pred_check_branch
        %1053 = sbr.rel (%p1051) target = $region68
      $region67: #{basic_block_forward.3} parent=51 // pred_region
        %p1054 = scmp.lt.s32.totalorder %s24, 1
        %s1055 = scalar_select %p1054, %s24, 1
        %p1056 = scmp.lt.s32.totalorder %s25, 0
        %s1057 = scalar_select %p1056, %s25, 0
        %s1058 = sadd.s32 %s1057, %s1055
        %s1059 = smul.addr %s1058, 2
        %s1060 = scalar_lea.vmem %s6, %s1059
      $region68: #{basic_block_forward.3} parent=51 // pred_fallthru
        _
    $region52: #{basic_block_forward.3} parent=5 // pred_fallthru
      _
  $region6: #{basic_block_forward.3} parent=0 // loop_footer
    %s17 = sadd.s32 1, %s13
  $region7: #{basic_block_forward.3} parent=0 // loop_footer_branch
    %12 = sbr.rel target = $region3
  $region8: #{basic_block_forward.3} parent=0 // loop_exit
    _

// kernel: basic_block_forward.5
$region0: #{basic_block_forward.5}
  #allocation0 [shape = 'u32[]', space=smem, size = 0x4, offset = 0x4, fixed_abs, tag = 'smem constant byte address 0x4 - core index']
  #allocation1 [shape = 'u32[72,128]{1,0:T(1,128)}', space=vmem, size = 0x9000, scoped, tag = 'internal scratch']
  %s0 = inlined_call_operand.vmem [shape: bf16[2,64,128], index: 0, kind: input, shape index: {}]
  %s1 = inlined_call_operand.vmem [shape: bf16[2,64,128], index: 1, kind: input, shape index: {}]
  %s2 = inlined_call_operand.vmem [shape: f32[1,128], index: 2, kind: input, shape index: {}]
  %s3 = inlined_call_operand.vmem [shape: f32[1,128], index: 3, kind: input, shape index: {}]
  %s4 = inlined_call_operand.vmem [shape: f32[1,128], index: 4, kind: input, shape index: {}]
  %s5 = inlined_call_operand.vmem [shape: f32[1,128], index: 5, kind: input, shape index: {}]
  %s6 = inlined_call_operand.vmem [shape: f32[2,64,128], index: 6, kind: output, shape index: {}]
  %s7 = sld [smem:[#allocation0]]
  $region57: #{basic_block_forward.5} parent=0
    _
  %s9 = ssub.s32 1, %s7
  %s10 = scalar_select 0, %s9, %s7
  loop: start=0, step=1, limit=4
  $region2: #{basic_block_forward.5} parent=0 // loop_pre_header
    _
  $region3: #{basic_block_forward.5} parent=0 // loop_header
    %s12 = sphi 0, %s16
    %p13 = scmp.ge.s32.totalorder %s12, 4
    %s22 = sphi 0, %s24
    %s25 = sphi 0, %s22
    %s26 = sphi 0, %s25
    %s42 = sphi 0, %s26
    %s48 = sphi 0, %s50
    %s51 = sphi 0, %s48
    %s52 = sphi 0, %s51
    %s68 = sphi 0, %s52
    %s72 = sphi 0, %s72
    %s74 = sphi 0, %s72
    %s75 = sphi 0, %s74
    %s89 = sphi 0, %s75
    %s93 = sphi 0, %s93
    %s95 = sphi 0, %s93
    %s96 = sphi 0, %s95
    %s110 = sphi 0, %s96
    %s114 = sphi 0, %s114
    %s116 = sphi 0, %s114
    %s117 = sphi 0, %s116
    %s131 = sphi 0, %s117
    %s135 = sphi 0, %s135
    %s137 = sphi 0, %s135
    %s138 = sphi 0, %s137
    %s152 = sphi 0, %s138
    %s158 = sphi 0, %s160
    %s161 = sphi 0, %s158
    %s162 = sphi 0, %s161
    %s178 = sphi 0, %s162
  $region4: #{basic_block_forward.5} parent=0 // loop_header_branch
    %15 = sbr.rel (%p13) target = $region8
  $region5: #{basic_block_forward.5} parent=0 // loop_body
    %s17 = ssub.s32 %s12, 1
    %s18 = ssub.s32 %s12, 2
    %s19 = sadd.s32 %s12, 1
    %s20 = ssub.s32 %s12, %s19
    %p21 = scmp.eq.s32.totalorder %s20, 0
    %s23 = sadd.s32 %s22, 1
    %s24 = scalar_select %p21, %s22, %s23
    %p27 = pneg %p21
    %p28 = scmp.eq.s32.totalorder %s12, 1
    %p29 = por %p27, %p28
    %p30 = scmp.ne.s32.totalorder %s22, %s25
    %p31 = scmp.eq.s32.totalorder %s12, 0
    %p32 = por %p30, %p31
    %p33 = scmp.ne.s32.totalorder %s22, %s25
    %p34 = scmp.eq.s32.totalorder %s17, 1
    %p35 = por %p33, %p34
    %p36 = scmp.ne.s32.totalorder %s25, %s26
    %p37 = scmp.eq.s32.totalorder %s17, 0
    %p38 = por %p36, %p37
    %p39 = scmp.ne.s32.totalorder %s25, %s26
    %p40 = scmp.eq.s32.totalorder %s18, 1
    %p41 = por %p39, %p40
    %p43 = scmp.ne.s32.totalorder %s26, %s42
    %p44 = scmp.eq.s32.totalorder %s18, 0
    %p45 = por %p43, %p44
    %s46 = ssub.s32 %s12, %s19
    %p47 = scmp.eq.s32.totalorder %s46, 0
    %s49 = sadd.s32 %s48, 1
    %s50 = scalar_select %p47, %s48, %s49
    %p53 = pneg %p47
    %p54 = scmp.eq.s32.totalorder %s12, 1
    %p55 = por %p53, %p54
    %p56 = scmp.ne.s32.totalorder %s48, %s51
    %p57 = scmp.eq.s32.totalorder %s12, 0
    %p58 = por %p56, %p57
    %p59 = scmp.ne.s32.totalorder %s48, %s51
    %p60 = scmp.eq.s32.totalorder %s17, 1
    %p61 = por %p59, %p60
    %p62 = scmp.ne.s32.totalorder %s51, %s52
    %p63 = scmp.eq.s32.totalorder %s17, 0
    %p64 = por %p62, %p63
    %p65 = scmp.ne.s32.totalorder %s51, %s52
    %p66 = scmp.eq.s32.totalorder %s18, 1
    %p67 = por %p65, %p66
    %p69 = scmp.ne.s32.totalorder %s52, %s68
    %p70 = scmp.eq.s32.totalorder %s18, 0
    %p71 = por %p69, %p70
    %s73 = sadd.s32 %s72, 1
    %p76 = scmp.eq.s32.totalorder %s12, 1
    %p77 = scmp.ne.s32.totalorder %s72, %s74
    %p78 = scmp.eq.s32.totalorder %s12, 0
    %p79 = por %p77, %p78
    %p80 = scmp.ne.s32.totalorder %s72, %s74
    %p81 = scmp.eq.s32.totalorder %s17, 1
    %p82 = por %p80, %p81
    %p83 = scmp.ne.s32.totalorder %s74, %s75
    %p84 = scmp.eq.s32.totalorder %s17, 0
    %p85 = por %p83, %p84
    %p86 = scmp.ne.s32.totalorder %s74, %s75
    %p87 = scmp.eq.s32.totalorder %s18, 1
    %p88 = por %p86, %p87
    %p90 = scmp.ne.s32.totalorder %s75, %s89
    %p91 = scmp.eq.s32.totalorder %s18, 0
    %p92 = por %p90, %p91
    %s94 = sadd.s32 %s93, 1
    %p97 = scmp.eq.s32.totalorder %s12, 1
    %p98 = scmp.ne.s32.totalorder %s93, %s95
    %p99 = scmp.eq.s32.totalorder %s12, 0
    %p100 = por %p98, %p99
    %p101 = scmp.ne.s32.totalorder %s93, %s95
    %p102 = scmp.eq.s32.totalorder %s17, 1
    %p103 = por %p101, %p102
    %p104 = scmp.ne.s32.totalorder %s95, %s96
    %p105 = scmp.eq.s32.totalorder %s17, 0
    %p106 = por %p104, %p105
    %p107 = scmp.ne.s32.totalorder %s95, %s96
    %p108 = scmp.eq.s32.totalorder %s18, 1
    %p109 = por %p107, %p108
    %p111 = scmp.ne.s32.totalorder %s96, %s110
    %p112 = scmp.eq.s32.totalorder %s18, 0
    %p113 = por %p111, %p112
    %s115 = sadd.s32 %s114, 1
    %p118 = scmp.eq.s32.totalorder %s12, 1
    %p119 = scmp.ne.s32.totalorder %s114, %s116
    %p120 = scmp.eq.s32.totalorder %s12, 0
    %p121 = por %p119, %p120
    %p122 = scmp.ne.s32.totalorder %s114, %s116
    %p123 = scmp.eq.s32.totalorder %s17, 1
    %p124 = por %p122, %p123
    %p125 = scmp.ne.s32.totalorder %s116, %s117
    %p126 = scmp.eq.s32.totalorder %s17, 0
    %p127 = por %p125, %p126
    %p128 = scmp.ne.s32.totalorder %s116, %s117
    %p129 = scmp.eq.s32.totalorder %s18, 1
    %p130 = por %p128, %p129
    %p132 = scmp.ne.s32.totalorder %s117, %s131
    %p133 = scmp.eq.s32.totalorder %s18, 0
    %p134 = por %p132, %p133
    %s136 = sadd.s32 %s135, 1
    %p139 = scmp.eq.s32.totalorder %s12, 1
    %p140 = scmp.ne.s32.totalorder %s135, %s137
    %p141 = scmp.eq.s32.totalorder %s12, 0
    %p142 = por %p140, %p141
    %p143 = scmp.ne.s32.totalorder %s135, %s137
    %p144 = scmp.eq.s32.totalorder %s17, 1
    %p145 = por %p143, %p144
    %p146 = scmp.ne.s32.totalorder %s137, %s138
    %p147 = scmp.eq.s32.totalorder %s17, 0
    %p148 = por %p146, %p147
    %p149 = scmp.ne.s32.totalorder %s137, %s138
    %p150 = scmp.eq.s32.totalorder %s18, 1
    %p151 = por %p149, %p150
    %p153 = scmp.ne.s32.totalorder %s138, %s152
    %p154 = scmp.eq.s32.totalorder %s18, 0
    %p155 = por %p153, %p154
    %s156 = ssub.s32 %s12, %s19
    %p157 = scmp.eq.s32.totalorder %s156, 0
    %s159 = sadd.s32 %s158, 1
    %s160 = scalar_select %p157, %s158, %s159
    %p163 = pneg %p157
    %p164 = scmp.eq.s32.totalorder %s12, 1
    %p165 = por %p163, %p164
    %p166 = scmp.ne.s32.totalorder %s158, %s161
    %p167 = scmp.eq.s32.totalorder %s12, 0
    %p168 = por %p166, %p167
    %p169 = scmp.ne.s32.totalorder %s158, %s161
    %p170 = scmp.eq.s32.totalorder %s17, 1
    %p171 = por %p169, %p170
    %p172 = scmp.ne.s32.totalorder %s161, %s162
    %p173 = scmp.eq.s32.totalorder %s17, 0
    %p174 = por %p172, %p173
    %p175 = scmp.ne.s32.totalorder %s161, %s162
    %p176 = scmp.eq.s32.totalorder %s18, 1
    %p177 = por %p175, %p176
    %p179 = scmp.ne.s32.totalorder %s162, %s178
    %p180 = scmp.eq.s32.totalorder %s18, 0
    %p181 = por %p179, %p180
    %p182 = scmp.le.s32.totalorder 1, %s12
    %p183 = scmp.lt.s32.totalorder %s12, 3
    %p184 = pnand %p182, %p183
    %p185 = pneg %p184
    // Predicated region
    $region9: #{basic_block_forward.5} parent=5 // pred_check
      _
    $region10: #{basic_block_forward.5} parent=5 // pred_check_branch
      %187 = sbr.rel (%p184) target = $region12
    $region11: #{basic_block_forward.5} parent=5 // pred_region
      %s188 = ssub.s32 %s12, 1
      // Predicated region
      $region13: #{basic_block_forward.5} parent=11 // pred_check
        %p189 = pneg %p85
      $region14: #{basic_block_forward.5} parent=11 // pred_check_branch
        %191 = sbr.rel (%p189) target = $region16
      $region15: #{basic_block_forward.5} parent=11 // pred_region
        _
      $region16: #{basic_block_forward.5} parent=11 // pred_fallthru
        _
      // Predicated region
      $region17: #{basic_block_forward.5} parent=11 // pred_check
        %p192 = pneg %p106
      $region18: #{basic_block_forward.5} parent=11 // pred_check_branch
        %194 = sbr.rel (%p192) target = $region20
      $region19: #{basic_block_forward.5} parent=11 // pred_region
        _
      $region20: #{basic_block_forward.5} parent=11 // pred_fallthru
        _
      // Predicated region
      $region21: #{basic_block_forward.5} parent=11 // pred_check
        %p195 = pneg %p127
      $region22: #{basic_block_forward.5} parent=11 // pred_check_branch
        %197 = sbr.rel (%p195) target = $region24
      $region23: #{basic_block_forward.5} parent=11 // pred_region
        _
      $region24: #{basic_block_forward.5} parent=11 // pred_fallthru
        _
      // Predicated region
      $region25: #{basic_block_forward.5} parent=11 // pred_check
        %p198 = pneg %p148
      $region26: #{basic_block_forward.5} parent=11 // pred_check_branch
        %200 = sbr.rel (%p198) target = $region28
      $region27: #{basic_block_forward.5} parent=11 // pred_region
        _
      $region28: #{basic_block_forward.5} parent=11 // pred_fallthru
        _
    $region12: #{basic_block_forward.5} parent=5 // pred_fallthru
      _
    %p201 = scmp.lt.s32.totalorder %s12, 2
    // Predicated region
    $region29: #{basic_block_forward.5} parent=5 // pred_check
      %p202 = pneg %p201
    $region30: #{basic_block_forward.5} parent=5 // pred_check_branch
      %204 = sbr.rel (%p202) target = $region32
    $region31: #{basic_block_forward.5} parent=5 // pred_region
      // Predicated region
      $region33: #{basic_block_forward.5} parent=31 // pred_check
        %p205 = pneg %p32
      $region34: #{basic_block_forward.5} parent=31 // pred_check_branch
        %207 = sbr.rel (%p205) target = $region36
      $region35: #{basic_block_forward.5} parent=31 // pred_region
        %p208 = scmp.lt.s32.totalorder %s12, 1
        %s209 = scalar_select %p208, %s12, 1
        %s210 = smul.addr %s209, 8
        %s211 = smul.addr %s210, 4
        %s212 = scalar_lea.vmem %s0, %s211
      $region36: #{basic_block_forward.5} parent=31 // pred_fallthru
        _
      // Predicated region
      $region37: #{basic_block_forward.5} parent=31 // pred_check
        %p213 = pneg %p58
      $region38: #{basic_block_forward.5} parent=31 // pred_check_branch
        %215 = sbr.rel (%p213) target = $region40
      $region39: #{basic_block_forward.5} parent=31 // pred_region
        %p216 = scmp.lt.s32.totalorder %s12, 1
        %s217 = scalar_select %p216, %s12, 1
        %s218 = smul.addr %s217, 8
        %s219 = smul.addr %s218, 4
        %s220 = scalar_lea.vmem %s1, %s219
      $region40: #{basic_block_forward.5} parent=31 // pred_fallthru
        _
    $region32: #{basic_block_forward.5} parent=5 // pred_fallthru
      _
    %p221 = scmp.le.s32.totalorder 1, %s12
    %p222 = scmp.lt.s32.totalorder %s12, 3
    %p223 = pnand %p221, %p222
    %p224 = pneg %p223
    // Predicated region
    $region41: #{basic_block_forward.5} parent=5 // pred_check
      _
    $region42: #{basic_block_forward.5} parent=5 // pred_check_branch
      %226 = sbr.rel (%p223) target = $region44
    $region43: #{basic_block_forward.5} parent=5 // pred_region
      %s227 = ssub.s32 %s12, 1
      %p228 = scmp.lt.s32.totalorder %s17, 1
      %s229 = scalar_select %p228, %s17, 1
      %s230 = smul.addr %s229, 8
      %s231 = smul.addr %s230, 4
      %s232 = scalar_lea.vmem %s0, %s231
      %p233 = pneg %p38
      %p234 = pneg %p35
      %p235 = scmp.lt.s32.totalorder %s17, 1
      %s236 = scalar_select %p235, %s17, 1
      %s237 = smul.addr %s236, 8
      %s238 = smul.addr %s237, 4
      %s239 = scalar_lea.vmem %s1, %s238
      %p240 = pneg %p64
      %p241 = pneg %p61
      %p242 = pneg %p85
      %p243 = pneg %p82
      %p244 = pneg %p106
      %p245 = pneg %p103
      %p246 = pneg %p127
      %p247 = pneg %p124
      %p248 = pneg %p148
      %p249 = pneg %p145
      %p250 = pneg %p174
      %p251 = pneg %p171
      %p252 = scmp.lt.s32.totalorder %s17, 1
      %s253 = scalar_select %p252, %s17, 1
      %s254 = smul.addr %s253, 8
      %s255 = smul.addr %s254, 8
      %s256 = scalar_lea.vmem %s6, %s255
      %p257 = scmp.lt.s32.totalorder %s17, 1
      %s258 = scalar_select %p257, %s17, 1
      %s259 = smul.addr %s258, 8
      %s260 = smul.addr %s259, 4
      %s261 = scalar_lea.vmem %s0, %s260
      %p262 = scmp.lt.s32.totalorder %s17, 1
      %s263 = scalar_select %p262, %s17, 1
      %s264 = smul.addr %s263, 8
      %s265 = smul.addr %s264, 4
      %s266 = scalar_lea.vmem %s1, %s265
      %p267 = scmp.lt.s32.totalorder %s17, 1
      %s268 = scalar_select %p267, %s17, 1
      %s269 = smul.addr %s268, 8
      %s270 = smul.addr %s269, 8
      %s271 = scalar_lea.vmem %s6, %s270
      %v272 = vld [vmem:[%s261] sm:$0xf]
      %v273 = vld [vmem:[%s261 + $0x4] sm:$0xf]
      %v274 = vld [vmem:[%s261 + $0x8] sm:$0xf]
      %v275 = vld [vmem:[%s261 + $0xc] sm:$0xf]
      %v276 = vld [vmem:[%s261 + $0x10] sm:$0xf]
      %v277 = vld [vmem:[%s261 + $0x14] sm:$0xf]
      %v278 = vld [vmem:[%s261 + $0x18] sm:$0xf]
      %v279 = vld [vmem:[%s261 + $0x1c] sm:$0xf]
      %v280 = vunpack.c.l.bf16 %v272
      %v281 = vunpack.c.l.bf16 %v273
      %v282 = vunpack.c.l.bf16 %v274
      %v283 = vunpack.c.l.bf16 %v275
      %v284 = vunpack.c.l.bf16 %v276
      %v285 = vunpack.c.l.bf16 %v277
      %v286 = vunpack.c.l.bf16 %v278
      %v287 = vunpack.c.l.bf16 %v279
      %v288 = vld [vmem:[%s2] sm:$0x1]
      %v290 = vperm.slane %v288, 0
      %v292 = vmul.f32 %v280, %v290
      %v293 = vmul.f32 %v281, %v290
      %v294 = vmul.f32 %v282, %v290
      %v295 = vmul.f32 %v283, %v290
      %v296 = vmul.f32 %v284, %v290
      %v297 = vmul.f32 %v285, %v290
      %v298 = vmul.f32 %v286, %v290
      %v299 = vmul.f32 %v287, %v290
      %v300 = vld [vmem:[%s3] sm:$0x1]
      %v302 = vperm.slane %v300, 0
      %v304 = vadd.f32 %v292, %v302
      %v305 = vadd.f32 %v293, %v302
      %v306 = vadd.f32 %v294, %v302
      %v307 = vadd.f32 %v295, %v302
      %v308 = vadd.f32 %v296, %v302
      %v309 = vadd.f32 %v297, %v302
      %v310 = vadd.f32 %v298, %v302
      %v311 = vadd.f32 %v299, %v302
      %v312 = vld [vmem:[%s266] sm:$0xf]
      %v313 = vld [vmem:[%s266 + $0x4] sm:$0xf]
      %v314 = vld [vmem:[%s266 + $0x8] sm:$0xf]
      %v315 = vld [vmem:[%s266 + $0xc] sm:$0xf]
      %v316 = vld [vmem:[%s266 + $0x10] sm:$0xf]
      %v317 = vld [vmem:[%s266 + $0x14] sm:$0xf]
      %v318 = vld [vmem:[%s266 + $0x18] sm:$0xf]
      %v319 = vld [vmem:[%s266 + $0x1c] sm:$0xf]
      %v320 = vunpack.c.l.bf16 %v312
      %v321 = vunpack.c.l.bf16 %v313
      %v322 = vunpack.c.l.bf16 %v314
      %v323 = vunpack.c.l.bf16 %v315
      %v324 = vunpack.c.l.bf16 %v316
      %v325 = vunpack.c.l.bf16 %v317
      %v326 = vunpack.c.l.bf16 %v318
      %v327 = vunpack.c.l.bf16 %v319
      %v328 = vld [vmem:[%s4] sm:$0x1]
      %v330 = vperm.slane %v328, 0
      %v332 = vmul.f32 %v320, %v330
      %v333 = vmul.f32 %v321, %v330
      %v334 = vmul.f32 %v322, %v330
      %v335 = vmul.f32 %v323, %v330
      %v336 = vmul.f32 %v324, %v330
      %v337 = vmul.f32 %v325, %v330
      %v338 = vmul.f32 %v326, %v330
      %v339 = vmul.f32 %v327, %v330
      %v340 = vld [vmem:[%s5] sm:$0x1]
      %v342 = vperm.slane %v340, 0
      %v344 = vadd.f32 %v332, %v342
      %v345 = vadd.f32 %v333, %v342
      %v346 = vadd.f32 %v334, %v342
      %v347 = vadd.f32 %v335, %v342
      %v348 = vadd.f32 %v336, %v342
      %v349 = vadd.f32 %v337, %v342
      %v350 = vadd.f32 %v338, %v342
      %v351 = vadd.f32 %v339, %v342
      %v352 = vadd.f32 %v304, %v344
      %v353 = vadd.f32 %v305, %v345
      %v354 = vadd.f32 %v306, %v346
      %v355 = vadd.f32 %v307, %v347
      %v356 = vadd.f32 %v308, %v348
      %v357 = vadd.f32 %v309, %v349
      %v358 = vadd.f32 %v310, %v350
      %v359 = vadd.f32 %v311, %v351
      %v360 = vmax.f32 %v352, 0.0
      %v361 = vmax.f32 %v353, 0.0
      %v362 = vmax.f32 %v354, 0.0
      %v363 = vmax.f32 %v355, 0.0
      %v364 = vmax.f32 %v356, 0.0
      %v365 = vmax.f32 %v357, 0.0
      %v366 = vmax.f32 %v358, 0.0
      %v367 = vmax.f32 %v359, 0.0
      %368 = vst [vmem:[%s271] sm:$0xff] %v360
      %369 = vst [vmem:[%s271 + $0x8] sm:$0xff] %v361
      %370 = vst [vmem:[%s271 + $0x10] sm:$0xff] %v362
      %371 = vst [vmem:[%s271 + $0x18] sm:$0xff] %v363
      %372 = vst [vmem:[%s271 + $0x20] sm:$0xff] %v364
      %373 = vst [vmem:[%s271 + $0x28] sm:$0xff] %v365
      %374 = vst [vmem:[%s271 + $0x30] sm:$0xff] %v366
      %375 = vst [vmem:[%s271 + $0x38] sm:$0xff] %v367
      %p376 = scmp.lt.s32.totalorder %s17, 1
      %s377 = scalar_select %p376, %s17, 1
      %s378 = smul.addr %s377, 8
      %s379 = smul.addr %s378, 8
      %s380 = scalar_lea.vmem %s6, %s379
      // Predicated region
      $region45: #{basic_block_forward.5} parent=43 // pred_check
        %p381 = pneg %p171
      $region46: #{basic_block_forward.5} parent=43 // pred_check_branch
        %383 = sbr.rel (%p381) target = $region48
      $region47: #{basic_block_forward.5} parent=43 // pred_region
        _
      $region48: #{basic_block_forward.5} parent=43 // pred_fallthru
        _
    $region44: #{basic_block_forward.5} parent=5 // pred_fallthru
      _
    %p384 = scmp.le.s32.totalorder 2, %s12
    // Predicated region
    $region49: #{basic_block_forward.5} parent=5 // pred_check
      %p385 = pneg %p384
    $region50: #{basic_block_forward.5} parent=5 // pred_check_branch
      %387 = sbr.rel (%p385) target = $region52
    $region51: #{basic_block_forward.5} parent=5 // pred_region
      %s388 = ssub.s32 %s12, 2
      // Predicated region
      $region53: #{basic_block_forward.5} parent=51 // pred_check
        %p389 = pneg %p177
      $region54: #{basic_block_forward.5} parent=51 // pred_check_branch
        %391 = sbr.rel (%p389) target = $region56
      $region55: #{basic_block_forward.5} parent=51 // pred_region
        %p392 = scmp.lt.s32.totalorder %s18, 1
        %s393 = scalar_select %p392, %s18, 1
        %s394 = smul.addr %s393, 8
        %s395 = smul.addr %s394, 8
        %s396 = scalar_lea.vmem %s6, %s395
      $region56: #{basic_block_forward.5} parent=51 // pred_fallthru
        _
    $region52: #{basic_block_forward.5} parent=5 // pred_fallthru
      _
  $region6: #{basic_block_forward.5} parent=0 // loop_footer
    %s16 = sadd.s32 1, %s12
  $region7: #{basic_block_forward.5} parent=0 // loop_footer_branch
    %11 = sbr.rel target = $region3
  $region8: #{basic_block_forward.5} parent=0 // loop_exit
    _

// kernel: basic_block_forward.4
$region0: #{basic_block_forward.4}
  #allocation0 [shape = 'u32[]', space=smem, size = 0x4, offset = 0x4, fixed_abs, tag = 'smem constant byte address 0x4 - core index']
  #allocation1 [shape = 'u32[72,128]{1,0:T(1,128)}', space=vmem, size = 0x9000, scoped, tag = 'internal scratch']
  #allocation2 [shape = 'bf16[10,10,128]{2,1,0:T(8,128)(2,1)}', space=vmem, size = 0xa000, scoped, tag = 'scratch operand']
  %s0 = inlined_call_operand.vmem [shape: bf16[2,64,128], index: 0, kind: input, shape index: {}]
  %s1 = inlined_call_operand.vmem [shape: bf16[1152,128], index: 1, kind: input, shape index: {}]
  %s2 = inlined_call_operand.vmem [shape: f32[1,128], index: 2, kind: input, shape index: {}]
  %s3 = inlined_call_operand.vmem [shape: f32[1,128], index: 3, kind: input, shape index: {}]
  %s4 = inlined_call_operand.vmem [shape: bf16[2,64,128], index: 4, kind: output, shape index: {0}]
  %s5 = inlined_call_operand.vmem [shape: f32[2,2,128], index: 5, kind: output, shape index: {1}]
  %6 = xla_tuple %s4, %s5
  %s7 = sld [smem:[#allocation0]]
  $region61: #{basic_block_forward.4} parent=0
    _
  %s9 = ssub.s32 1, %s7
  %s10 = scalar_select 0, %s9, %s7
  loop: start=0, step=1, limit=4
  $region2: #{basic_block_forward.4} parent=0 // loop_pre_header
    _
  $region3: #{basic_block_forward.4} parent=0 // loop_header
    %s12 = sphi 0, %s16
    %p13 = scmp.ge.s32.totalorder %s12, 4
    %s19 = sphi 0, %s31
    %s20 = sphi 0, %s27
    %s21 = sphi 0, %s19
    %s22 = sphi 0, %s20
    %s23 = sphi 0, %s21
    %s24 = sphi 0, %s22
    %s34 = sphi 0, %s36
    %s37 = sphi 0, %s34
    %s38 = sphi 0, %s37
    %s54 = sphi 0, %s38
    %s60 = sphi 0, %s62
    %s63 = sphi 0, %s60
    %s64 = sphi 0, %s63
    %s80 = sphi 0, %s64
    %s84 = sphi 0, %s84
    %s86 = sphi 0, %s84
    %s87 = sphi 0, %s86
    %s101 = sphi 0, %s87
    %s105 = sphi 0, %s105
    %s107 = sphi 0, %s105
    %s108 = sphi 0, %s107
    %s122 = sphi 0, %s108
    %s130 = sphi 0, %s132
    %s133 = sphi 0, %s130
    %s134 = sphi 0, %s133
    %s150 = sphi 0, %s134
    %s158 = sphi 0, %s160
    %s161 = sphi 0, %s158
    %s162 = sphi 0, %s161
    %s178 = sphi 0, %s162
  $region4: #{basic_block_forward.4} parent=0 // loop_header_branch
    %15 = sbr.rel (%p13) target = $region8
  $region5: #{basic_block_forward.4} parent=0 // loop_body
    %s17 = ssub.s32 %s12, 1
    %s18 = ssub.s32 %s12, 2
    %s25 = sadd.s32 1, %s20
    %p26 = scmp.ge.s32.totalorder %s25, 1
    %s27 = scalar_select %p26, 0, %s25
    %s28 = sadd.s32 1, %s19
    %s29 = scalar_select %p26, %s28, %s19
    %p30 = scmp.ge.s32.totalorder %s29, 2
    %s31 = scalar_select %p30, 0, %s29
    %s32 = ssub.s32 %s19, %s31
    %p33 = scmp.eq.s32.totalorder %s32, 0
    %s35 = sadd.s32 %s34, 1
    %s36 = scalar_select %p33, %s34, %s35
    %p39 = pneg %p33
    %p40 = scmp.eq.s32.totalorder %s12, 1
    %p41 = por %p39, %p40
    %p42 = scmp.ne.s32.totalorder %s34, %s37
    %p43 = scmp.eq.s32.totalorder %s12, 0
    %p44 = por %p42, %p43
    %p45 = scmp.ne.s32.totalorder %s34, %s37
    %p46 = scmp.eq.s32.totalorder %s17, 1
    %p47 = por %p45, %p46
    %p48 = scmp.ne.s32.totalorder %s37, %s38
    %p49 = scmp.eq.s32.totalorder %s17, 0
    %p50 = por %p48, %p49
    %p51 = scmp.ne.s32.totalorder %s37, %s38
    %p52 = scmp.eq.s32.totalorder %s18, 1
    %p53 = por %p51, %p52
    %p55 = scmp.ne.s32.totalorder %s38, %s54
    %p56 = scmp.eq.s32.totalorder %s18, 0
    %p57 = por %p55, %p56
    %s58 = ssub.s32 %s20, %s27
    %p59 = scmp.eq.s32.totalorder %s58, 0
    %s61 = sadd.s32 %s60, 1
    %s62 = scalar_select %p59, %s60, %s61
    %p65 = pneg %p59
    %p66 = scmp.eq.s32.totalorder %s12, 1
    %p67 = por %p65, %p66
    %p68 = scmp.ne.s32.totalorder %s60, %s63
    %p69 = scmp.eq.s32.totalorder %s12, 0
    %p70 = por %p68, %p69
    %p71 = scmp.ne.s32.totalorder %s60, %s63
    %p72 = scmp.eq.s32.totalorder %s17, 1
    %p73 = por %p71, %p72
    %p74 = scmp.ne.s32.totalorder %s63, %s64
    %p75 = scmp.eq.s32.totalorder %s17, 0
    %p76 = por %p74, %p75
    %p77 = scmp.ne.s32.totalorder %s63, %s64
    %p78 = scmp.eq.s32.totalorder %s18, 1
    %p79 = por %p77, %p78
    %p81 = scmp.ne.s32.totalorder %s64, %s80
    %p82 = scmp.eq.s32.totalorder %s18, 0
    %p83 = por %p81, %p82
    %s85 = sadd.s32 %s84, 1
    %p88 = scmp.eq.s32.totalorder %s12, 1
    %p89 = scmp.ne.s32.totalorder %s84, %s86
    %p90 = scmp.eq.s32.totalorder %s12, 0
    %p91 = por %p89, %p90
    %p92 = scmp.ne.s32.totalorder %s84, %s86
    %p93 = scmp.eq.s32.totalorder %s17, 1
    %p94 = por %p92, %p93
    %p95 = scmp.ne.s32.totalorder %s86, %s87
    %p96 = scmp.eq.s32.totalorder %s17, 0
    %p97 = por %p95, %p96
    %p98 = scmp.ne.s32.totalorder %s86, %s87
    %p99 = scmp.eq.s32.totalorder %s18, 1
    %p100 = por %p98, %p99
    %p102 = scmp.ne.s32.totalorder %s87, %s101
    %p103 = scmp.eq.s32.totalorder %s18, 0
    %p104 = por %p102, %p103
    %s106 = sadd.s32 %s105, 1
    %p109 = scmp.eq.s32.totalorder %s12, 1
    %p110 = scmp.ne.s32.totalorder %s105, %s107
    %p111 = scmp.eq.s32.totalorder %s12, 0
    %p112 = por %p110, %p111
    %p113 = scmp.ne.s32.totalorder %s105, %s107
    %p114 = scmp.eq.s32.totalorder %s17, 1
    %p115 = por %p113, %p114
    %p116 = scmp.ne.s32.totalorder %s107, %s108
    %p117 = scmp.eq.s32.totalorder %s17, 0
    %p118 = por %p116, %p117
    %p119 = scmp.ne.s32.totalorder %s107, %s108
    %p120 = scmp.eq.s32.totalorder %s18, 1
    %p121 = por %p119, %p120
    %p123 = scmp.ne.s32.totalorder %s108, %s122
    %p124 = scmp.eq.s32.totalorder %s18, 0
    %p125 = por %p123, %p124
    %s126 = ssub.s32 %s19, %s31
    %s127 = ssub.s32 %s20, %s27
    %s128 = sor.u32 %s126, %s127
    %p129 = scmp.eq.s32.totalorder %s128, 0
    %s131 = sadd.s32 %s130, 1
    %s132 = scalar_select %p129, %s130, %s131
    %p135 = pneg %p129
    %p136 = scmp.eq.s32.totalorder %s12, 1
    %p137 = por %p135, %p136
    %p138 = scmp.ne.s32.totalorder %s130, %s133
    %p139 = scmp.eq.s32.totalorder %s12, 0
    %p140 = por %p138, %p139
    %p141 = scmp.ne.s32.totalorder %s130, %s133
    %p142 = scmp.eq.s32.totalorder %s17, 1
    %p143 = por %p141, %p142
    %p144 = scmp.ne.s32.totalorder %s133, %s134
    %p145 = scmp.eq.s32.totalorder %s17, 0
    %p146 = por %p144, %p145
    %p147 = scmp.ne.s32.totalorder %s133, %s134
    %p148 = scmp.eq.s32.totalorder %s18, 1
    %p149 = por %p147, %p148
    %p151 = scmp.ne.s32.totalorder %s134, %s150
    %p152 = scmp.eq.s32.totalorder %s18, 0
    %p153 = por %p151, %p152
    %s154 = ssub.s32 %s19, %s31
    %s155 = ssub.s32 %s20, %s27
    %s156 = sor.u32 %s154, %s155
    %p157 = scmp.eq.s32.totalorder %s156, 0
    %s159 = sadd.s32 %s158, 1
    %s160 = scalar_select %p157, %s158, %s159
    %p163 = pneg %p157
    %p164 = scmp.eq.s32.totalorder %s12, 1
    %p165 = por %p163, %p164
    %p166 = scmp.ne.s32.totalorder %s158, %s161
    %p167 = scmp.eq.s32.totalorder %s12, 0
    %p168 = por %p166, %p167
    %p169 = scmp.ne.s32.totalorder %s158, %s161
    %p170 = scmp.eq.s32.totalorder %s17, 1
    %p171 = por %p169, %p170
    %p172 = scmp.ne.s32.totalorder %s161, %s162
    %p173 = scmp.eq.s32.totalorder %s17, 0
    %p174 = por %p172, %p173
    %p175 = scmp.ne.s32.totalorder %s161, %s162
    %p176 = scmp.eq.s32.totalorder %s18, 1
    %p177 = por %p175, %p176
    %p179 = scmp.ne.s32.totalorder %s162, %s178
    %p180 = scmp.eq.s32.totalorder %s18, 0
    %p181 = por %p179, %p180
    %p182 = scmp.le.s32.totalorder 1, %s12
    %p183 = scmp.lt.s32.totalorder %s12, 3
    %p184 = pnand %p182, %p183
    %p185 = pneg %p184
    // Predicated region
    $region9: #{basic_block_forward.4} parent=5 // pred_check
      _
    $region10: #{basic_block_forward.4} parent=5 // pred_check_branch
      %187 = sbr.rel (%p184) target = $region12
    $region11: #{basic_block_forward.4} parent=5 // pred_region
      %s188 = ssub.s32 %s12, 1
      // Predicated region
      $region13: #{basic_block_forward.4} parent=11 // pred_check
        %p189 = pneg %p76
      $region14: #{basic_block_forward.4} parent=11 // pred_check_branch
        %191 = sbr.rel (%p189) target = $region16
      $region15: #{basic_block_forward.4} parent=11 // pred_region
        %p192 = scmp.lt.s32.totalorder %s22, 0
        %s193 = scalar_select %p192, %s22, 0
        %s194 = smul.addr %s193, 4
        %s195 = scalar_lea.vmem %s1, %s194
      $region16: #{basic_block_forward.4} parent=11 // pred_fallthru
        _
      // Predicated region
      $region17: #{basic_block_forward.4} parent=11 // pred_check
        %p196 = pneg %p97
      $region18: #{basic_block_forward.4} parent=11 // pred_check_branch
        %198 = sbr.rel (%p196) target = $region20
      $region19: #{basic_block_forward.4} parent=11 // pred_region
        _
      $region20: #{basic_block_forward.4} parent=11 // pred_fallthru
        _
      // Predicated region
      $region21: #{basic_block_forward.4} parent=11 // pred_check
        %p199 = pneg %p118
      $region22: #{basic_block_forward.4} parent=11 // pred_check_branch
        %201 = sbr.rel (%p199) target = $region24
      $region23: #{basic_block_forward.4} parent=11 // pred_region
        _
      $region24: #{basic_block_forward.4} parent=11 // pred_fallthru
        _
    $region12: #{basic_block_forward.4} parent=5 // pred_fallthru
      _
    %p202 = scmp.lt.s32.totalorder %s12, 2
    // Predicated region
    $region25: #{basic_block_forward.4} parent=5 // pred_check
      %p203 = pneg %p202
    $region26: #{basic_block_forward.4} parent=5 // pred_check_branch
      %205 = sbr.rel (%p203) target = $region28
    $region27: #{basic_block_forward.4} parent=5 // pred_region
      // Predicated region
      $region29: #{basic_block_forward.4} parent=27 // pred_check
        %p206 = pneg %p44
      $region30: #{basic_block_forward.4} parent=27 // pred_check_branch
        %208 = sbr.rel (%p206) target = $region32
      $region31: #{basic_block_forward.4} parent=27 // pred_region
        %p209 = scmp.lt.s32.totalorder %s19, 1
        %s210 = scalar_select %p209, %s19, 1
        %s211 = smul.addr %s210, 8
        %s212 = smul.addr %s211, 4
        %s213 = scalar_lea.vmem %s0, %s212
      $region32: #{basic_block_forward.4} parent=27 // pred_fallthru
        _
    $region28: #{basic_block_forward.4} parent=5 // pred_fallthru
      _
    %p214 = scmp.le.s32.totalorder 1, %s12
    %p215 = scmp.lt.s32.totalorder %s12, 3
    %p216 = pnand %p214, %p215
    %p217 = pneg %p216
    // Predicated region
    $region33: #{basic_block_forward.4} parent=5 // pred_check
      _
    $region34: #{basic_block_forward.4} parent=5 // pred_check_branch
      %219 = sbr.rel (%p216) target = $region36
    $region35: #{basic_block_forward.4} parent=5 // pred_region
      %s220 = ssub.s32 %s12, 1
      %p221 = scmp.lt.s32.totalorder %s21, 1
      %s222 = scalar_select %p221, %s21, 1
      %s223 = smul.addr %s222, 8
      %s224 = smul.addr %s223, 4
      %s225 = scalar_lea.vmem %s0, %s224
      %p226 = pneg %p50
      %p227 = pneg %p47
      %p228 = scmp.lt.s32.totalorder %s22, 0
      %s229 = scalar_select %p228, %s22, 0
      %s230 = smul.addr %s229, 4
      %s231 = scalar_lea.vmem %s1, %s230
      %p232 = pneg %p76
      %p233 = pneg %p73
      %p234 = pneg %p97
      %p235 = pneg %p94
      %p236 = pneg %p118
      %p237 = pneg %p115
      %p238 = pneg %p146
      %p239 = pneg %p143
      %p240 = scmp.lt.s32.totalorder %s21, 1
      %s241 = scalar_select %p240, %s21, 1
      %p242 = scmp.lt.s32.totalorder %s22, 0
      %s243 = scalar_select %p242, %s22, 0
      %s244 = smul.addr %s241, 8
      %s245 = sadd.s32 %s243, %s244
      %s246 = smul.addr %s245, 4
      %s247 = scalar_lea.vmem %s4, %s246
      %p248 = pneg %p174
      %p249 = pneg %p171
      %p250 = scmp.lt.s32.totalorder %s21, 1
      %s251 = scalar_select %p250, %s21, 1
      %p252 = scmp.lt.s32.totalorder %s22, 0
      %s253 = scalar_select %p252, %s22, 0
      %s254 = sadd.s32 %s253, %s251
      %s255 = smul.addr %s254, 2
      %s256 = scalar_lea.vmem %s5, %s255
      %p257 = scmp.lt.s32.totalorder %s21, 1
      %s258 = scalar_select %p257, %s21, 1
      %s259 = smul.addr %s258, 8
      %s260 = smul.addr %s259, 4
      %s261 = scalar_lea.vmem %s0, %s260
      %p262 = scmp.lt.s32.totalorder %s22, 0
      %s263 = scalar_select %p262, %s22, 0
      %s264 = smul.addr %s263, 4
      %s265 = scalar_lea.vmem %s1, %s264
      %p266 = scmp.lt.s32.totalorder %s21, 1
      %s267 = scalar_select %p266, %s21, 1
      %p268 = scmp.lt.s32.totalorder %s22, 0
      %s269 = scalar_select %p268, %s22, 0
      %s270 = smul.addr %s267, 8
      %s271 = sadd.s32 %s269, %s270
      %s272 = smul.addr %s271, 4
      %s273 = scalar_lea.vmem %s4, %s272
      %p274 = scmp.lt.s32.totalorder %s21, 1
      %s275 = scalar_select %p274, %s21, 1
      %p276 = scmp.lt.s32.totalorder %s22, 0
      %s277 = scalar_select %p276, %s22, 0
      %s278 = sadd.s32 %s277, %s275
      %s279 = smul.addr %s278, 2
      %s280 = scalar_lea.vmem %s5, %s279
      %p282 = scmp.eq.s32.totalorder %s22, 0
      // Predicated region
      $region37: #{basic_block_forward.4} parent=35 // pred_check
        %p283 = pneg %p282
      $region38: #{basic_block_forward.4} parent=35 // pred_check_branch
        %285 = sbr.rel (%p283) target = $region40
      $region39: #{basic_block_forward.4} parent=35 // pred_region
        %286 = vst [vmem:[#allocation2] sm:$0xf] 0
        %287 = vst [vmem:[#allocation2 + $0x4] sm:$0x1] 0
        %288 = vst [vmem:[#allocation2 + $0x8] sm:$0xf] 0
        %289 = vst [vmem:[#allocation2 + $0xc] sm:$0x1] 0
        %290 = vst [vmem:[#allocation2 + $0x10] sm:$0xf] 0
        %291 = vst [vmem:[#allocation2 + $0x14] sm:$0x1] 0
        %292 = vst [vmem:[#allocation2 + $0x18] sm:$0xf] 0
        %293 = vst [vmem:[#allocation2 + $0x1c] sm:$0x1] 0
        %294 = vst [vmem:[#allocation2 + $0x20] sm:$0xf] 0
        %295 = vst [vmem:[#allocation2 + $0x24] sm:$0x1] 0
        %296 = vst [vmem:[#allocation2 + $0x28] sm:$0xf] 0
        %297 = vst [vmem:[#allocation2 + $0x2c] sm:$0x1] 0
        %298 = vst [vmem:[#allocation2 + $0x30] sm:$0xf] 0
        %299 = vst [vmem:[#allocation2 + $0x34] sm:$0x1] 0
        %300 = vst [vmem:[#allocation2 + $0x38] sm:$0xf] 0
        %301 = vst [vmem:[#allocation2 + $0x3c] sm:$0x1] 0
        %302 = vst [vmem:[#allocation2 + $0x40] sm:$0xf] 0
        %303 = vst [vmem:[#allocation2 + $0x44] sm:$0x1] 0
        %304 = vst [vmem:[#allocation2 + $0x48] sm:$0xf] 0
        %305 = vst [vmem:[#allocation2 + $0x4c] sm:$0x1] 0
        %v306 = vld [vmem:[%s261] sm:$0xf]
        %v307 = vld [vmem:[%s261 + $0x4] sm:$0xf]
        %v308 = vld [vmem:[%s261 + $0x8] sm:$0xf]
        %v309 = vld [vmem:[%s261 + $0xc] sm:$0xf]
        %v310 = vld [vmem:[%s261 + $0x10] sm:$0xf]
        %v311 = vld [vmem:[%s261 + $0x14] sm:$0xf]
        %v312 = vld [vmem:[%s261 + $0x18] sm:$0xf]
        %v313 = vld [vmem:[%s261 + $0x1c] sm:$0xf]
        %v314 = vunpack.c.l.bf16 %v306
        %v315 = vunpack.c.l.bf16 %v307
        %v316 = vunpack.c.l.bf16 %v308
        %v317 = vunpack.c.l.bf16 %v309
        %v318 = vunpack.c.l.bf16 %v310
        %v319 = vunpack.c.l.bf16 %v311
        %v320 = vunpack.c.l.bf16 %v312
        %v321 = vunpack.c.l.bf16 %v313
        %v322 = vld [vmem:[%s2] sm:$0x1]
        %v324 = vperm.slane %v322, 0
        %v326 = vmul.f32 %v314, %v324
        %v327 = vmul.f32 %v315, %v324
        %v328 = vmul.f32 %v316, %v324
        %v329 = vmul.f32 %v317, %v324
        %v330 = vmul.f32 %v318, %v324
        %v331 = vmul.f32 %v319, %v324
        %v332 = vmul.f32 %v320, %v324
        %v333 = vmul.f32 %v321, %v324
        %v334 = vld [vmem:[%s3] sm:$0x1]
        %v336 = vperm.slane %v334, 0
        %v338 = vadd.f32 %v326, %v336
        %v339 = vadd.f32 %v327, %v336
        %v340 = vadd.f32 %v328, %v336
        %v341 = vadd.f32 %v329, %v336
        %v342 = vadd.f32 %v330, %v336
        %v343 = vadd.f32 %v331, %v336
        %v344 = vadd.f32 %v332, %v336
        %v345 = vadd.f32 %v333, %v336
        %v346 = vmax.f32 %v338, 0.0
        %v347 = vmax.f32 %v339, 0.0
        %v348 = vmax.f32 %v340, 0.0
        %v349 = vmax.f32 %v341, 0.0
        %v350 = vmax.f32 %v342, 0.0
        %v351 = vmax.f32 %v343, 0.0
        %v352 = vmax.f32 %v344, 0.0
        %v353 = vmax.f32 %v345, 0.0
        %v354 = vpack.c.bf16 %v346, %v346
        %v355 = vpack.c.bf16 %v347, %v347
        %v356 = vpack.c.bf16 %v348, %v348
        %v357 = vpack.c.bf16 %v349, %v349
        %v358 = vpack.c.bf16 %v350, %v350
        %v359 = vpack.c.bf16 %v351, %v351
        %v360 = vpack.c.bf16 %v352, %v352
        %v361 = vpack.c.bf16 %v353, %v353
        %v363 = vshrl.u32 %v354, 16
        %v365 = vrot.slane %v363, 7
        %v366 = vshll.u32 %v354, 16
        %v368 = vor.u32 %v365, %v366
        %v369 = vrot.slane %v365, 4
        %v371 = vshrl.u32 %v355, 16
        %v373 = vrot.slane %v371, 7
        %v374 = vshll.u32 %v355, 16
        %v376 = vor.u32 %v373, %v374
        %v377 = vrot.slane %v373, 4
        %v379 = vshrl.u32 %v356, 16
        %v381 = vrot.slane %v379, 7
        %v382 = vshll.u32 %v356, 16
        %v384 = vor.u32 %v381, %v382
        %v385 = vrot.slane %v381, 4
        %v387 = vshrl.u32 %v357, 16
        %v389 = vrot.slane %v387, 7
        %v390 = vshll.u32 %v357, 16
        %v392 = vor.u32 %v389, %v390
        %v393 = vrot.slane %v389, 4
        %v395 = vshrl.u32 %v358, 16
        %v397 = vrot.slane %v395, 7
        %v398 = vshll.u32 %v358, 16
        %v400 = vor.u32 %v397, %v398
        %v401 = vrot.slane %v397, 4
        %v403 = vshrl.u32 %v359, 16
        %v405 = vrot.slane %v403, 7
        %v406 = vshll.u32 %v359, 16
        %v408 = vor.u32 %v405, %v406
        %v409 = vrot.slane %v405, 4
        %v411 = vshrl.u32 %v360, 16
        %v413 = vrot.slane %v411, 7
        %v414 = vshll.u32 %v360, 16
        %v416 = vor.u32 %v413, %v414
        %v417 = vrot.slane %v413, 4
        %v419 = vshrl.u32 %v361, 16
        %v421 = vrot.slane %v419, 7
        %v422 = vshll.u32 %v361, 16
        %v424 = vor.u32 %v421, %v422
        %v425 = vrot.slane %v421, 4
        %s442 = scalar_lea.vmem [#allocation2], 8
        %vm443 = vcmask 1043456
        %vm444 = vsmask.f32 7938
        %vm445 = vmand %vm443, %vm444
        %v446 = vld [vmem:[%s442] sm:$0xf]
        %v447 = vsel %vm445, %v368, %v446
        %448 = vst [vmem:[%s442] sm:$0xf] %v447
        %vm449 = vcmask 1040384
        %vm450 = vsmask.f32 256
        %vm451 = vmand %vm449, %vm450
        %v452 = vld [vmem:[%s442 + $0x4] sm:$0x1]
        %v453 = vsel %vm451, %v369, %v452
        %454 = vst [vmem:[%s442 + $0x4] sm:$0x1] %v453
        %v455 = vld [vmem:[%s442 + $0x8] sm:$0xf]
        %v456 = vsel %vm445, %v376, %v455
        %457 = vst [vmem:[%s442 + $0x8] sm:$0xf] %v456
        %v458 = vld [vmem:[%s442 + $0xc] sm:$0x1]
        %v459 = vsel %vm451, %v377, %v458
        %460 = vst [vmem:[%s442 + $0xc] sm:$0x1] %v459
        %v461 = vld [vmem:[%s442 + $0x10] sm:$0xf]
        %v462 = vsel %vm445, %v384, %v461
        %463 = vst [vmem:[%s442 + $0x10] sm:$0xf] %v462
        %v464 = vld [vmem:[%s442 + $0x14] sm:$0x1]
        %v465 = vsel %vm451, %v385, %v464
        %466 = vst [vmem:[%s442 + $0x14] sm:$0x1] %v465
        %v467 = vld [vmem:[%s442 + $0x18] sm:$0xf]
        %v468 = vsel %vm445, %v392, %v467
        %469 = vst [vmem:[%s442 + $0x18] sm:$0xf] %v468
        %v470 = vld [vmem:[%s442 + $0x1c] sm:$0x1]
        %v471 = vsel %vm451, %v393, %v470
        %472 = vst [vmem:[%s442 + $0x1c] sm:$0x1] %v471
        %v473 = vld [vmem:[%s442 + $0x20] sm:$0xf]
        %v474 = vsel %vm445, %v400, %v473
        %475 = vst [vmem:[%s442 + $0x20] sm:$0xf] %v474
        %v476 = vld [vmem:[%s442 + $0x24] sm:$0x1]
        %v477 = vsel %vm451, %v401, %v476
        %478 = vst [vmem:[%s442 + $0x24] sm:$0x1] %v477
        %v479 = vld [vmem:[%s442 + $0x28] sm:$0xf]
        %v480 = vsel %vm445, %v408, %v479
        %481 = vst [vmem:[%s442 + $0x28] sm:$0xf] %v480
        %v482 = vld [vmem:[%s442 + $0x2c] sm:$0x1]
        %v483 = vsel %vm451, %v409, %v482
        %484 = vst [vmem:[%s442 + $0x2c] sm:$0x1] %v483
        %v485 = vld [vmem:[%s442 + $0x30] sm:$0xf]
        %v486 = vsel %vm445, %v416, %v485
        %487 = vst [vmem:[%s442 + $0x30] sm:$0xf] %v486
        %v488 = vld [vmem:[%s442 + $0x34] sm:$0x1]
        %v489 = vsel %vm451, %v417, %v488
        %490 = vst [vmem:[%s442 + $0x34] sm:$0x1] %v489
        %v491 = vld [vmem:[%s442 + $0x38] sm:$0xf]
        %v492 = vsel %vm445, %v424, %v491
        %493 = vst [vmem:[%s442 + $0x38] sm:$0xf] %v492
        %v494 = vld [vmem:[%s442 + $0x3c] sm:$0x1]
        %v495 = vsel %vm451, %v425, %v494
        %496 = vst [vmem:[%s442 + $0x3c] sm:$0x1] %v495
      $region40: #{basic_block_forward.4} parent=35 // pred_fallthru
        _
      %v497 = vld [vmem:[#allocation2] sm:$0xf]
      %v498 = vld [vmem:[#allocation2 + $0x8] sm:$0xf]
      %v499 = vld [vmem:[#allocation2 + $0x10] sm:$0xf]
      %v500 = vld [vmem:[#allocation2 + $0x18] sm:$0xf]
      %v501 = vld [vmem:[#allocation2 + $0x20] sm:$0xf]
      %v502 = vld [vmem:[#allocation2 + $0x28] sm:$0xf]
      %v503 = vld [vmem:[#allocation2 + $0x30] sm:$0xf]
      %v504 = vld [vmem:[#allocation2 + $0x38] sm:$0xf]
      %v505 = vld [vmem:[#allocation2 + $0x4] sm:$0x1]
      %v506 = vld [vmem:[#allocation2 + $0xc] sm:$0x1]
      %v507 = vld [vmem:[#allocation2 + $0x14] sm:$0x1]
      %v508 = vld [vmem:[#allocation2 + $0x1c] sm:$0x1]
      %v509 = vld [vmem:[#allocation2 + $0x24] sm:$0x1]
      %v510 = vld [vmem:[#allocation2 + $0x2c] sm:$0x1]
      %v511 = vld [vmem:[#allocation2 + $0x34] sm:$0x1]
      %v512 = vld [vmem:[#allocation2 + $0x3c] sm:$0x1]
      %v513 = vld [vmem:[#allocation2] sm:$0xe]
      %v514 = vld [vmem:[#allocation2 + $0x8] sm:$0xe]
      %v515 = vld [vmem:[#allocation2 + $0x10] sm:$0xe]
      %v516 = vld [vmem:[#allocation2 + $0x18] sm:$0xe]
      %v517 = vld [vmem:[#allocation2 + $0x20] sm:$0xe]
      %v518 = vld [vmem:[#allocation2 + $0x28] sm:$0xe]
      %v519 = vld [vmem:[#allocation2 + $0x30] sm:$0xe]
      %v520 = vld [vmem:[#allocation2 + $0x38] sm:$0xe]
      %s521 = scalar_lea.vmem [#allocation2], 8
      %v522 = vld [vmem:[%s521] sm:$0xf]
      %v523 = vld [vmem:[%s521 + $0x8] sm:$0xf]
      %v524 = vld [vmem:[%s521 + $0x10] sm:$0xf]
      %v525 = vld [vmem:[%s521 + $0x18] sm:$0xf]
      %v526 = vld [vmem:[%s521 + $0x20] sm:$0xf]
      %v527 = vld [vmem:[%s521 + $0x28] sm:$0xf]
      %v528 = vld [vmem:[%s521 + $0x30] sm:$0xf]
      %v529 = vld [vmem:[%s521 + $0x38] sm:$0xf]
      %v530 = vld [vmem:[%s521 + $0x4] sm:$0x1]
      %v531 = vld [vmem:[%s521 + $0xc] sm:$0x1]
      %v532 = vld [vmem:[%s521 + $0x14] sm:$0x1]
      %v533 = vld [vmem:[%s521 + $0x1c] sm:$0x1]
      %v534 = vld [vmem:[%s521 + $0x24] sm:$0x1]
      %v535 = vld [vmem:[%s521 + $0x2c] sm:$0x1]
      %v536 = vld [vmem:[%s521 + $0x34] sm:$0x1]
      %v537 = vld [vmem:[%s521 + $0x3c] sm:$0x1]
      %v538 = vld [vmem:[%s521] sm:$0xe]
      %v539 = vld [vmem:[%s521 + $0x8] sm:$0xe]
      %v540 = vld [vmem:[%s521 + $0x10] sm:$0xe]
      %v541 = vld [vmem:[%s521 + $0x18] sm:$0xe]
      %v542 = vld [vmem:[%s521 + $0x20] sm:$0xe]
      %v543 = vld [vmem:[%s521 + $0x28] sm:$0xe]
      %v544 = vld [vmem:[%s521 + $0x30] sm:$0xe]
      %v545 = vld [vmem:[%s521 + $0x38] sm:$0xe]
      %s546 = scalar_lea.vmem [#allocation2], 16
      %v547 = vld [vmem:[%s546] sm:$0xf]
      %v548 = vld [vmem:[%s546 + $0x8] sm:$0xf]
      %v549 = vld [vmem:[%s546 + $0x10] sm:$0xf]
      %v550 = vld [vmem:[%s546 + $0x18] sm:$0xf]
      %v551 = vld [vmem:[%s546 + $0x20] sm:$0xf]
      %v552 = vld [vmem:[%s546 + $0x28] sm:$0xf]
      %v553 = vld [vmem:[%s546 + $0x30] sm:$0xf]
      %v554 = vld [vmem:[%s546 + $0x38] sm:$0xf]
      %v555 = vld [vmem:[%s546 + $0x4] sm:$0x1]
      %v556 = vld [vmem:[%s546 + $0xc] sm:$0x1]
      %v557 = vld [vmem:[%s546 + $0x14] sm:$0x1]
      %v558 = vld [vmem:[%s546 + $0x1c] sm:$0x1]
      %v559 = vld [vmem:[%s546 + $0x24] sm:$0x1]
      %v560 = vld [vmem:[%s546 + $0x2c] sm:$0x1]
      %v561 = vld [vmem:[%s546 + $0x34] sm:$0x1]
      %v562 = vld [vmem:[%s546 + $0x3c] sm:$0x1]
      %v563 = vld [vmem:[%s546] sm:$0xe]
      %v564 = vld [vmem:[%s546 + $0x8] sm:$0xe]
      %v565 = vld [vmem:[%s546 + $0x10] sm:$0xe]
      %v566 = vld [vmem:[%s546 + $0x18] sm:$0xe]
      %v567 = vld [vmem:[%s546 + $0x20] sm:$0xe]
      %v568 = vld [vmem:[%s546 + $0x28] sm:$0xe]
      %v569 = vld [vmem:[%s546 + $0x30] sm:$0xe]
      %v570 = vld [vmem:[%s546 + $0x38] sm:$0xe]
      %v587 = vunpack.c.l.b16 %v497
      %v588 = vunpack.c.l.b16 %v505
      %v589 = vunpack.c.l.b16 %v498
      %v590 = vunpack.c.l.b16 %v506
      %v591 = vunpack.c.l.b16 %v499
      %v592 = vunpack.c.l.b16 %v507
      %v593 = vunpack.c.l.b16 %v500
      %v594 = vunpack.c.l.b16 %v508
      %v595 = vunpack.c.l.b16 %v501
      %v596 = vunpack.c.l.b16 %v509
      %v597 = vunpack.c.l.b16 %v502
      %v598 = vunpack.c.l.b16 %v510
      %v599 = vunpack.c.l.b16 %v503
      %v600 = vunpack.c.l.b16 %v511
      %v601 = vunpack.c.l.b16 %v504
      %v602 = vunpack.c.l.b16 %v512
      %v603 = vpack.c.b16 %v588, %v587
      %v604 = vpack.c.b16 %v590, %v589
      %v605 = vpack.c.b16 %v592, %v591
      %v606 = vpack.c.b16 %v594, %v593
      %v607 = vpack.c.b16 %v596, %v595
      %v608 = vpack.c.b16 %v598, %v597
      %v609 = vpack.c.b16 %v600, %v599
      %v610 = vpack.c.b16 %v602, %v601
      %v612 = vshrl.u32 %v603, 16
      %v614 = vshll.u32 %v603, 16
      %v616 = vrot.slane %v614, 1
      %v617 = vor.u32 %v612, %v616
      %v619 = vshrl.u32 %v604, 16
      %v621 = vshll.u32 %v604, 16
      %v623 = vrot.slane %v621, 1
      %v624 = vor.u32 %v619, %v623
      %v626 = vshrl.u32 %v605, 16
      %v628 = vshll.u32 %v605, 16
      %v630 = vrot.slane %v628, 1
      %v631 = vor.u32 %v626, %v630
      %v633 = vshrl.u32 %v606, 16
      %v635 = vshll.u32 %v606, 16
      %v637 = vrot.slane %v635, 1
      %v638 = vor.u32 %v633, %v637
      %v640 = vshrl.u32 %v607, 16
      %v642 = vshll.u32 %v607, 16
      %v644 = vrot.slane %v642, 1
      %v645 = vor.u32 %v640, %v644
      %v647 = vshrl.u32 %v608, 16
      %v649 = vshll.u32 %v608, 16
      %v651 = vrot.slane %v649, 1
      %v652 = vor.u32 %v647, %v651
      %v654 = vshrl.u32 %v609, 16
      %v656 = vshll.u32 %v609, 16
      %v658 = vrot.slane %v656, 1
      %v659 = vor.u32 %v654, %v658
      %v661 = vshrl.u32 %v610, 16
      %v663 = vshll.u32 %v610, 16
      %v665 = vrot.slane %v663, 1
      %v666 = vor.u32 %v661, %v665
      %v675 = vunpack.c.l.b16 %v513
      %v676 = vunpack.c.l.b16 %v514
      %v677 = vunpack.c.l.b16 %v515
      %v678 = vunpack.c.l.b16 %v516
      %v679 = vunpack.c.l.b16 %v517
      %v680 = vunpack.c.l.b16 %v518
      %v681 = vunpack.c.l.b16 %v519
      %v682 = vunpack.c.l.b16 %v520
      %v683 = vpack.c.b16 %v588, %v675
      %v684 = vpack.c.b16 %v590, %v676
      %v685 = vpack.c.b16 %v592, %v677
      %v686 = vpack.c.b16 %v594, %v678
      %v687 = vpack.c.b16 %v596, %v679
      %v688 = vpack.c.b16 %v598, %v680
      %v689 = vpack.c.b16 %v600, %v681
      %v690 = vpack.c.b16 %v602, %v682
      %v691 = vrot.slane %v683, 1
      %v692 = vrot.slane %v684, 1
      %v693 = vrot.slane %v685, 1
      %v694 = vrot.slane %v686, 1
      %v695 = vrot.slane %v687, 1
      %v696 = vrot.slane %v688, 1
      %v697 = vrot.slane %v689, 1
      %v698 = vrot.slane %v690, 1
      %v715 = vunpack.c.l.b16 %v522
      %v716 = vunpack.c.l.b16 %v530
      %v717 = vunpack.c.l.b16 %v523
      %v718 = vunpack.c.l.b16 %v531
      %v719 = vunpack.c.l.b16 %v524
      %v720 = vunpack.c.l.b16 %v532
      %v721 = vunpack.c.l.b16 %v525
      %v722 = vunpack.c.l.b16 %v533
      %v723 = vunpack.c.l.b16 %v526
      %v724 = vunpack.c.l.b16 %v534
      %v725 = vunpack.c.l.b16 %v527
      %v726 = vunpack.c.l.b16 %v535
      %v727 = vunpack.c.l.b16 %v528
      %v728 = vunpack.c.l.b16 %v536
      %v729 = vunpack.c.l.b16 %v529
      %v730 = vunpack.c.l.b16 %v537
      %v731 = vpack.c.b16 %v716, %v715
      %v732 = vpack.c.b16 %v718, %v717
      %v733 = vpack.c.b16 %v720, %v719
      %v734 = vpack.c.b16 %v722, %v721
      %v735 = vpack.c.b16 %v724, %v723
      %v736 = vpack.c.b16 %v726, %v725
      %v737 = vpack.c.b16 %v728, %v727
      %v738 = vpack.c.b16 %v730, %v729
      %v740 = vshrl.u32 %v731, 16
      %v742 = vshll.u32 %v731, 16
      %v744 = vrot.slane %v742, 1
      %v745 = vor.u32 %v740, %v744
      %v747 = vshrl.u32 %v732, 16
      %v749 = vshll.u32 %v732, 16
      %v751 = vrot.slane %v749, 1
      %v752 = vor.u32 %v747, %v751
      %v754 = vshrl.u32 %v733, 16
      %v756 = vshll.u32 %v733, 16
      %v758 = vrot.slane %v756, 1
      %v759 = vor.u32 %v754, %v758
      %v761 = vshrl.u32 %v734, 16
      %v763 = vshll.u32 %v734, 16
      %v765 = vrot.slane %v763, 1
      %v766 = vor.u32 %v761, %v765
      %v768 = vshrl.u32 %v735, 16
      %v770 = vshll.u32 %v735, 16
      %v772 = vrot.slane %v770, 1
      %v773 = vor.u32 %v768, %v772
      %v775 = vshrl.u32 %v736, 16
      %v777 = vshll.u32 %v736, 16
      %v779 = vrot.slane %v777, 1
      %v780 = vor.u32 %v775, %v779
      %v782 = vshrl.u32 %v737, 16
      %v784 = vshll.u32 %v737, 16
      %v786 = vrot.slane %v784, 1
      %v787 = vor.u32 %v782, %v786
      %v789 = vshrl.u32 %v738, 16
      %v791 = vshll.u32 %v738, 16
      %v793 = vrot.slane %v791, 1
      %v794 = vor.u32 %v789, %v793
      %v803 = vunpack.c.l.b16 %v538
      %v804 = vunpack.c.l.b16 %v539
      %v805 = vunpack.c.l.b16 %v540
      %v806 = vunpack.c.l.b16 %v541
      %v807 = vunpack.c.l.b16 %v542
      %v808 = vunpack.c.l.b16 %v543
      %v809 = vunpack.c.l.b16 %v544
      %v810 = vunpack.c.l.b16 %v545
      %v811 = vpack.c.b16 %v716, %v803
      %v812 = vpack.c.b16 %v718, %v804
      %v813 = vpack.c.b16 %v720, %v805
      %v814 = vpack.c.b16 %v722, %v806
      %v815 = vpack.c.b16 %v724, %v807
      %v816 = vpack.c.b16 %v726, %v808
      %v817 = vpack.c.b16 %v728, %v809
      %v818 = vpack.c.b16 %v730, %v810
      %v819 = vrot.slane %v811, 1
      %v820 = vrot.slane %v812, 1
      %v821 = vrot.slane %v813, 1
      %v822 = vrot.slane %v814, 1
      %v823 = vrot.slane %v815, 1
      %v824 = vrot.slane %v816, 1
      %v825 = vrot.slane %v817, 1
      %v826 = vrot.slane %v818, 1
      %v843 = vunpack.c.l.b16 %v547
      %v844 = vunpack.c.l.b16 %v555
      %v845 = vunpack.c.l.b16 %v548
      %v846 = vunpack.c.l.b16 %v556
      %v847 = vunpack.c.l.b16 %v549
      %v848 = vunpack.c.l.b16 %v557
      %v849 = vunpack.c.l.b16 %v550
      %v850 = vunpack.c.l.b16 %v558
      %v851 = vunpack.c.l.b16 %v551
      %v852 = vunpack.c.l.b16 %v559
      %v853 = vunpack.c.l.b16 %v552
      %v854 = vunpack.c.l.b16 %v560
      %v855 = vunpack.c.l.b16 %v553
      %v856 = vunpack.c.l.b16 %v561
      %v857 = vunpack.c.l.b16 %v554
      %v858 = vunpack.c.l.b16 %v562
      %v859 = vpack.c.b16 %v844, %v843
      %v860 = vpack.c.b16 %v846, %v845
      %v861 = vpack.c.b16 %v848, %v847
      %v862 = vpack.c.b16 %v850, %v849
      %v863 = vpack.c.b16 %v852, %v851
      %v864 = vpack.c.b16 %v854, %v853
      %v865 = vpack.c.b16 %v856, %v855
      %v866 = vpack.c.b16 %v858, %v857
      %v868 = vshrl.u32 %v859, 16
      %v870 = vshll.u32 %v859, 16
      %v872 = vrot.slane %v870, 1
      %v873 = vor.u32 %v868, %v872
      %v875 = vshrl.u32 %v860, 16
      %v877 = vshll.u32 %v860, 16
      %v879 = vrot.slane %v877, 1
      %v880 = vor.u32 %v875, %v879
      %v882 = vshrl.u32 %v861, 16
      %v884 = vshll.u32 %v861, 16
      %v886 = vrot.slane %v884, 1
      %v887 = vor.u32 %v882, %v886
      %v889 = vshrl.u32 %v862, 16
      %v891 = vshll.u32 %v862, 16
      %v893 = vrot.slane %v891, 1
      %v894 = vor.u32 %v889, %v893
      %v896 = vshrl.u32 %v863, 16
      %v898 = vshll.u32 %v863, 16
      %v900 = vrot.slane %v898, 1
      %v901 = vor.u32 %v896, %v900
      %v903 = vshrl.u32 %v864, 16
      %v905 = vshll.u32 %v864, 16
      %v907 = vrot.slane %v905, 1
      %v908 = vor.u32 %v903, %v907
      %v910 = vshrl.u32 %v865, 16
      %v912 = vshll.u32 %v865, 16
      %v914 = vrot.slane %v912, 1
      %v915 = vor.u32 %v910, %v914
      %v917 = vshrl.u32 %v866, 16
      %v919 = vshll.u32 %v866, 16
      %v921 = vrot.slane %v919, 1
      %v922 = vor.u32 %v917, %v921
      %v931 = vunpack.c.l.b16 %v563
      %v932 = vunpack.c.l.b16 %v564
      %v933 = vunpack.c.l.b16 %v565
      %v934 = vunpack.c.l.b16 %v566
      %v935 = vunpack.c.l.b16 %v567
      %v936 = vunpack.c.l.b16 %v568
      %v937 = vunpack.c.l.b16 %v569
      %v938 = vunpack.c.l.b16 %v570
      %v939 = vpack.c.b16 %v844, %v931
      %v940 = vpack.c.b16 %v846, %v932
      %v941 = vpack.c.b16 %v848, %v933
      %v942 = vpack.c.b16 %v850, %v934
      %v943 = vpack.c.b16 %v852, %v935
      %v944 = vpack.c.b16 %v854, %v936
      %v945 = vpack.c.b16 %v856, %v937
      %v946 = vpack.c.b16 %v858, %v938
      %v947 = vrot.slane %v939, 1
      %v948 = vrot.slane %v940, 1
      %v949 = vrot.slane %v941, 1
      %v950 = vrot.slane %v942, 1
      %v951 = vrot.slane %v943, 1
      %v952 = vrot.slane %v944, 1
      %v953 = vrot.slane %v945, 1
      %v954 = vrot.slane %v946, 1
      %v955 = vunpack.c.l.b16 %v617
      %v956 = vunpack.c.l.b16 %v691
      %v957 = vunpack.c.l.b16 %v745
      %v958 = vunpack.c.l.b16 %v819
      %v959 = vunpack.c.l.b16 %v873
      %v960 = vunpack.c.l.b16 %v947
      %v961 = vunpack.c.l.b16 %v624
      %v962 = vunpack.c.l.b16 %v692
      %v963 = vunpack.c.l.b16 %v752
      %v964 = vunpack.c.l.b16 %v820
      %v965 = vunpack.c.l.b16 %v880
      %v966 = vunpack.c.l.b16 %v948
      %v967 = vunpack.c.l.b16 %v631
      %v968 = vunpack.c.l.b16 %v693
      %v969 = vunpack.c.l.b16 %v759
      %v970 = vunpack.c.l.b16 %v821
      %v971 = vunpack.c.l.b16 %v887
      %v972 = vunpack.c.l.b16 %v949
      %v973 = vunpack.c.l.b16 %v638
      %v974 = vunpack.c.l.b16 %v694
      %v975 = vunpack.c.l.b16 %v766
      %v976 = vunpack.c.l.b16 %v822
      %v977 = vunpack.c.l.b16 %v894
      %v978 = vunpack.c.l.b16 %v950
      %v979 = vunpack.c.l.b16 %v645
      %v980 = vunpack.c.l.b16 %v695
      %v981 = vunpack.c.l.b16 %v773
      %v982 = vunpack.c.l.b16 %v823
      %v983 = vunpack.c.l.b16 %v901
      %v984 = vunpack.c.l.b16 %v951
      %v985 = vunpack.c.l.b16 %v652
      %v986 = vunpack.c.l.b16 %v696
      %v987 = vunpack.c.l.b16 %v780
      %v988 = vunpack.c.l.b16 %v824
      %v989 = vunpack.c.l.b16 %v908
      %v990 = vunpack.c.l.b16 %v952
      %v991 = vunpack.c.l.b16 %v659
      %v992 = vunpack.c.l.b16 %v697
      %v993 = vunpack.c.l.b16 %v787
      %v994 = vunpack.c.l.b16 %v825
      %v995 = vunpack.c.l.b16 %v915
      %v996 = vunpack.c.l.b16 %v953
      %v997 = vunpack.c.l.b16 %v666
      %v998 = vunpack.c.l.b16 %v698
      %v999 = vunpack.c.l.b16 %v794
      %v1000 = vunpack.c.l.b16 %v826
      %v1001 = vunpack.c.l.b16 %v922
      %v1002 = vunpack.c.l.b16 %v954
      %v1003 = vld [vmem:[%s265] sm:$0xf]
      %v1004 = vld [vmem:[%s265 + $0x4] sm:$0xf]
      %v1005 = vld [vmem:[%s265 + $0x8] sm:$0xf]
      %v1006 = vld [vmem:[%s265 + $0xc] sm:$0xf]
      %v1007 = vld [vmem:[%s265 + $0x10] sm:$0xf]
      %v1008 = vld [vmem:[%s265 + $0x14] sm:$0xf]
      %v1009 = vld [vmem:[%s265 + $0x18] sm:$0xf]
      %v1010 = vld [vmem:[%s265 + $0x1c] sm:$0xf]
      %v1011 = vld [vmem:[%s265 + $0x20] sm:$0xf]
      %v1012 = vld [vmem:[%s265 + $0x24] sm:$0xf]
      %v1013 = vld [vmem:[%s265 + $0x28] sm:$0xf]
      %v1014 = vld [vmem:[%s265 + $0x2c] sm:$0xf]
      %v1015 = vld [vmem:[%s265 + $0x30] sm:$0xf]
      %v1016 = vld [vmem:[%s265 + $0x34] sm:$0xf]
      %v1017 = vld [vmem:[%s265 + $0x38] sm:$0xf]
      %v1018 = vld [vmem:[%s265 + $0x3c] sm:$0xf]
      %v1019 = vld [vmem:[%s265 + $0x40] sm:$0xf]
      %v1020 = vld [vmem:[%s265 + $0x44] sm:$0xf]
      %v1021 = vld [vmem:[%s265 + $0x48] sm:$0xf]
      %v1022 = vld [vmem:[%s265 + $0x4c] sm:$0xf]
      %v1023 = vld [vmem:[%s265 + $0x50] sm:$0xf]
      %v1024 = vld [vmem:[%s265 + $0x54] sm:$0xf]
      %v1025 = vld [vmem:[%s265 + $0x58] sm:$0xf]
      %v1026 = vld [vmem:[%s265 + $0x5c] sm:$0xf]
      %v1027 = vld [vmem:[%s265 + $0x60] sm:$0xf]
      %v1028 = vld [vmem:[%s265 + $0x64] sm:$0xf]
      %v1029 = vld [vmem:[%s265 + $0x68] sm:$0xf]
      %v1030 = vld [vmem:[%s265 + $0x6c] sm:$0xf]
      %v1031 = vld [vmem:[%s265 + $0x70] sm:$0xf]
      %v1032 = vld [vmem:[%s265 + $0x74] sm:$0xf]
      %v1033 = vld [vmem:[%s265 + $0x78] sm:$0xf]
      %v1034 = vld [vmem:[%s265 + $0x7c] sm:$0xf]
      %v1035 = vld [vmem:[%s265 + $0x80] sm:$0xf]
      %v1036 = vld [vmem:[%s265 + $0x84] sm:$0xf]
      %v1037 = vld [vmem:[%s265 + $0x88] sm:$0xf]
      %v1038 = vld [vmem:[%s265 + $0x8c] sm:$0xf]
      %v1039 = vld [vmem:[%s265 + $0x90] sm:$0xf]
      %v1040 = vld [vmem:[%s265 + $0x94] sm:$0xf]
      %v1041 = vld [vmem:[%s265 + $0x98] sm:$0xf]
      %v1042 = vld [vmem:[%s265 + $0x9c] sm:$0xf]
      %v1043 = vld [vmem:[%s265 + $0xa0] sm:$0xf]
      %v1044 = vld [vmem:[%s265 + $0xa4] sm:$0xf]
      %v1045 = vld [vmem:[%s265 + $0xa8] sm:$0xf]
      %v1046 = vld [vmem:[%s265 + $0xac] sm:$0xf]
      %v1047 = vld [vmem:[%s265 + $0xb0] sm:$0xf]
      %v1048 = vld [vmem:[%s265 + $0xb4] sm:$0xf]
      %v1049 = vld [vmem:[%s265 + $0xb8] sm:$0xf]
      %v1050 = vld [vmem:[%s265 + $0xbc] sm:$0xf]
      %v1051 = vld [vmem:[%s265 + $0xc0] sm:$0xf]
      %v1052 = vld [vmem:[%s265 + $0xc4] sm:$0xf]
      %v1053 = vld [vmem:[%s265 + $0xc8] sm:$0xf]
      %v1054 = vld [vmem:[%s265 + $0xcc] sm:$0xf]
      %v1055 = vld [vmem:[%s265 + $0xd0] sm:$0xf]
      %v1056 = vld [vmem:[%s265 + $0xd4] sm:$0xf]
      %v1057 = vld [vmem:[%s265 + $0xd8] sm:$0xf]
      %v1058 = vld [vmem:[%s265 + $0xdc] sm:$0xf]
      %v1059 = vld [vmem:[%s265 + $0xe0] sm:$0xf]
      %v1060 = vld [vmem:[%s265 + $0xe4] sm:$0xf]
      %v1061 = vld [vmem:[%s265 + $0xe8] sm:$0xf]
      %v1062 = vld [vmem:[%s265 + $0xec] sm:$0xf]
      %v1063 = vld [vmem:[%s265 + $0xf0] sm:$0xf]
      %v1064 = vld [vmem:[%s265 + $0xf4] sm:$0xf]
      %v1065 = vld [vmem:[%s265 + $0xf8] sm:$0xf]
      %v1066 = vld [vmem:[%s265 + $0xfc] sm:$0xf]
      %v1067 = vld [vmem:[%s265 + $0x100] sm:$0xf]
      %v1068 = vld [vmem:[%s265 + $0x104] sm:$0xf]
      %v1069 = vld [vmem:[%s265 + $0x108] sm:$0xf]
      %v1070 = vld [vmem:[%s265 + $0x10c] sm:$0xf]
      %v1071 = vld [vmem:[%s265 + $0x110] sm:$0xf]
      %v1072 = vld [vmem:[%s265 + $0x114] sm:$0xf]
      %v1073 = vld [vmem:[%s265 + $0x118] sm:$0xf]
      %v1074 = vld [vmem:[%s265 + $0x11c] sm:$0xf]
      %v1075 = vld [vmem:[%s265 + $0x120] sm:$0xf]
      %v1076 = vld [vmem:[%s265 + $0x124] sm:$0xf]
      %v1077 = vld [vmem:[%s265 + $0x128] sm:$0xf]
      %v1078 = vld [vmem:[%s265 + $0x12c] sm:$0xf]
      %v1079 = vld [vmem:[%s265 + $0x130] sm:$0xf]
      %v1080 = vld [vmem:[%s265 + $0x134] sm:$0xf]
      %v1081 = vld [vmem:[%s265 + $0x138] sm:$0xf]
      %v1082 = vld [vmem:[%s265 + $0x13c] sm:$0xf]
      %v1083 = vld [vmem:[%s265 + $0x140] sm:$0xf]
      %v1084 = vld [vmem:[%s265 + $0x144] sm:$0xf]
      %v1085 = vld [vmem:[%s265 + $0x148] sm:$0xf]
      %v1086 = vld [vmem:[%s265 + $0x14c] sm:$0xf]
      %v1087 = vld [vmem:[%s265 + $0x150] sm:$0xf]
      %v1088 = vld [vmem:[%s265 + $0x154] sm:$0xf]
      %v1089 = vld [vmem:[%s265 + $0x158] sm:$0xf]
      %v1090 = vld [vmem:[%s265 + $0x15c] sm:$0xf]
      %v1091 = vld [vmem:[%s265 + $0x160] sm:$0xf]
      %v1092 = vld [vmem:[%s265 + $0x164] sm:$0xf]
      %v1093 = vld [vmem:[%s265 + $0x168] sm:$0xf]
      %v1094 = vld [vmem:[%s265 + $0x16c] sm:$0xf]
      %v1095 = vld [vmem:[%s265 + $0x170] sm:$0xf]
      %v1096 = vld [vmem:[%s265 + $0x174] sm:$0xf]
      %v1097 = vld [vmem:[%s265 + $0x178] sm:$0xf]
      %v1098 = vld [vmem:[%s265 + $0x17c] sm:$0xf]
      %v1099 = vld [vmem:[%s265 + $0x180] sm:$0xf]
      %v1100 = vld [vmem:[%s265 + $0x184] sm:$0xf]
      %v1101 = vld [vmem:[%s265 + $0x188] sm:$0xf]
      %v1102 = vld [vmem:[%s265 + $0x18c] sm:$0xf]
      %v1103 = vld [vmem:[%s265 + $0x190] sm:$0xf]
      %v1104 = vld [vmem:[%s265 + $0x194] sm:$0xf]
      %v1105 = vld [vmem:[%s265 + $0x198] sm:$0xf]
      %v1106 = vld [vmem:[%s265 + $0x19c] sm:$0xf]
      %v1107 = vld [vmem:[%s265 + $0x1a0] sm:$0xf]
      %v1108 = vld [vmem:[%s265 + $0x1a4] sm:$0xf]
      %v1109 = vld [vmem:[%s265 + $0x1a8] sm:$0xf]
      %v1110 = vld [vmem:[%s265 + $0x1ac] sm:$0xf]
      %v1111 = vld [vmem:[%s265 + $0x1b0] sm:$0xf]
      %v1112 = vld [vmem:[%s265 + $0x1b4] sm:$0xf]
      %v1113 = vld [vmem:[%s265 + $0x1b8] sm:$0xf]
      %v1114 = vld [vmem:[%s265 + $0x1bc] sm:$0xf]
      %v1115 = vld [vmem:[%s265 + $0x1c0] sm:$0xf]
      %v1116 = vld [vmem:[%s265 + $0x1c4] sm:$0xf]
      %v1117 = vld [vmem:[%s265 + $0x1c8] sm:$0xf]
      %v1118 = vld [vmem:[%s265 + $0x1cc] sm:$0xf]
      %v1119 = vld [vmem:[%s265 + $0x1d0] sm:$0xf]
      %v1120 = vld [vmem:[%s265 + $0x1d4] sm:$0xf]
      %v1121 = vld [vmem:[%s265 + $0x1d8] sm:$0xf]
      %v1122 = vld [vmem:[%s265 + $0x1dc] sm:$0xf]
      %v1123 = vld [vmem:[%s265 + $0x1e0] sm:$0xf]
      %v1124 = vld [vmem:[%s265 + $0x1e4] sm:$0xf]
      %v1125 = vld [vmem:[%s265 + $0x1e8] sm:$0xf]
      %v1126 = vld [vmem:[%s265 + $0x1ec] sm:$0xf]
      %v1127 = vld [vmem:[%s265 + $0x1f0] sm:$0xf]
      %v1128 = vld [vmem:[%s265 + $0x1f4] sm:$0xf]
      %v1129 = vld [vmem:[%s265 + $0x1f8] sm:$0xf]
      %v1130 = vld [vmem:[%s265 + $0x1fc] sm:$0xf]
      %v1131 = vld [vmem:[%s265 + $0x200] sm:$0xf]
      %v1132 = vld [vmem:[%s265 + $0x204] sm:$0xf]
      %v1133 = vld [vmem:[%s265 + $0x208] sm:$0xf]
      %v1134 = vld [vmem:[%s265 + $0x20c] sm:$0xf]
      %v1135 = vld [vmem:[%s265 + $0x210] sm:$0xf]
      %v1136 = vld [vmem:[%s265 + $0x214] sm:$0xf]
      %v1137 = vld [vmem:[%s265 + $0x218] sm:$0xf]
      %v1138 = vld [vmem:[%s265 + $0x21c] sm:$0xf]
      %v1139 = vld [vmem:[%s265 + $0x220] sm:$0xf]
      %v1140 = vld [vmem:[%s265 + $0x224] sm:$0xf]
      %v1141 = vld [vmem:[%s265 + $0x228] sm:$0xf]
      %v1142 = vld [vmem:[%s265 + $0x22c] sm:$0xf]
      %v1143 = vld [vmem:[%s265 + $0x230] sm:$0xf]
      %v1144 = vld [vmem:[%s265 + $0x234] sm:$0xf]
      %v1145 = vld [vmem:[%s265 + $0x238] sm:$0xf]
      %v1146 = vld [vmem:[%s265 + $0x23c] sm:$0xf]
      %v1147 = vpack.c.b16 %v589, %v587
      %v1148 = vpack.c.b16 %v961, %v955
      %v1149 = vpack.c.b16 %v962, %v956
      %v1150 = vpack.c.b16 %v717, %v715
      %v1151 = vpack.c.b16 %v963, %v957
      %v1152 = vpack.c.b16 %v964, %v958
      %v1153 = vpack.c.b16 %v845, %v843
      %v1154 = vpack.c.b16 %v965, %v959
      %v1155 = vpack.c.b16 %v966, %v960
      %v1156 = vpack.c.b16 %v593, %v591
      %v1157 = vpack.c.b16 %v973, %v967
      %v1158 = vpack.c.b16 %v974, %v968
      %v1159 = vpack.c.b16 %v721, %v719
      %v1160 = vpack.c.b16 %v975, %v969
      %v1161 = vpack.c.b16 %v976, %v970
      %v1162 = vpack.c.b16 %v849, %v847
      %v1163 = vpack.c.b16 %v977, %v971
      %v1164 = vpack.c.b16 %v978, %v972
      %v1165 = vpack.c.b16 %v597, %v595
      %v1166 = vpack.c.b16 %v985, %v979
      %v1167 = vpack.c.b16 %v986, %v980
      %v1168 = vpack.c.b16 %v725, %v723
      %v1169 = vpack.c.b16 %v987, %v981
      %v1170 = vpack.c.b16 %v988, %v982
      %v1171 = vpack.c.b16 %v853, %v851
      %v1172 = vpack.c.b16 %v989, %v983
      %v1173 = vpack.c.b16 %v990, %v984
      %v1174 = vpack.c.b16 %v601, %v599
      %v1175 = vpack.c.b16 %v997, %v991
      %v1176 = vpack.c.b16 %v998, %v992
      %v1177 = vpack.c.b16 %v729, %v727
      %v1178 = vpack.c.b16 %v999, %v993
      %v1179 = vpack.c.b16 %v1000, %v994
      %v1180 = vpack.c.b16 %v857, %v855
      %v1181 = vpack.c.b16 %v1001, %v995
      %v1182 = vpack.c.b16 %v1002, %v996
      %v1363 = vunpack.c.l.b16 %v1003
      %v1364 = vunpack.c.l.b16 %v1004
      %v1365 = vunpack.c.l.b16 %v1005
      %v1366 = vunpack.c.l.b16 %v1006
      %v1367 = vunpack.c.l.b16 %v1007
      %v1368 = vunpack.c.l.b16 %v1008
      %v1369 = vunpack.c.l.b16 %v1009
      %v1370 = vunpack.c.l.b16 %v1010
      %v1371 = vunpack.c.l.b16 %v1011
      %v1372 = vunpack.c.l.b16 %v1012
      %v1373 = vunpack.c.l.b16 %v1013
      %v1374 = vunpack.c.l.b16 %v1014
      %v1375 = vunpack.c.l.b16 %v1015
      %v1376 = vunpack.c.l.b16 %v1016
      %v1377 = vunpack.c.l.b16 %v1017
      %v1378 = vunpack.c.l.b16 %v1018
      %v1379 = vunpack.c.l.b16 %v1019
      %v1380 = vunpack.c.l.b16 %v1020
      %v1381 = vunpack.c.l.b16 %v1021
      %v1382 = vunpack.c.l.b16 %v1022
      %v1383 = vunpack.c.l.b16 %v1023
      %v1384 = vunpack.c.l.b16 %v1024
      %v1385 = vunpack.c.l.b16 %v1025
      %v1386 = vunpack.c.l.b16 %v1026
      %v1387 = vunpack.c.l.b16 %v1027
      %v1388 = vunpack.c.l.b16 %v1028
      %v1389 = vunpack.c.l.b16 %v1029
      %v1390 = vunpack.c.l.b16 %v1030
      %v1391 = vunpack.c.l.b16 %v1031
      %v1392 = vunpack.c.l.b16 %v1032
      %v1393 = vunpack.c.l.b16 %v1033
      %v1394 = vunpack.c.l.b16 %v1034
      %v1395 = vunpack.c.l.b16 %v1035
      %v1396 = vunpack.c.l.b16 %v1036
      %v1397 = vunpack.c.l.b16 %v1037
      %v1398 = vunpack.c.l.b16 %v1038
      %v1399 = vunpack.c.l.b16 %v1039
      %v1400 = vunpack.c.l.b16 %v1040
      %v1401 = vunpack.c.l.b16 %v1041
      %v1402 = vunpack.c.l.b16 %v1042
      %v1403 = vunpack.c.l.b16 %v1043
      %v1404 = vunpack.c.l.b16 %v1044
      %v1405 = vunpack.c.l.b16 %v1045
      %v1406 = vunpack.c.l.b16 %v1046
      %v1407 = vunpack.c.l.b16 %v1047
      %v1408 = vunpack.c.l.b16 %v1048
      %v1409 = vunpack.c.l.b16 %v1049
      %v1410 = vunpack.c.l.b16 %v1050
      %v1411 = vunpack.c.l.b16 %v1051
      %v1412 = vunpack.c.l.b16 %v1052
      %v1413 = vunpack.c.l.b16 %v1053
      %v1414 = vunpack.c.l.b16 %v1054
      %v1415 = vunpack.c.l.b16 %v1055
      %v1416 = vunpack.c.l.b16 %v1056
      %v1417 = vunpack.c.l.b16 %v1057
      %v1418 = vunpack.c.l.b16 %v1058
      %v1419 = vunpack.c.l.b16 %v1059
      %v1420 = vunpack.c.l.b16 %v1060
      %v1421 = vunpack.c.l.b16 %v1061
      %v1422 = vunpack.c.l.b16 %v1062
      %v1423 = vunpack.c.l.b16 %v1063
      %v1424 = vunpack.c.l.b16 %v1064
      %v1425 = vunpack.c.l.b16 %v1065
      %v1426 = vunpack.c.l.b16 %v1066
      %v1427 = vunpack.c.l.b16 %v1067
      %v1428 = vunpack.c.l.b16 %v1068
      %v1429 = vunpack.c.l.b16 %v1069
      %v1430 = vunpack.c.l.b16 %v1070
      %v1431 = vunpack.c.l.b16 %v1071
      %v1432 = vunpack.c.l.b16 %v1072
      %v1433 = vunpack.c.l.b16 %v1073
      %v1434 = vunpack.c.l.b16 %v1074
      %v1435 = vunpack.c.l.b16 %v1075
      %v1436 = vunpack.c.l.b16 %v1076
      %v1437 = vunpack.c.l.b16 %v1077
      %v1438 = vunpack.c.l.b16 %v1078
      %v1439 = vunpack.c.l.b16 %v1079
      %v1440 = vunpack.c.l.b16 %v1080
      %v1441 = vunpack.c.l.b16 %v1081
      %v1442 = vunpack.c.l.b16 %v1082
      %v1443 = vunpack.c.l.b16 %v1083
      %v1444 = vunpack.c.l.b16 %v1084
      %v1445 = vunpack.c.l.b16 %v1085
      %v1446 = vunpack.c.l.b16 %v1086
      %v1447 = vunpack.c.l.b16 %v1087
      %v1448 = vunpack.c.l.b16 %v1088
      %v1449 = vunpack.c.l.b16 %v1089
      %v1450 = vunpack.c.l.b16 %v1090
      %v1451 = vunpack.c.l.b16 %v1091
      %v1452 = vunpack.c.l.b16 %v1092
      %v1453 = vunpack.c.l.b16 %v1093
      %v1454 = vunpack.c.l.b16 %v1094
      %v1455 = vunpack.c.l.b16 %v1095
      %v1456 = vunpack.c.l.b16 %v1096
      %v1457 = vunpack.c.l.b16 %v1097
      %v1458 = vunpack.c.l.b16 %v1098
      %v1459 = vunpack.c.l.b16 %v1099
      %v1460 = vunpack.c.l.b16 %v1100
      %v1461 = vunpack.c.l.b16 %v1101
      %v1462 = vunpack.c.l.b16 %v1102
      %v1463 = vunpack.c.l.b16 %v1103
      %v1464 = vunpack.c.l.b16 %v1104
      %v1465 = vunpack.c.l.b16 %v1105
      %v1466 = vunpack.c.l.b16 %v1106
      %v1467 = vunpack.c.l.b16 %v1107
      %v1468 = vunpack.c.l.b16 %v1108
      %v1469 = vunpack.c.l.b16 %v1109
      %v1470 = vunpack.c.l.b16 %v1110
      %v1471 = vunpack.c.l.b16 %v1111
      %v1472 = vunpack.c.l.b16 %v1112
      %v1473 = vunpack.c.l.b16 %v1113
      %v1474 = vunpack.c.l.b16 %v1114
      %v1475 = vunpack.c.l.b16 %v1115
      %v1476 = vunpack.c.l.b16 %v1116
      %v1477 = vunpack.c.l.b16 %v1117
      %v1478 = vunpack.c.l.b16 %v1118
      %v1479 = vunpack.c.l.b16 %v1119
      %v1480 = vunpack.c.l.b16 %v1120
      %v1481 = vunpack.c.l.b16 %v1121
      %v1482 = vunpack.c.l.b16 %v1122
      %v1483 = vunpack.c.l.b16 %v1123
      %v1484 = vunpack.c.l.b16 %v1124
      %v1485 = vunpack.c.l.b16 %v1125
      %v1486 = vunpack.c.l.b16 %v1126
      %v1487 = vunpack.c.l.b16 %v1127
      %v1488 = vunpack.c.l.b16 %v1128
      %v1489 = vunpack.c.l.b16 %v1129
      %v1490 = vunpack.c.l.b16 %v1130
      %v1491 = vunpack.c.l.b16 %v1131
      %v1492 = vunpack.c.l.b16 %v1132
      %v1493 = vunpack.c.l.b16 %v1133
      %v1494 = vunpack.c.l.b16 %v1134
      %v1495 = vunpack.c.l.b16 %v1135
      %v1496 = vunpack.c.l.b16 %v1136
      %v1497 = vunpack.c.l.b16 %v1137
      %v1498 = vunpack.c.l.b16 %v1138
      %v1499 = vunpack.c.l.b16 %v1139
      %v1500 = vunpack.c.l.b16 %v1140
      %v1501 = vunpack.c.l.b16 %v1141
      %v1502 = vunpack.c.l.b16 %v1142
      %v1503 = vunpack.c.l.b16 %v1143
      %v1504 = vunpack.c.l.b16 %v1144
      %v1505 = vunpack.c.l.b16 %v1145
      %v1506 = vunpack.c.l.b16 %v1146
      %v1507 = vpack.c.b16 %v1364, %v1363
      %v1508 = vpack.c.b16 %v1366, %v1365
      %v1509 = vpack.c.b16 %v1368, %v1367
      %v1510 = vpack.c.b16 %v1370, %v1369
      %v1511 = vpack.c.b16 %v1372, %v1371
      %v1512 = vpack.c.b16 %v1374, %v1373
      %v1513 = vpack.c.b16 %v1376, %v1375
      %v1514 = vpack.c.b16 %v1378, %v1377
      %v1515 = vpack.c.b16 %v1380, %v1379
      %v1516 = vpack.c.b16 %v1382, %v1381
      %v1517 = vpack.c.b16 %v1384, %v1383
      %v1518 = vpack.c.b16 %v1386, %v1385
      %v1519 = vpack.c.b16 %v1388, %v1387
      %v1520 = vpack.c.b16 %v1390, %v1389
      %v1521 = vpack.c.b16 %v1392, %v1391
      %v1522 = vpack.c.b16 %v1394, %v1393
      %v1523 = vpack.c.b16 %v1396, %v1395
      %v1524 = vpack.c.b16 %v1398, %v1397
      %v1525 = vpack.c.b16 %v1400, %v1399
      %v1526 = vpack.c.b16 %v1402, %v1401
      %v1527 = vpack.c.b16 %v1404, %v1403
      %v1528 = vpack.c.b16 %v1406, %v1405
      %v1529 = vpack.c.b16 %v1408, %v1407
      %v1530 = vpack.c.b16 %v1410, %v1409
      %v1531 = vpack.c.b16 %v1412, %v1411
      %v1532 = vpack.c.b16 %v1414, %v1413
      %v1533 = vpack.c.b16 %v1416, %v1415
      %v1534 = vpack.c.b16 %v1418, %v1417
      %v1535 = vpack.c.b16 %v1420, %v1419
      %v1536 = vpack.c.b16 %v1422, %v1421
      %v1537 = vpack.c.b16 %v1424, %v1423
      %v1538 = vpack.c.b16 %v1426, %v1425
      %v1539 = vpack.c.b16 %v1428, %v1427
      %v1540 = vpack.c.b16 %v1430, %v1429
      %v1541 = vpack.c.b16 %v1432, %v1431
      %v1542 = vpack.c.b16 %v1434, %v1433
      %v1543 = vpack.c.b16 %v1436, %v1435
      %v1544 = vpack.c.b16 %v1438, %v1437
      %v1545 = vpack.c.b16 %v1440, %v1439
      %v1546 = vpack.c.b16 %v1442, %v1441
      %v1547 = vpack.c.b16 %v1444, %v1443
      %v1548 = vpack.c.b16 %v1446, %v1445
      %v1549 = vpack.c.b16 %v1448, %v1447
      %v1550 = vpack.c.b16 %v1450, %v1449
      %v1551 = vpack.c.b16 %v1452, %v1451
      %v1552 = vpack.c.b16 %v1454, %v1453
      %v1553 = vpack.c.b16 %v1456, %v1455
      %v1554 = vpack.c.b16 %v1458, %v1457
      %v1555 = vpack.c.b16 %v1460, %v1459
      %v1556 = vpack.c.b16 %v1462, %v1461
      %v1557 = vpack.c.b16 %v1464, %v1463
      %v1558 = vpack.c.b16 %v1466, %v1465
      %v1559 = vpack.c.b16 %v1468, %v1467
      %v1560 = vpack.c.b16 %v1470, %v1469
      %v1561 = vpack.c.b16 %v1472, %v1471
      %v1562 = vpack.c.b16 %v1474, %v1473
      %v1563 = vpack.c.b16 %v1476, %v1475
      %v1564 = vpack.c.b16 %v1478, %v1477
      %v1565 = vpack.c.b16 %v1480, %v1479
      %v1566 = vpack.c.b16 %v1482, %v1481
      %v1567 = vpack.c.b16 %v1484, %v1483
      %v1568 = vpack.c.b16 %v1486, %v1485
      %v1569 = vpack.c.b16 %v1488, %v1487
      %v1570 = vpack.c.b16 %v1490, %v1489
      %v1571 = vpack.c.b16 %v1492, %v1491
      %v1572 = vpack.c.b16 %v1494, %v1493
      %v1573 = vpack.c.b16 %v1496, %v1495
      %v1574 = vpack.c.b16 %v1498, %v1497
      %v1575 = vpack.c.b16 %v1500, %v1499
      %v1576 = vpack.c.b16 %v1502, %v1501
      %v1577 = vpack.c.b16 %v1504, %v1503
      %v1578 = vpack.c.b16 %v1506, %v1505
      %1651 = vmatpush.bf16.msra.mxu0 %v1514
      %1652 = vmatpush.bf16.msra.mxu0 %v1513
      %1653 = vmatpush.bf16.msra.mxu0 %v1512
      %1654 = vmatpush.bf16.msra.mxu0 %v1511
      %1655 = vmatpush.bf16.msra.mxu0 %v1510
      %1656 = vmatpush.bf16.msra.mxu0 %v1509
      %1657 = vmatpush.bf16.msra.mxu0 %v1508
      %1658 = vmatpush.bf16.msra.mxu0 %v1507
      %1659 = vmatmul.bf16.gmra.mxu0 %v1147
      %v1660 = vpop.f32.mrf.mxu0
      %v1661 = vadd.f32 0.0, %v1660
      %v1662 = vpop.f32.mrf.mxu0
      %v1663 = vadd.f32 0.0, %v1662
      %1664 = vmatmul.bf16.gmra.mxu0 %v1156
      %v1665 = vpop.f32.mrf.mxu0
      %v1666 = vadd.f32 0.0, %v1665
      %v1667 = vpop.f32.mrf.mxu0
      %v1668 = vadd.f32 0.0, %v1667
      %1669 = vmatmul.bf16.gmra.mxu0 %v1165
      %v1670 = vpop.f32.mrf.mxu0
      %v1671 = vadd.f32 0.0, %v1670
      %v1672 = vpop.f32.mrf.mxu0
      %v1673 = vadd.f32 0.0, %v1672
      %1674 = vmatmul.bf16.gmra.mxu0 %v1174
      %v1675 = vpop.f32.mrf.mxu0
      %v1676 = vadd.f32 0.0, %v1675
      %v1677 = vpop.f32.mrf.mxu0
      %v1678 = vadd.f32 0.0, %v1677
      %1679 = vdwg.mxu0
      %1680 = vmatpush.bf16.msra.mxu0 %v1522
      %1681 = vmatpush.bf16.msra.mxu0 %v1521
      %1682 = vmatpush.bf16.msra.mxu0 %v1520
      %1683 = vmatpush.bf16.msra.mxu0 %v1519
      %1684 = vmatpush.bf16.msra.mxu0 %v1518
      %1685 = vmatpush.bf16.msra.mxu0 %v1517
      %1686 = vmatpush.bf16.msra.mxu0 %v1516
      %1687 = vmatpush.bf16.msra.mxu0 %v1515
      %1688 = vmatmul.bf16.gmra.mxu0 %v1148
      %v1689 = vpop.f32.mrf.mxu0
      %v1690 = vadd.f32 %v1661, %v1689
      %v1691 = vpop.f32.mrf.mxu0
      %v1692 = vadd.f32 %v1663, %v1691
      %1693 = vmatmul.bf16.gmra.mxu0 %v1157
      %v1694 = vpop.f32.mrf.mxu0
      %v1695 = vadd.f32 %v1666, %v1694
      %v1696 = vpop.f32.mrf.mxu0
      %v1697 = vadd.f32 %v1668, %v1696
      %1698 = vmatmul.bf16.gmra.mxu0 %v1166
      %v1699 = vpop.f32.mrf.mxu0
      %v1700 = vadd.f32 %v1671, %v1699
      %v1701 = vpop.f32.mrf.mxu0
      %v1702 = vadd.f32 %v1673, %v1701
      %1703 = vmatmul.bf16.gmra.mxu0 %v1175
      %v1704 = vpop.f32.mrf.mxu0
      %v1705 = vadd.f32 %v1676, %v1704
      %v1706 = vpop.f32.mrf.mxu0
      %v1707 = vadd.f32 %v1678, %v1706
      %1708 = vdwg.mxu0
      %1709 = vmatpush.bf16.msra.mxu0 %v1530
      %1710 = vmatpush.bf16.msra.mxu0 %v1529
      %1711 = vmatpush.bf16.msra.mxu0 %v1528
      %1712 = vmatpush.bf16.msra.mxu0 %v1527
      %1713 = vmatpush.bf16.msra.mxu0 %v1526
      %1714 = vmatpush.bf16.msra.mxu0 %v1525
      %1715 = vmatpush.bf16.msra.mxu0 %v1524
      %1716 = vmatpush.bf16.msra.mxu0 %v1523
      %1717 = vmatmul.bf16.gmra.mxu0 %v1149
      %v1718 = vpop.f32.mrf.mxu0
      %v1719 = vadd.f32 %v1690, %v1718
      %v1720 = vpop.f32.mrf.mxu0
      %v1721 = vadd.f32 %v1692, %v1720
      %1722 = vmatmul.bf16.gmra.mxu0 %v1158
      %v1723 = vpop.f32.mrf.mxu0
      %v1724 = vadd.f32 %v1695, %v1723
      %v1725 = vpop.f32.mrf.mxu0
      %v1726 = vadd.f32 %v1697, %v1725
      %1727 = vmatmul.bf16.gmra.mxu0 %v1167
      %v1728 = vpop.f32.mrf.mxu0
      %v1729 = vadd.f32 %v1700, %v1728
      %v1730 = vpop.f32.mrf.mxu0
      %v1731 = vadd.f32 %v1702, %v1730
      %1732 = vmatmul.bf16.gmra.mxu0 %v1176
      %v1733 = vpop.f32.mrf.mxu0
      %v1734 = vadd.f32 %v1705, %v1733
      %v1735 = vpop.f32.mrf.mxu0
      %v1736 = vadd.f32 %v1707, %v1735
      %1737 = vdwg.mxu0
      %1738 = vmatpush.bf16.msra.mxu0 %v1538
      %1739 = vmatpush.bf16.msra.mxu0 %v1537
      %1740 = vmatpush.bf16.msra.mxu0 %v1536
      %1741 = vmatpush.bf16.msra.mxu0 %v1535
      %1742 = vmatpush.bf16.msra.mxu0 %v1534
      %1743 = vmatpush.bf16.msra.mxu0 %v1533
      %1744 = vmatpush.bf16.msra.mxu0 %v1532
      %1745 = vmatpush.bf16.msra.mxu0 %v1531
      %1746 = vmatmul.bf16.gmra.mxu0 %v1150
      %v1747 = vpop.f32.mrf.mxu0
      %v1748 = vadd.f32 %v1719, %v1747
      %v1749 = vpop.f32.mrf.mxu0
      %v1750 = vadd.f32 %v1721, %v1749
      %1751 = vmatmul.bf16.gmra.mxu0 %v1159
      %v1752 = vpop.f32.mrf.mxu0
      %v1753 = vadd.f32 %v1724, %v1752
      %v1754 = vpop.f32.mrf.mxu0
      %v1755 = vadd.f32 %v1726, %v1754
      %1756 = vmatmul.bf16.gmra.mxu0 %v1168
      %v1757 = vpop.f32.mrf.mxu0
      %v1758 = vadd.f32 %v1729, %v1757
      %v1759 = vpop.f32.mrf.mxu0
      %v1760 = vadd.f32 %v1731, %v1759
      %1761 = vmatmul.bf16.gmra.mxu0 %v1177
      %v1762 = vpop.f32.mrf.mxu0
      %v1763 = vadd.f32 %v1734, %v1762
      %v1764 = vpop.f32.mrf.mxu0
      %v1765 = vadd.f32 %v1736, %v1764
      %1766 = vdwg.mxu0
      %1767 = vmatpush.bf16.msra.mxu0 %v1546
      %1768 = vmatpush.bf16.msra.mxu0 %v1545
      %1769 = vmatpush.bf16.msra.mxu0 %v1544
      %1770 = vmatpush.bf16.msra.mxu0 %v1543
      %1771 = vmatpush.bf16.msra.mxu0 %v1542
      %1772 = vmatpush.bf16.msra.mxu0 %v1541
      %1773 = vmatpush.bf16.msra.mxu0 %v1540
      %1774 = vmatpush.bf16.msra.mxu0 %v1539
      %1775 = vmatmul.bf16.gmra.mxu0 %v1151
      %v1776 = vpop.f32.mrf.mxu0
      %v1777 = vadd.f32 %v1748, %v1776
      %v1778 = vpop.f32.mrf.mxu0
      %v1779 = vadd.f32 %v1750, %v1778
      %1780 = vmatmul.bf16.gmra.mxu0 %v1160
      %v1781 = vpop.f32.mrf.mxu0
      %v1782 = vadd.f32 %v1753, %v1781
      %v1783 = vpop.f32.mrf.mxu0
      %v1784 = vadd.f32 %v1755, %v1783
      %1785 = vmatmul.bf16.gmra.mxu0 %v1169
      %v1786 = vpop.f32.mrf.mxu0
      %v1787 = vadd.f32 %v1758, %v1786
      %v1788 = vpop.f32.mrf.mxu0
      %v1789 = vadd.f32 %v1760, %v1788
      %1790 = vmatmul.bf16.gmra.mxu0 %v1178
      %v1791 = vpop.f32.mrf.mxu0
      %v1792 = vadd.f32 %v1763, %v1791
      %v1793 = vpop.f32.mrf.mxu0
      %v1794 = vadd.f32 %v1765, %v1793
      %1795 = vdwg.mxu0
      %1796 = vmatpush.bf16.msra.mxu0 %v1554
      %1797 = vmatpush.bf16.msra.mxu0 %v1553
      %1798 = vmatpush.bf16.msra.mxu0 %v1552
      %1799 = vmatpush.bf16.msra.mxu0 %v1551
      %1800 = vmatpush.bf16.msra.mxu0 %v1550
      %1801 = vmatpush.bf16.msra.mxu0 %v1549
      %1802 = vmatpush.bf16.msra.mxu0 %v1548
      %1803 = vmatpush.bf16.msra.mxu0 %v1547
      %1804 = vmatmul.bf16.gmra.mxu0 %v1152
      %v1805 = vpop.f32.mrf.mxu0
      %v1806 = vadd.f32 %v1777, %v1805
      %v1807 = vpop.f32.mrf.mxu0
      %v1808 = vadd.f32 %v1779, %v1807
      %1809 = vmatmul.bf16.gmra.mxu0 %v1161
      %v1810 = vpop.f32.mrf.mxu0
      %v1811 = vadd.f32 %v1782, %v1810
      %v1812 = vpop.f32.mrf.mxu0
      %v1813 = vadd.f32 %v1784, %v1812
      %1814 = vmatmul.bf16.gmra.mxu0 %v1170
      %v1815 = vpop.f32.mrf.mxu0
      %v1816 = vadd.f32 %v1787, %v1815
      %v1817 = vpop.f32.mrf.mxu0
      %v1818 = vadd.f32 %v1789, %v1817
      %1819 = vmatmul.bf16.gmra.mxu0 %v1179
      %v1820 = vpop.f32.mrf.mxu0
      %v1821 = vadd.f32 %v1792, %v1820
      %v1822 = vpop.f32.mrf.mxu0
      %v1823 = vadd.f32 %v1794, %v1822
      %1824 = vdwg.mxu0
      %1825 = vmatpush.bf16.msra.mxu0 %v1562
      %1826 = vmatpush.bf16.msra.mxu0 %v1561
      %1827 = vmatpush.bf16.msra.mxu0 %v1560
      %1828 = vmatpush.bf16.msra.mxu0 %v1559
      %1829 = vmatpush.bf16.msra.mxu0 %v1558
      %1830 = vmatpush.bf16.msra.mxu0 %v1557
      %1831 = vmatpush.bf16.msra.mxu0 %v1556
      %1832 = vmatpush.bf16.msra.mxu0 %v1555
      %1833 = vmatmul.bf16.gmra.mxu0 %v1153
      %v1834 = vpop.f32.mrf.mxu0
      %v1835 = vadd.f32 %v1806, %v1834
      %v1836 = vpop.f32.mrf.mxu0
      %v1837 = vadd.f32 %v1808, %v1836
      %1838 = vmatmul.bf16.gmra.mxu0 %v1162
      %v1839 = vpop.f32.mrf.mxu0
      %v1840 = vadd.f32 %v1811, %v1839
      %v1841 = vpop.f32.mrf.mxu0
      %v1842 = vadd.f32 %v1813, %v1841
      %1843 = vmatmul.bf16.gmra.mxu0 %v1171
      %v1844 = vpop.f32.mrf.mxu0
      %v1845 = vadd.f32 %v1816, %v1844
      %v1846 = vpop.f32.mrf.mxu0
      %v1847 = vadd.f32 %v1818, %v1846
      %1848 = vmatmul.bf16.gmra.mxu0 %v1180
      %v1849 = vpop.f32.mrf.mxu0
      %v1850 = vadd.f32 %v1821, %v1849
      %v1851 = vpop.f32.mrf.mxu0
      %v1852 = vadd.f32 %v1823, %v1851
      %1853 = vdwg.mxu0
      %1854 = vmatpush.bf16.msra.mxu0 %v1570
      %1855 = vmatpush.bf16.msra.mxu0 %v1569
      %1856 = vmatpush.bf16.msra.mxu0 %v1568
      %1857 = vmatpush.bf16.msra.mxu0 %v1567
      %1858 = vmatpush.bf16.msra.mxu0 %v1566
      %1859 = vmatpush.bf16.msra.mxu0 %v1565
      %1860 = vmatpush.bf16.msra.mxu0 %v1564
      %1861 = vmatpush.bf16.msra.mxu0 %v1563
      %1862 = vmatmul.bf16.gmra.mxu0 %v1154
      %v1863 = vpop.f32.mrf.mxu0
      %v1864 = vadd.f32 %v1835, %v1863
      %v1865 = vpop.f32.mrf.mxu0
      %v1866 = vadd.f32 %v1837, %v1865
      %1867 = vmatmul.bf16.gmra.mxu0 %v1163
      %v1868 = vpop.f32.mrf.mxu0
      %v1869 = vadd.f32 %v1840, %v1868
      %v1870 = vpop.f32.mrf.mxu0
      %v1871 = vadd.f32 %v1842, %v1870
      %1872 = vmatmul.bf16.gmra.mxu0 %v1172
      %v1873 = vpop.f32.mrf.mxu0
      %v1874 = vadd.f32 %v1845, %v1873
      %v1875 = vpop.f32.mrf.mxu0
      %v1876 = vadd.f32 %v1847, %v1875
      %1877 = vmatmul.bf16.gmra.mxu0 %v1181
      %v1878 = vpop.f32.mrf.mxu0
      %v1879 = vadd.f32 %v1850, %v1878
      %v1880 = vpop.f32.mrf.mxu0
      %v1881 = vadd.f32 %v1852, %v1880
      %1882 = vdwg.mxu0
      %1883 = vmatpush.bf16.msra.mxu0 %v1578
      %1884 = vmatpush.bf16.msra.mxu0 %v1577
      %1885 = vmatpush.bf16.msra.mxu0 %v1576
      %1886 = vmatpush.bf16.msra.mxu0 %v1575
      %1887 = vmatpush.bf16.msra.mxu0 %v1574
      %1888 = vmatpush.bf16.msra.mxu0 %v1573
      %1889 = vmatpush.bf16.msra.mxu0 %v1572
      %1890 = vmatpush.bf16.msra.mxu0 %v1571
      %1891 = vmatmul.bf16.gmra.mxu0 %v1155
      %v1892 = vpop.f32.mrf.mxu0
      %v1893 = vadd.f32 %v1864, %v1892
      %v1894 = vpop.f32.mrf.mxu0
      %v1895 = vadd.f32 %v1866, %v1894
      %1896 = vmatmul.bf16.gmra.mxu0 %v1164
      %v1897 = vpop.f32.mrf.mxu0
      %v1898 = vadd.f32 %v1869, %v1897
      %v1899 = vpop.f32.mrf.mxu0
      %v1900 = vadd.f32 %v1871, %v1899
      %1901 = vmatmul.bf16.gmra.mxu0 %v1173
      %v1902 = vpop.f32.mrf.mxu0
      %v1903 = vadd.f32 %v1874, %v1902
      %v1904 = vpop.f32.mrf.mxu0
      %v1905 = vadd.f32 %v1876, %v1904
      %1906 = vmatmul.bf16.gmra.mxu0 %v1182
      %v1907 = vpop.f32.mrf.mxu0
      %v1908 = vadd.f32 %v1879, %v1907
      %v1909 = vpop.f32.mrf.mxu0
      %v1910 = vadd.f32 %v1881, %v1909
      %1911 = vdwg.mxu0
      %v1912 = vpack.c.bf16 %v1893, %v1893
      %v1913 = vpack.c.bf16 %v1895, %v1895
      %v1914 = vpack.c.bf16 %v1898, %v1898
      %v1915 = vpack.c.bf16 %v1900, %v1900
      %v1916 = vpack.c.bf16 %v1903, %v1903
      %v1917 = vpack.c.bf16 %v1905, %v1905
      %v1918 = vpack.c.bf16 %v1908, %v1908
      %v1919 = vpack.c.bf16 %v1910, %v1910
      %1920 = vst [vmem:[%s273] sm:$0xf] %v1912
      %1921 = vst [vmem:[%s273 + $0x4] sm:$0xf] %v1913
      %1922 = vst [vmem:[%s273 + $0x8] sm:$0xf] %v1914
      %1923 = vst [vmem:[%s273 + $0xc] sm:$0xf] %v1915
      %1924 = vst [vmem:[%s273 + $0x10] sm:$0xf] %v1916
      %1925 = vst [vmem:[%s273 + $0x14] sm:$0xf] %v1917
      %1926 = vst [vmem:[%s273 + $0x18] sm:$0xf] %v1918
      %1927 = vst [vmem:[%s273 + $0x1c] sm:$0xf] %v1919
      %v1928 = vunpack.c.l.bf16 %v1912
      %v1929 = vunpack.c.l.bf16 %v1913
      %v1930 = vunpack.c.l.bf16 %v1914
      %v1931 = vunpack.c.l.bf16 %v1915
      %v1932 = vunpack.c.l.bf16 %v1916
      %v1933 = vunpack.c.l.bf16 %v1917
      %v1934 = vunpack.c.l.bf16 %v1918
      %v1935 = vunpack.c.l.bf16 %v1919
      %v1936 = vadd.f32 %v1928, %v1929
      %v1937 = vadd.f32 %v1936, %v1930
      %v1938 = vadd.f32 %v1937, %v1931
      %v1939 = vadd.f32 %v1938, %v1932
      %v1940 = vadd.f32 %v1939, %v1933
      %v1941 = vadd.f32 %v1940, %v1934
      %v1942 = vadd.f32 %v1941, %v1935
      %v1943 = vrot.slane %v1942, 4
      %v1944 = vadd.f32 %v1942, %v1943
      %v1945 = vrot.slane %v1944, 2
      %v1946 = vadd.f32 %v1944, %v1945
      %v1947 = vrot.slane %v1946, 1
      %v1948 = vadd.f32 %v1946, %v1947
      %v1949 = vmul.f32 %v1928, %v1928
      %v1950 = vmul.f32 %v1929, %v1929
      %v1951 = vmul.f32 %v1930, %v1930
      %v1952 = vmul.f32 %v1931, %v1931
      %v1953 = vmul.f32 %v1932, %v1932
      %v1954 = vmul.f32 %v1933, %v1933
      %v1955 = vmul.f32 %v1934, %v1934
      %v1956 = vmul.f32 %v1935, %v1935
      %v1957 = vadd.f32 %v1949, %v1950
      %v1958 = vadd.f32 %v1957, %v1951
      %v1959 = vadd.f32 %v1958, %v1952
      %v1960 = vadd.f32 %v1959, %v1953
      %v1961 = vadd.f32 %v1960, %v1954
      %v1962 = vadd.f32 %v1961, %v1955
      %v1963 = vadd.f32 %v1962, %v1956
      %v1964 = vrot.slane %v1963, 4
      %v1965 = vadd.f32 %v1963, %v1964
      %v1966 = vrot.slane %v1965, 2
      %v1967 = vadd.f32 %v1965, %v1966
      %v1968 = vrot.slane %v1967, 1
      %v1969 = vadd.f32 %v1967, %v1968
      %vm1970 = vcmask 1040384
      %v1971 = vsel %vm1970, %v1948, %v1969
      %1972 = vst [vmem:[%s280] sm:$0x3] %v1971
      %p1973 = scmp.lt.s32.totalorder %s21, 1
      %s1974 = scalar_select %p1973, %s21, 1
      %p1975 = scmp.lt.s32.totalorder %s22, 0
      %s1976 = scalar_select %p1975, %s22, 0
      %s1977 = smul.addr %s1974, 8
      %s1978 = sadd.s32 %s1976, %s1977
      %s1979 = smul.addr %s1978, 4
      %s1980 = scalar_lea.vmem %s4, %s1979
      %p1981 = scmp.lt.s32.totalorder %s21, 1
      %s1982 = scalar_select %p1981, %s21, 1
      %p1983 = scmp.lt.s32.totalorder %s22, 0
      %s1984 = scalar_select %p1983, %s22, 0
      %s1985 = sadd.s32 %s1984, %s1982
      %s1986 = smul.addr %s1985, 2
      %s1987 = scalar_lea.vmem %s5, %s1986
      // Predicated region
      $region41: #{basic_block_forward.4} parent=35 // pred_check
        %p1988 = pneg %p143
      $region42: #{basic_block_forward.4} parent=35 // pred_check_branch
        %1990 = sbr.rel (%p1988) target = $region44
      $region43: #{basic_block_forward.4} parent=35 // pred_region
        _
      $region44: #{basic_block_forward.4} parent=35 // pred_fallthru
        _
      // Predicated region
      $region45: #{basic_block_forward.4} parent=35 // pred_check
        %p1991 = pneg %p171
      $region46: #{basic_block_forward.4} parent=35 // pred_check_branch
        %1993 = sbr.rel (%p1991) target = $region48
      $region47: #{basic_block_forward.4} parent=35 // pred_region
        _
      $region48: #{basic_block_forward.4} parent=35 // pred_fallthru
        _
    $region36: #{basic_block_forward.4} parent=5 // pred_fallthru
      _
    %p1994 = scmp.le.s32.totalorder 2, %s12
    // Predicated region
    $region49: #{basic_block_forward.4} parent=5 // pred_check
      %p1995 = pneg %p1994
    $region50: #{basic_block_forward.4} parent=5 // pred_check_branch
      %1997 = sbr.rel (%p1995) target = $region52
    $region51: #{basic_block_forward.4} parent=5 // pred_region
      %s1998 = ssub.s32 %s12, 2
      // Predicated region
      $region53: #{basic_block_forward.4} parent=51 // pred_check
        %p1999 = pneg %p149
      $region54: #{basic_block_forward.4} parent=51 // pred_check_branch
        %2001 = sbr.rel (%p1999) target = $region56
      $region55: #{basic_block_forward.4} parent=51 // pred_region
        %p2002 = scmp.lt.s32.totalorder %s23, 1
        %s2003 = scalar_select %p2002, %s23, 1
        %p2004 = scmp.lt.s32.totalorder %s24, 0
        %s2005 = scalar_select %p2004, %s24, 0
        %s2006 = smul.addr %s2003, 8
        %s2007 = sadd.s32 %s2005, %s2006
        %s2008 = smul.addr %s2007, 4
        %s2009 = scalar_lea.vmem %s4, %s2008
      $region56: #{basic_block_forward.4} parent=51 // pred_fallthru
        _
      // Predicated region
      $region57: #{basic_block_forward.4} parent=51 // pred_check
        %p2010 = pneg %p177
      $region58: #{basic_block_forward.4} parent=51 // pred_check_branch
        %2012 = sbr.rel (%p2010) target = $region60
      $region59: #{basic_block_forward.4} parent=51 // pred_region
        %p2013 = scmp.lt.s32.totalorder %s23, 1
        %s2014 = scalar_select %p2013, %s23, 1
        %p2015 = scmp.lt.s32.totalorder %s24, 0
        %s2016 = scalar_select %p2015, %s24, 0
        %s2017 = sadd.s32 %s2016, %s2014
        %s2018 = smul.addr %s2017, 2
        %s2019 = scalar_lea.vmem %s5, %s2018
      $region60: #{basic_block_forward.4} parent=51 // pred_fallthru
        _
    $region52: #{basic_block_forward.4} parent=5 // pred_fallthru
      _
  $region6: #{basic_block_forward.4} parent=0 // loop_footer
    %s16 = sadd.s32 1, %s12
  $region7: #{basic_block_forward.4} parent=0 // loop_footer_branch
    %11 = sbr.rel target = $region3
  $region8: #{basic_block_forward.4} parent=0 // loop_exit
    _

</llo_original>
